<compile_context>
chip_gen: v7x
topology: tpu7x:2x2x1
jax: 0.10.0
libtpu: 0.0.40
codegen_flags: <defaults>
</compile_context>

<pallas_src>
import functools

import numpy as np

import jax
import jax.numpy as jnp
from jax.experimental import pallas as pl
from jax.experimental.pallas import tpu as pltpu


LANES = 128
SUBLANES = 8
VMEM_LIMIT = 32 * 1024 * 1024   # explicit scoped-VMEM budget (raises v5e's 16 MiB default)
MAX_ROWS = 2048                 # row-tile cap; double-buffered footprint << 32 MiB


# ------------------------------ small helpers -------------------------------

def _round_up(x, n):
    return ((x + n - 1) // n) * n


def _pad_rows(x, target):
    if x.shape[0] == target:
        return x
    return jnp.pad(x, ((0, target - x.shape[0]), (0, 0)))


def _row_tiling(m, max_tm=MAX_ROWS):
    """(m_padded, tm): prefer a divisor of m (no padding copy); else pad."""
    divs = [t for t in range(SUBLANES, min(max_tm, m) + 1, SUBLANES) if m % t == 0]
    if divs:
        return m, max(divs)
    m8 = _round_up(m, SUBLANES)
    tm = min(max_tm, m8)
    return _round_up(m8, tm), tm


def _pick_image_group(n, hw, max_rows=MAX_ROWS):
    """Images per block for the shifted-matmul conv: g | n, g*hw rows, 8-aligned."""
    cand = [g for g in range(1, n + 1)
            if n % g == 0 and (g * hw) % SUBLANES == 0 and g * hw <= max_rows]
    return max(cand) if cand else n


# ----------------------------- Pallas kernels -------------------------------

def _matmul_stats_kernel(a_ref, b_ref, o_ref, sum_ref, sq_ref):
    """o = a @ b (bf16 in, f32 acc, bf16 out) fused with per-channel sum/sum^2.

    Used only for the strided conv1 (im2col path).  K fits in one tile, so the
    MXU result is stored directly; the (1, C) stats accumulate across the M
    grid axis (marked "arbitrary")."""
    @pl.when(pl.program_id(0) == 0)
    def _():
        sum_ref[...] = jnp.zeros_like(sum_ref)
        sq_ref[...] = jnp.zeros_like(sq_ref)

    acc = jnp.dot(a_ref[...], b_ref[...], preferred_element_type=jnp.float32)
    o_ref[...] = acc.astype(o_ref.dtype)
    sum_ref[...] += jnp.sum(acc, axis=0, keepdims=True)
    sq_ref[...] += jnp.sum(acc * acc, axis=0, keepdims=True)


def _conv3x3_shift_stats_kernel(x_ref, sc_ref, sh_ref, w_ref, hi_ref, wi_ref,
                                o_ref, sum_ref, sq_ref,
                                scr_ref, acc_ref,
                                *, ho, wo, halo, fuse_affine_relu):
    """Fused [affine+ReLU prologue] -> 3x3/stride-1/pad-1 conv -> batch stats.

    x_ref   : (tm, cin) bf16; rows are whole images in flat (h*wo + w) order.
    sc_ref/sh_ref : (1, cin) f32 bn1 scale/shift (ignored if not fused).
    w_ref   : (9, cin, cout) bf16 per-tap weights, kh-major / kw-minor.
    hi_ref/wi_ref : (tm, 1) int32 per-row spatial coordinates (precomputed).
    scr_ref : (tm + 2*halo, cin) f32 VMEM buffer with permanently-zero halos.
    acc_ref : (tm, cout) f32 accumulator scratch.
    """
    tm, cin = x_ref.shape

    @pl.when(pl.program_id(0) == 0)
    def _():
        sum_ref[...] = jnp.zeros_like(sum_ref)
        sq_ref[...] = jnp.zeros_like(sq_ref)
        # Halo rows stay zero for the whole grid (middle band overwritten below).
        scr_ref[0:halo, :] = jnp.zeros((halo, cin), scr_ref.dtype)
        scr_ref[halo + tm:halo + tm + halo, :] = jnp.zeros((halo, cin), scr_ref.dtype)

    if fuse_affine_relu:
        # bn1 + ReLU fused into the conv2 prologue (f32 math, VMEM only).
        a = jnp.maximum(
            x_ref[...].astype(jnp.float32) * sc_ref[...] + sh_ref[...], 0.0)
    else:
        a = x_ref[...].astype(jnp.float32)
    scr_ref[halo:halo + tm, :] = a

    h = hi_ref[...]            # (tm, 1) int32
    w = wi_ref[...]            # (tm, 1) int32

    acc_ref[...] = jnp.zeros_like(acc_ref)
    for kh in range(3):
        dy = kh - 1
        for kw in range(3):
            dx = kw - 1
            off = dy * wo + dx
            shifted = scr_ref[halo + off:halo + off + tm, :]     # (tm, cin) f32
            conds = []
            if dy < 0:
                conds.append(h >= -dy)
            if dy > 0:
                conds.append(h < ho - dy)
            if dx < 0:
                conds.append(w >= -dx)
            if dx > 0:
                conds.append(w < wo - dx)
            if conds:
                valid = functools.reduce(lambda u, v: u & v, conds)
                tap = jnp.where(valid, shifted, 0.0)
            else:
                tap = shifted
            acc_ref[...] += jnp.dot(tap.astype(jnp.bfloat16), w_ref[kh * 3 + kw],
                                    preferred_element_type=jnp.float32)

    acc = acc_ref[...]
    o_ref[...] = acc.astype(o_ref.dtype)
    sum_ref[...] += jnp.sum(acc, axis=0, keepdims=True)
    sq_ref[...] += jnp.sum(acc * acc, axis=0, keepdims=True)


def _bn_add_relu_kernel(x_ref, sc_ref, sh_ref, res_ref, o_ref):
    """out = relu(x * scale + shift + residual); f32 math, bf16 inputs."""
    x = x_ref[...].astype(jnp.float32)
    res = res_ref[...].astype(jnp.float32)
    o_ref[...] = jnp.maximum(x * sc_ref[...] + sh_ref[...] + res, 0.0)


# ------------------------------ Pallas wrappers ------------------------------

def pallas_matmul_stats(a, b, tm):
    """(M, K) @ (K, C) bf16 with fused per-channel sum / sum^2 (f32)."""
    m, k = a.shape
    c = b.shape[1]
    return pl.pallas_call(
        _matmul_stats_kernel,
        out_shape=(jax.ShapeDtypeStruct((m, c), jnp.bfloat16),
                   jax.ShapeDtypeStruct((1, c), jnp.float32),
                   jax.ShapeDtypeStruct((1, c), jnp.float32)),
        grid_spec=pltpu.PrefetchScalarGridSpec(
            num_scalar_prefetch=0,
            grid=(m // tm,),
            in_specs=[pl.BlockSpec((tm, k), lambda i: (i, 0)),
                      pl.BlockSpec((k, c), lambda i: (0, 0))],
            out_specs=[pl.BlockSpec((tm, c), lambda i: (i, 0)),
                       pl.BlockSpec((1, c), lambda i: (0, 0)),
                       pl.BlockSpec((1, c), lambda i: (0, 0))]),
        compiler_params=pltpu.CompilerParams(
            dimension_semantics=("arbitrary",),      # stats accumulate across M
            vmem_limit_bytes=VMEM_LIMIT),
    )(a, b)


def pallas_conv3x3_stride1_stats(x2d, w_taps, n, ho, wo, scale=None, shift=None):
    """3x3 / stride-1 / pad-1 conv as in-kernel shifted matmuls + fused stats.

    x2d    : (>= n*ho*wo, cin) bf16, image-major / row-major flattened NHWC.
    w_taps : (9, cin, cout) bf16.
    scale/shift : optional (1, cin) f32 -> fused relu(x*scale+shift) prologue.
    Returns (conv bf16 (n*ho*wo, cout), sum f32 (1, cout), sumsq f32 (1, cout)).
    """
    hw = ho * wo
    m = n * hw
    cin = x2d.shape[1]
    cout = w_taps.shape[-1]
    g = _pick_image_group(n, hw)
    tm = g * hw
    if x2d.shape[0] != m and tm % SUBLANES != 0:
        x2d = x2d[:m]            # block must then equal the full row extent
    halo = _round_up(wo + 1, SUBLANES)

    fuse = scale is not None
    if not fuse:
        scale = jnp.zeros((1, cin), jnp.float32)
        shift = jnp.zeros((1, cin), jnp.float32)

    # Per-row (h, w) coordinates — identical for every block, baked as constants.
    rr = np.arange(tm, dtype=np.int32) % hw
    hi = jnp.asarray((rr // wo).astype(np.int32)).reshape(tm, 1)
    wi = jnp.asarray((rr % wo).astype(np.int32)).reshape(tm, 1)

    kernel = functools.partial(_conv3x3_shift_stats_kernel,
                               ho=ho, wo=wo, halo=halo, fuse_affine_relu=fuse)
    return pl.pallas_call(
        kernel,
        out_shape=(jax.ShapeDtypeStruct((m, cout), jnp.bfloat16),
                   jax.ShapeDtypeStruct((1, cout), jnp.float32),
                   jax.ShapeDtypeStruct((1, cout), jnp.float32)),
        grid_spec=pltpu.PrefetchScalarGridSpec(
            num_scalar_prefetch=0,
            grid=(m // tm,),
            in_specs=[pl.BlockSpec((tm, cin), lambda i: (i, 0)),
                      pl.BlockSpec((1, cin), lambda i: (0, 0)),
                      pl.BlockSpec((1, cin), lambda i: (0, 0)),
                      pl.BlockSpec((9, cin, cout), lambda i: (0, 0, 0)),
                      pl.BlockSpec((tm, 1), lambda i: (0, 0)),
                      pl.BlockSpec((tm, 1), lambda i: (0, 0))],
            out_specs=[pl.BlockSpec((tm, cout), lambda i: (i, 0)),
                       pl.BlockSpec((1, cout), lambda i: (0, 0)),
                       pl.BlockSpec((1, cout), lambda i: (0, 0))],
            scratch_shapes=[pltpu.VMEM((tm + 2 * halo, cin), jnp.float32),
                            pltpu.VMEM((tm, cout), jnp.float32)]),
        compiler_params=pltpu.CompilerParams(
            # TODO(synk): on v7x, split this axis across the 2 TensorCores with
            # per-core partial stats reduced in glue (megacore for the conv pass).
            dimension_semantics=("arbitrary",),
            vmem_limit_bytes=VMEM_LIMIT),
    )(x2d, scale, shift, w_taps, hi, wi)


def pallas_bn_add_relu(x, scale, shift, residual):
    """relu(x*scale + shift + residual) at true channel width; presented
    lane-dense as (M*C/128, 128) when C divides 128 (scale/shift lane-tiled)."""
    m, c = x.shape
    packed = (c < LANES) and (LANES % c == 0) and ((m * c) % LANES == 0)
    if packed:
        reps = LANES // c
        rows = (m * c) // LANES
        xp = x.reshape(rows, LANES)
        rp = residual.reshape(rows, LANES)
        sp = jnp.tile(scale, (1, reps))
        hp = jnp.tile(shift, (1, reps))
    else:
        xp, rp, sp, hp = x, residual, scale, shift
    mp, cp = xp.shape
    m_pad, tm = _row_tiling(mp)
    xp = _pad_rows(xp, m_pad)
    rp = _pad_rows(rp, m_pad)
    out = pl.pallas_call(
        _bn_add_relu_kernel,
        out_shape=jax.ShapeDtypeStruct((m_pad, cp), jnp.float32),
        grid_spec=pltpu.PrefetchScalarGridSpec(
            num_scalar_prefetch=0,
            grid=(m_pad // tm,),
            in_specs=[pl.BlockSpec((tm, cp), lambda i: (i, 0)),
                      pl.BlockSpec((1, cp), lambda i: (0, 0)),
                      pl.BlockSpec((1, cp), lambda i: (0, 0)),
                      pl.BlockSpec((tm, cp), lambda i: (i, 0))],
            out_specs=pl.BlockSpec((tm, cp), lambda i: (i, 0))),
        compiler_params=pltpu.CompilerParams(
            dimension_semantics=("parallel",),
            vmem_limit_bytes=VMEM_LIMIT),
    )(xp, sp, hp, rp)
    out = out[:mp]
    if packed:
        out = out.reshape(m, c)
    return out


# ------------------------------- glue (JAX) ---------------------------------

def extract_patches(x_nhwc, stride):
    """im2col for a 3x3 / pad=1 conv (only used for the *strided* conv1).

    TODO(synk): the strided 3x3 window is not expressible as a flat row shift
    or a rectangular BlockSpec, so the stride>1 conv keeps this XLA im2col."""
    n, h, w, cin = x_nhwc.shape
    ho = (h + 2 - 3) // stride + 1
    wo = (w + 2 - 3) // stride + 1
    xp = jnp.pad(x_nhwc, ((0, 0), (1, 1), (1, 1), (0, 0)))
    cols = []
    for kh in range(3):
        for kw in range(3):
            cols.append(xp[:,
                           kh:kh + stride * (ho - 1) + 1:stride,
                           kw:kw + stride * (wo - 1) + 1:stride, :])
    patches = jnp.stack(cols, axis=3)                      # (N, Ho, Wo, 9, Cin)
    return patches.reshape(n * ho * wo, 9 * cin), (n, ho, wo)


def _weight_taps(w):
    """PyTorch (out, in, 3, 3) -> (9, in, out) bf16, kh-major / kw-minor."""
    cout, cin = w.shape[0], w.shape[1]
    return jnp.transpose(w, (2, 3, 1, 0)).reshape(9, cin, cout).astype(jnp.bfloat16)


def _bn_scale_shift(s, ss, m_true, gamma, beta, eps=1e-5):
    """Fold training-mode batch stats + affine into per-channel scale/shift.

    TODO(synk): single-pass E[x^2]-E[x]^2 in f32; switch to a Welford variant
    if cancellation ever matters at very large M."""
    mean = s / m_true
    var = jnp.maximum(ss / m_true - mean * mean, 0.0)
    scale = gamma[None, :] * jax.lax.rsqrt(var + eps)
    shift = beta[None, :] - mean * scale
    return scale, shift


def basic_block_forward(x_nchw, params, in_planes, planes, stride=1, option='A'):
    x = jnp.transpose(x_nchw, (0, 2, 3, 1)).astype(jnp.float32)   # NCHW -> NHWC
    x_bf16 = x.astype(jnp.bfloat16)
    n, h, w_in, _ = x.shape

    # ---- conv1 (+ fused batch stats) ----
    w1_taps = _weight_taps(params['w1'])
    if stride == 1:
        ho, wo = h, w_in
        m1 = n * ho * wo
        c1, s1, ss1 = pallas_conv3x3_stride1_stats(
            x_bf16.reshape(m1, in_planes), w1_taps, n, ho, wo)
    else:
        p1, (_, ho, wo) = extract_patches(x_bf16, stride)
        m1 = p1.shape[0]
        m1_pad, tm1 = _row_tiling(m1)
        p1 = _pad_rows(p1, m1_pad)
        c1, s1, ss1 = pallas_matmul_stats(
            p1, w1_taps.reshape(9 * in_planes, planes), tm1)
    sc1, sh1 = _bn_scale_shift(s1, ss1, m1, params['gamma1'], params['beta1'])

    # ---- conv2 with bn1+ReLU fused into its prologue (+ fused batch stats) ----
    w2_taps = _weight_taps(params['w2'])
    c2, s2, ss2 = pallas_conv3x3_stride1_stats(
        c1, w2_taps, n, ho, wo, scale=sc1, shift=sh1)
    sc2, sh2 = _bn_scale_shift(s2, ss2, m1, params['gamma2'], params['beta2'])

    # ---- shortcut ----
    if stride != 1 or in_planes != planes:
        if option != 'A':
            # TODO(synk): option 'B' (1x1 conv + BN shortcut) not implemented;
            # the module default (and the CIFAR ResNet paper) uses option 'A'.
            raise NotImplementedError("only option='A' shortcut is implemented")
        assert in_planes + 2 * (planes // 4) == planes, (
            "option-'A' zero-pad shortcut requires in_planes + 2*(planes//4) == planes")
        res = x_bf16[:, ::2, ::2, :]
        pad_ch = planes // 4
        res = jnp.pad(res, ((0, 0), (0, 0), (0, 0), (pad_ch, pad_ch)))
    else:
        res = x_bf16
    assert res.shape[1] == ho and res.shape[2] == wo and res.shape[3] == planes
    residual = res.reshape(m1, planes)

    # ---- relu(bn2(conv2(out)) + shortcut(x)) : single fused affine+add+relu ----
    out = pallas_bn_add_relu(c2, sc2, sh2, residual)
    out = out.reshape(n, ho, wo, planes)
    return jnp.transpose(out, (0, 3, 1, 2))                # NHWC -> NCHW


# ----------------------------- pure-JAX reference ----------------------------

def ref_basic_block(x_nchw, params, in_planes, planes, stride=1,
                    conv_dtype=jnp.float32):
    """Reference. conv_dtype=bf16 mirrors the kernel's bf16 MXU inputs
    (f32 accumulation); conv_dtype=f32 is the exact module semantics."""
    x = jnp.transpose(x_nchw, (0, 2, 3, 1)).astype(jnp.float32)

    def conv(a, w, s):
        return jax.lax.conv_general_dilated(
            a.astype(conv_dtype),
            jnp.transpose(w, (2, 3, 1, 0)).astype(conv_dtype),
            (s, s), ((1, 1), (1, 1)),
            dimension_numbers=('NHWC', 'HWIO', 'NHWC'),
            preferred_element_type=jnp.float32)

    def bn(a, g, b, eps=1e-5):
        mu = jnp.mean(a, axis=(0, 1, 2), keepdims=True)
        var = jnp.mean((a - mu) ** 2, axis=(0, 1, 2), keepdims=True)
        return (a - mu) * jax.lax.rsqrt(var + eps) * g + b

    out = jax.nn.relu(bn(conv(x, params['w1'], stride),
                         params['gamma1'], params['beta1']))
    out = bn(conv(out, params['w2'], 1), params['gamma2'], params['beta2'])
    if stride != 1 or in_planes != planes:
        sc = x[:, ::2, ::2, :]
        pad = planes // 4
        sc = jnp.pad(sc, ((0, 0), (0, 0), (0, 0), (pad, pad)))
    else:
        sc = x
    out = jax.nn.relu(out + sc)
    return jnp.transpose(out, (0, 3, 1, 2))


# ---------------------------------- main -------------------------------------

def _make_params(key, in_planes, planes):
    k1, k2 = jax.random.split(key)
    return {
        'w1': 0.1 * jax.random.normal(k1, (planes, in_planes, 3, 3), jnp.float32),
        'w2': 0.1 * jax.random.normal(k2, (planes, planes, 3, 3), jnp.float32),
        'gamma1': jnp.ones((planes,), jnp.float32),   # nn.BatchNorm2d defaults
        'beta1': jnp.zeros((planes,), jnp.float32),
        'gamma2': jnp.ones((planes,), jnp.float32),
        'beta2': jnp.zeros((planes,), jnp.float32),
    }


def _check(name, x, params, in_planes, planes, stride):
    fwd = jax.jit(functools.partial(basic_block_forward,
                                    in_planes=in_planes, planes=planes,
                                    stride=stride, option='A'))
    out = fwd(x, params)
    jax.block_until_ready(out)
    n, _, h, w = x.shape
    ho = (h + 2 - 3) // stride + 1
    wo = (w + 2 - 3) // stride + 1
    assert out.shape == (n, planes, ho, wo), (name, out.shape)

    # bf16-MXU / bf16-intermediate reference: explicitly accepted tolerance.
    ref16 = ref_basic_block(x, params, in_planes, planes, stride,
                            conv_dtype=jnp.bfloat16)
    assert jnp.allclose(out, ref16, atol=4e-2, rtol=4e-2), \
        (name, float(jnp.max(jnp.abs(out - ref16))))

    # Exact f32 module semantics: bf16-quantization-level tolerance, accepted.
    ref32 = ref_basic_block(x, params, in_planes, planes, stride,
                            conv_dtype=jnp.float32)
    assert jnp.allclose(out, ref32, atol=1e-1, rtol=1e-1), \
        (name, float(jnp.max(jnp.abs(out - ref32))))


if __name__ == "__main__":
    key = jax.random.PRNGKey(0)
    k0, k1, k2, k3 = jax.random.split(key, 4)

    # Config 1 — the spec's downsampling block: BasicBlock(4, 8, stride=2, 'A').
    x1 = jax.random.normal(k0, (2, 4, 16, 16), dtype=jnp.float32)
    p1 = _make_params(k1, 4, 8)
    _check("stride2", x1, p1, in_planes=4, planes=8, stride=2)

    # Config 2 — identity block (exercises the im2col-free conv1 path):
    # BasicBlock(8, 8, stride=1, 'A').
    x2 = jax.random.normal(k2, (2, 8, 8, 8), dtype=jnp.float32)
    p2 = _make_params(k3, 8, 8)
    _check("stride1", x2, p2, in_planes=8, planes=8, stride=1)

    print("KERNEL_OK")
</pallas_src>

<mosaic_0001>
module attributes {stable_mosaic.version = 11 : i64} {
  func.func @_matmul_stats_kernel(%arg0: i32, %arg1: memref<128x36xbf16, #tpu.memory_space<vmem>>, %arg2: memref<36x8xbf16, #tpu.memory_space<vmem>>, %arg3: memref<128x8xbf16, #tpu.memory_space<vmem>>, %arg4: memref<1x8xf32, #tpu.memory_space<vmem>>, %arg5: memref<1x8xf32, #tpu.memory_space<vmem>>) attributes {dimension_semantics = [#tpu.dimension_semantics<arbitrary>], iteration_bounds = array<i64: 1>, scalar_prefetch = 0 : i64, scratch_operands = 0 : i64, tpu.core_type = #tpu.core_type<tc>, window_params = [{transform_indices = @transform_0, window_bounds = array<i64: 128, 36>}, {pipeline_mode = #tpu.pipeline_mode<synchronous>, transform_indices = @transform_1, window_bounds = array<i64: 36, 8>}, {transform_indices = @transform_2, window_bounds = array<i64: 128, 8>}, {pipeline_mode = #tpu.pipeline_mode<synchronous>, transform_indices = @transform_3, window_bounds = array<i64: 1, 8>}, {pipeline_mode = #tpu.pipeline_mode<synchronous>, transform_indices = @transform_4, window_bounds = array<i64: 1, 8>}]} {
    %c0_i32 = arith.constant 0 : i32
    %0 = arith.cmpi eq, %arg0, %c0_i32 : i32
    %1 = arith.extui %0 : i1 to i32
    %c0_i32_0 = arith.constant 0 : i32
    %2 = arith.cmpi ne, %1, %c0_i32_0 : i32
    scf.if %2 {
      %cst_16 = arith.constant 0.000000e+00 : f32
      %19 = vector.broadcast %cst_16 : f32 to vector<1x8xf32>
      %c0_17 = arith.constant 0 : index
      %c0_18 = arith.constant 0 : index
      %20 = vector.load %arg4[%c0_17, %c0_18] : memref<1x8xf32, #tpu.memory_space<vmem>>, vector<1x8xf32>
      tpu.vector_store %arg4[%c0_17, %c0_18], %19 {strides = array<i32>} : memref<1x8xf32, #tpu.memory_space<vmem>>, vector<1x8xf32>,
      %cst_19 = arith.constant 0.000000e+00 : f32
      %21 = vector.broadcast %cst_19 : f32 to vector<1x8xf32>
      %c0_20 = arith.constant 0 : index
      %c0_21 = arith.constant 0 : index
      %22 = vector.load %arg5[%c0_20, %c0_21] : memref<1x8xf32, #tpu.memory_space<vmem>>, vector<1x8xf32>
      tpu.vector_store %arg5[%c0_20, %c0_21], %21 {strides = array<i32>} : memref<1x8xf32, #tpu.memory_space<vmem>>, vector<1x8xf32>,
    } else {
    }
    %c0 = arith.constant 0 : index
    %c0_1 = arith.constant 0 : index
    %3 = vector.load %arg1[%c0, %c0_1] : memref<128x36xbf16, #tpu.memory_space<vmem>>, vector<128x36xbf16>
    %c0_2 = arith.constant 0 : index
    %c0_3 = arith.constant 0 : index
    %4 = vector.load %arg2[%c0_2, %c0_3] : memref<36x8xbf16, #tpu.memory_space<vmem>>, vector<36x8xbf16>
    %cst = arith.constant dense<0.000000e+00> : vector<128x8xf32>
    %5 = tpu.matmul %3, %4, %cst {dimension_numbers = #tpu.dot_dimension_numbers<[1], [0], [0], [1], [0, 0, 1, 1], [], []>} : vector<128x36xbf16>, vector<36x8xbf16>, vector<128x8xf32> -> vector<128x8xf32>
    %6 = arith.truncf %5 : vector<128x8xf32> to vector<128x8xbf16>
    %c0_4 = arith.constant 0 : index
    %c0_5 = arith.constant 0 : index
    %7 = vector.load %arg3[%c0_4, %c0_5] : memref<128x8xbf16, #tpu.memory_space<vmem>>, vector<128x8xbf16>
    tpu.vector_store %arg3[%c0_4, %c0_5], %6 {strides = array<i32>} : memref<128x8xbf16, #tpu.memory_space<vmem>>, vector<128x8xbf16>,
    %c0_6 = arith.constant 0 : index
    %c0_7 = arith.constant 0 : index
    %8 = vector.load %arg4[%c0_6, %c0_7] : memref<1x8xf32, #tpu.memory_space<vmem>>, vector<1x8xf32>
    %cst_8 = arith.constant dense<0.000000e+00> : vector<8xf32>
    %9 = vector.multi_reduction <add>, %5, %cst_8 [0] : vector<128x8xf32> to vector<8xf32>
    %10 = vector.shape_cast %9 : vector<8xf32> to vector<1x8xf32>
    %11 = arith.addf %8, %10 : vector<1x8xf32>
    %c0_9 = arith.constant 0 : index
    %c0_10 = arith.constant 0 : index
    %12 = vector.load %arg4[%c0_9, %c0_10] : memref<1x8xf32, #tpu.memory_space<vmem>>, vector<1x8xf32>
    tpu.vector_store %arg4[%c0_9, %c0_10], %11 {strides = array<i32>} : memref<1x8xf32, #tpu.memory_space<vmem>>, vector<1x8xf32>,
    %c0_11 = arith.constant 0 : index
    %c0_12 = arith.constant 0 : index
    %13 = vector.load %arg5[%c0_11, %c0_12] : memref<1x8xf32, #tpu.memory_space<vmem>>, vector<1x8xf32>
    %14 = arith.mulf %5, %5 : vector<128x8xf32>
    %cst_13 = arith.constant dense<0.000000e+00> : vector<8xf32>
    %15 = vector.multi_reduction <add>, %14, %cst_13 [0] : vector<128x8xf32> to vector<8xf32>
    %16 = vector.shape_cast %15 : vector<8xf32> to vector<1x8xf32>
    %17 = arith.addf %13, %16 : vector<1x8xf32>
    %c0_14 = arith.constant 0 : index
    %c0_15 = arith.constant 0 : index
    %18 = vector.load %arg5[%c0_14, %c0_15] : memref<1x8xf32, #tpu.memory_space<vmem>>, vector<1x8xf32>
    tpu.vector_store %arg5[%c0_14, %c0_15], %17 {strides = array<i32>} : memref<1x8xf32, #tpu.memory_space<vmem>>, vector<1x8xf32>,
    return
  }
  func.func @transform_0(%arg0: i32) -> (i32, i32) {
    %c0_i32 = arith.constant 0 : i32
    %c0_i32_0 = arith.constant 0 : i32
    return %arg0, %c0_i32 : i32, i32
  }
  func.func @transform_1(%arg0: i32) -> (i32, i32) {
    %c0_i32 = arith.constant 0 : i32
    %c0_i32_0 = arith.constant 0 : i32
    %c0_i32_1 = arith.constant 0 : i32
    return %c0_i32, %c0_i32_0 : i32, i32
  }
  func.func @transform_2(%arg0: i32) -> (i32, i32) {
    %c0_i32 = arith.constant 0 : i32
    %c0_i32_0 = arith.constant 0 : i32
    return %arg0, %c0_i32 : i32, i32
  }
  func.func @transform_3(%arg0: i32) -> (i32, i32) {
    %c0_i32 = arith.constant 0 : i32
    %c0_i32_0 = arith.constant 0 : i32
    %c0_i32_1 = arith.constant 0 : i32
    return %c0_i32, %c0_i32_0 : i32, i32
  }
  func.func @transform_4(%arg0: i32) -> (i32, i32) {
    %c0_i32 = arith.constant 0 : i32
    %c0_i32_0 = arith.constant 0 : i32
    %c0_i32_1 = arith.constant 0 : i32
    return %c0_i32, %c0_i32_0 : i32, i32
  }
}

module attributes {stable_mosaic.version = 11 : i64} {
  func.func @_conv3x3_shift_stats_kernel(%arg0: i32, %arg1: memref<128x8xbf16, #tpu.memory_space<vmem>>, %arg2: memref<1x8xf32, #tpu.memory_space<vmem>>, %arg3: memref<1x8xf32, #tpu.memory_space<vmem>>, %arg4: memref<9x8x8xbf16, #tpu.memory_space<vmem>>, %arg5: memref<128x1xi32, #tpu.memory_space<vmem>>, %arg6: memref<128x1xi32, #tpu.memory_space<vmem>>, %arg7: memref<128x8xbf16, #tpu.memory_space<vmem>>, %arg8: memref<1x8xf32, #tpu.memory_space<vmem>>, %arg9: memref<1x8xf32, #tpu.memory_space<vmem>>, %arg10: memref<160x8xf32, #tpu.memory_space<vmem>>, %arg11: memref<128x8xf32, #tpu.memory_space<vmem>>) attributes {dimension_semantics = [#tpu.dimension_semantics<arbitrary>], iteration_bounds = array<i64: 1>, scalar_prefetch = 0 : i64, scratch_operands = 2 : i64, tpu.core_type = #tpu.core_type<tc>, window_params = [{transform_indices = @transform_0, window_bounds = array<i64: 128, 8>}, {pipeline_mode = #tpu.pipeline_mode<synchronous>, transform_indices = @transform_1, window_bounds = array<i64: 1, 8>}, {pipeline_mode = #tpu.pipeline_mode<synchronous>, transform_indices = @transform_2, window_bounds = array<i64: 1, 8>}, {pipeline_mode = #tpu.pipeline_mode<synchronous>, transform_indices = @transform_3, window_bounds = array<i64: 9, 8, 8>}, {pipeline_mode = #tpu.pipeline_mode<synchronous>, transform_indices = @transform_4, window_bounds = array<i64: 128, 1>}, {pipeline_mode = #tpu.pipeline_mode<synchronous>, transform_indices = @transform_5, window_bounds = array<i64: 128, 1>}, {transform_indices = @transform_6, window_bounds = array<i64: 128, 8>}, {pipeline_mode = #tpu.pipeline_mode<synchronous>, transform_indices = @transform_7, window_bounds = array<i64: 1, 8>}, {pipeline_mode = #tpu.pipeline_mode<synchronous>, transform_indices = @transform_8, window_bounds = array<i64: 1, 8>}]} {
    %c0_i32 = arith.constant 0 : i32
    %0 = arith.cmpi eq, %arg0, %c0_i32 : i32
    %1 = arith.extui %0 : i1 to i32
    %c0_i32_0 = arith.constant 0 : i32
    %2 = arith.cmpi ne, %1, %c0_i32_0 : i32
    scf.if %2 {
      %cst_122 = arith.constant 0.000000e+00 : f32
      %164 = vector.broadcast %cst_122 : f32 to vector<1x8xf32>
      %c0_123 = arith.constant 0 : index
      %c0_124 = arith.constant 0 : index
      %165 = vector.load %arg8[%c0_123, %c0_124] : memref<1x8xf32, #tpu.memory_space<vmem>>, vector<1x8xf32>
      tpu.vector_store %arg8[%c0_123, %c0_124], %164 {strides = array<i32>} : memref<1x8xf32, #tpu.memory_space<vmem>>, vector<1x8xf32>,
      %cst_125 = arith.constant 0.000000e+00 : f32
      %166 = vector.broadcast %cst_125 : f32 to vector<1x8xf32>
      %c0_126 = arith.constant 0 : index
      %c0_127 = arith.constant 0 : index
      %167 = vector.load %arg9[%c0_126, %c0_127] : memref<1x8xf32, #tpu.memory_space<vmem>>, vector<1x8xf32>
      tpu.vector_store %arg9[%c0_126, %c0_127], %166 {strides = array<i32>} : memref<1x8xf32, #tpu.memory_space<vmem>>, vector<1x8xf32>,
      %cst_128 = arith.constant 0.000000e+00 : f32
      %168 = vector.broadcast %cst_128 : f32 to vector<16x8xf32>
      %c0_129 = arith.constant 0 : index
      %c0_130 = arith.constant 0 : index
      %169 = vector.load %arg10[%c0_129, %c0_130] : memref<160x8xf32, #tpu.memory_space<vmem>>, vector<16x8xf32>
      tpu.vector_store %arg10[%c0_129, %c0_130], %168 {strides = array<i32>} : memref<160x8xf32, #tpu.memory_space<vmem>>, vector<16x8xf32>,
      %cst_131 = arith.constant 0.000000e+00 : f32
      %170 = vector.broadcast %cst_131 : f32 to vector<16x8xf32>
      %c144 = arith.constant 144 : index
      %c0_132 = arith.constant 0 : index
      %171 = vector.load %arg10[%c144, %c0_132] : memref<160x8xf32, #tpu.memory_space<vmem>>, vector<16x8xf32>
      tpu.vector_store %arg10[%c144, %c0_132], %170 {strides = array<i32>} : memref<160x8xf32, #tpu.memory_space<vmem>>, vector<16x8xf32>,
    } else {
    }
    %c0 = arith.constant 0 : index
    %c0_1 = arith.constant 0 : index
    %3 = vector.load %arg1[%c0, %c0_1] : memref<128x8xbf16, #tpu.memory_space<vmem>>, vector<128x8xbf16>
    %4 = arith.extf %3 : vector<128x8xbf16> to vector<128x8xf32>
    %c0_2 = arith.constant 0 : index
    %c0_3 = arith.constant 0 : index
    %5 = vector.load %arg2[%c0_2, %c0_3] : memref<1x8xf32, #tpu.memory_space<vmem>>, vector<1x8xf32>
    %6 = vector.broadcast %5 : vector<1x8xf32> to vector<128x8xf32>
    %7 = arith.mulf %4, %6 : vector<128x8xf32>
    %c0_4 = arith.constant 0 : index
    %c0_5 = arith.constant 0 : index
    %8 = vector.load %arg3[%c0_4, %c0_5] : memref<1x8xf32, #tpu.memory_space<vmem>>, vector<1x8xf32>
    %9 = vector.broadcast %8 : vector<1x8xf32> to vector<128x8xf32>
    %10 = arith.addf %7, %9 : vector<128x8xf32>
    %cst = arith.constant 0.000000e+00 : f32
    %11 = vector.broadcast %cst : f32 to vector<128x8xf32>
    %12 = arith.maximumf %10, %11 : vector<128x8xf32>
    %c16 = arith.constant 16 : index
    %c0_6 = arith.constant 0 : index
    %13 = vector.load %arg10[%c16, %c0_6] : memref<160x8xf32, #tpu.memory_space<vmem>>, vector<128x8xf32>
    tpu.vector_store %arg10[%c16, %c0_6], %12 {strides = array<i32>} : memref<160x8xf32, #tpu.memory_space<vmem>>, vector<128x8xf32>,
    %c0_7 = arith.constant 0 : index
    %c0_8 = arith.constant 0 : index
    %14 = vector.load %arg5[%c0_7, %c0_8] : memref<128x1xi32, #tpu.memory_space<vmem>>, vector<128x1xi32>
    %c0_9 = arith.constant 0 : index
    %c0_10 = arith.constant 0 : index
    %15 = vector.load %arg6[%c0_9, %c0_10] : memref<128x1xi32, #tpu.memory_space<vmem>>, vector<128x1xi32>
    %cst_11 = arith.constant 0.000000e+00 : f32
    %16 = vector.broadcast %cst_11 : f32 to vector<128x8xf32>
    %c0_12 = arith.constant 0 : index
    %c0_13 = arith.constant 0 : index
    %17 = vector.load %arg11[%c0_12, %c0_13] : memref<128x8xf32, #tpu.memory_space<vmem>>, vector<128x8xf32>
    tpu.vector_store %arg11[%c0_12, %c0_13], %16 {strides = array<i32>} : memref<128x8xf32, #tpu.memory_space<vmem>>, vector<128x8xf32>,
    %c7 = arith.constant 7 : index
    %c0_14 = arith.constant 0 : index
    %18 = vector.load %arg10[%c7, %c0_14] : memref<160x8xf32, #tpu.memory_space<vmem>>, vector<128x8xf32>
    %c1_i32 = arith.constant 1 : i32
    %19 = vector.broadcast %c1_i32 : i32 to vector<128x1xi32>
    %20 = arith.cmpi sge, %14, %19 : vector<128x1xi32>
    %c1_i32_15 = arith.constant 1 : i32
    %21 = vector.broadcast %c1_i32_15 : i32 to vector<128x1xi32>
    %22 = arith.cmpi sge, %15, %21 : vector<128x1xi32>
    %23 = arith.andi %20, %22 : vector<128x1xi1>
    %cst_16 = arith.constant 0.000000e+00 : f32
    %24 = vector.shape_cast %23 : vector<128x1xi1> to vector<128x1xi1>
    %25 = vector.broadcast %24 : vector<128x1xi1> to vector<128x8xi1>
    %26 = vector.broadcast %cst_16 : f32 to vector<128x8xf32>
    %27 = arith.select %25, %18, %26 : vector<128x8xi1>, vector<128x8xf32>
    %c0_17 = arith.constant 0 : index
    %c0_18 = arith.constant 0 : index
    %28 = vector.load %arg11[%c0_17, %c0_18] : memref<128x8xf32, #tpu.memory_space<vmem>>, vector<128x8xf32>
    %29 = arith.truncf %27 : vector<128x8xf32> to vector<128x8xbf16>
    %c0_19 = arith.constant 0 : index
    %c0_20 = arith.constant 0 : index
    %c0_21 = arith.constant 0 : index
    %30 = vector.load %arg4[%c0_19, %c0_20, %c0_21] : memref<9x8x8xbf16, #tpu.memory_space<vmem>>, vector<1x8x8xbf16>
    %31 = vector.shape_cast %30 : vector<1x8x8xbf16> to vector<8x8xbf16>
    %cst_22 = arith.constant dense<0.000000e+00> : vector<128x8xf32>
    %32 = tpu.matmul %29, %31, %cst_22 {dimension_numbers = #tpu.dot_dimension_numbers<[1], [0], [0], [1], [0, 0, 1, 1], [], []>} : vector<128x8xbf16>, vector<8x8xbf16>, vector<128x8xf32> -> vector<128x8xf32>
    %33 = arith.addf %28, %32 : vector<128x8xf32>
    %c0_23 = arith.constant 0 : index
    %c0_24 = arith.constant 0 : index
    %34 = vector.load %arg11[%c0_23, %c0_24] : memref<128x8xf32, #tpu.memory_space<vmem>>, vector<128x8xf32>
    tpu.vector_store %arg11[%c0_23, %c0_24], %33 {strides = array<i32>} : memref<128x8xf32, #tpu.memory_space<vmem>>, vector<128x8xf32>,
    %c8 = arith.constant 8 : index
    %c0_25 = arith.constant 0 : index
    %35 = vector.load %arg10[%c8, %c0_25] : memref<160x8xf32, #tpu.memory_space<vmem>>, vector<128x8xf32>
    %c1_i32_26 = arith.constant 1 : i32
    %36 = vector.broadcast %c1_i32_26 : i32 to vector<128x1xi32>
    %37 = arith.cmpi sge, %14, %36 : vector<128x1xi32>
    %cst_27 = arith.constant 0.000000e+00 : f32
    %38 = vector.shape_cast %37 : vector<128x1xi1> to vector<128x1xi1>
    %39 = vector.broadcast %38 : vector<128x1xi1> to vector<128x8xi1>
    %40 = vector.broadcast %cst_27 : f32 to vector<128x8xf32>
    %41 = arith.select %39, %35, %40 : vector<128x8xi1>, vector<128x8xf32>
    %c0_28 = arith.constant 0 : index
    %c0_29 = arith.constant 0 : index
    %42 = vector.load %arg11[%c0_28, %c0_29] : memref<128x8xf32, #tpu.memory_space<vmem>>, vector<128x8xf32>
    %43 = arith.truncf %41 : vector<128x8xf32> to vector<128x8xbf16>
    %c1 = arith.constant 1 : index
    %c0_30 = arith.constant 0 : index
    %c0_31 = arith.constant 0 : index
    %44 = vector.load %arg4[%c1, %c0_30, %c0_31] : memref<9x8x8xbf16, #tpu.memory_space<vmem>>, vector<1x8x8xbf16>
    %45 = vector.shape_cast %44 : vector<1x8x8xbf16> to vector<8x8xbf16>
    %cst_32 = arith.constant dense<0.000000e+00> : vector<128x8xf32>
    %46 = tpu.matmul %43, %45, %cst_32 {dimension_numbers = #tpu.dot_dimension_numbers<[1], [0], [0], [1], [0, 0, 1, 1], [], []>} : vector<128x8xbf16>, vector<8x8xbf16>, vector<128x8xf32> -> vector<128x8xf32>
    %47 = arith.addf %42, %46 : vector<128x8xf32>
    %c0_33 = arith.constant 0 : index
    %c0_34 = arith.constant 0 : index
    %48 = vector.load %arg11[%c0_33, %c0_34] : memref<128x8xf32, #tpu.memory_space<vmem>>, vector<128x8xf32>
    tpu.vector_store %arg11[%c0_33, %c0_34], %47 {strides = array<i32>} : memref<128x8xf32, #tpu.memory_space<vmem>>, vector<128x8xf32>,
    %c9 = arith.constant 9 : index
    %c0_35 = arith.constant 0 : index
    %49 = vector.load %arg10[%c9, %c0_35] : memref<160x8xf32, #tpu.memory_space<vmem>>, vector<128x8xf32>
    %c1_i32_36 = arith.constant 1 : i32
    %50 = vector.broadcast %c1_i32_36 : i32 to vector<128x1xi32>
    %51 = arith.cmpi sge, %14, %50 : vector<128x1xi32>
    %c7_i32 = arith.constant 7 : i32
    %52 = vector.broadcast %c7_i32 : i32 to vector<128x1xi32>
    %53 = arith.cmpi slt, %15, %52 : vector<128x1xi32>
    %54 = arith.andi %51, %53 : vector<128x1xi1>
    %cst_37 = arith.constant 0.000000e+00 : f32
    %55 = vector.shape_cast %54 : vector<128x1xi1> to vector<128x1xi1>
    %56 = vector.broadcast %55 : vector<128x1xi1> to vector<128x8xi1>
    %57 = vector.broadcast %cst_37 : f32 to vector<128x8xf32>
    %58 = arith.select %56, %49, %57 : vector<128x8xi1>, vector<128x8xf32>
    %c0_38 = arith.constant 0 : index
    %c0_39 = arith.constant 0 : index
    %59 = vector.load %arg11[%c0_38, %c0_39] : memref<128x8xf32, #tpu.memory_space<vmem>>, vector<128x8xf32>
    %60 = arith.truncf %58 : vector<128x8xf32> to vector<128x8xbf16>
    %c2 = arith.constant 2 : index
    %c0_40 = arith.constant 0 : index
    %c0_41 = arith.constant 0 : index
    %61 = vector.load %arg4[%c2, %c0_40, %c0_41] : memref<9x8x8xbf16, #tpu.memory_space<vmem>>, vector<1x8x8xbf16>
    %62 = vector.shape_cast %61 : vector<1x8x8xbf16> to vector<8x8xbf16>
    %cst_42 = arith.constant dense<0.000000e+00> : vector<128x8xf32>
    %63 = tpu.matmul %60, %62, %cst_42 {dimension_numbers = #tpu.dot_dimension_numbers<[1], [0], [0], [1], [0, 0, 1, 1], [], []>} : vector<128x8xbf16>, vector<8x8xbf16>, vector<128x8xf32> -> vector<128x8xf32>
    %64 = arith.addf %59, %63 : vector<128x8xf32>
    %c0_43 = arith.constant 0 : index
    %c0_44 = arith.constant 0 : index
    %65 = vector.load %arg11[%c0_43, %c0_44] : memref<128x8xf32, #tpu.memory_space<vmem>>, vector<128x8xf32>
    tpu.vector_store %arg11[%c0_43, %c0_44], %64 {strides = array<i32>} : memref<128x8xf32, #tpu.memory_space<vmem>>, vector<128x8xf32>,
    %c15 = arith.constant 15 : index
    %c0_45 = arith.constant 0 : index
    %66 = vector.load %arg10[%c15, %c0_45] : memref<160x8xf32, #tpu.memory_space<vmem>>, vector<128x8xf32>
    %c1_i32_46 = arith.constant 1 : i32
    %67 = vector.broadcast %c1_i32_46 : i32 to vector<128x1xi32>
    %68 = arith.cmpi sge, %15, %67 : vector<128x1xi32>
    %cst_47 = arith.constant 0.000000e+00 : f32
    %69 = vector.shape_cast %68 : vector<128x1xi1> to vector<128x1xi1>
    %70 = vector.broadcast %69 : vector<128x1xi1> to vector<128x8xi1>
    %71 = vector.broadcast %cst_47 : f32 to vector<128x8xf32>
    %72 = arith.select %70, %66, %71 : vector<128x8xi1>, vector<128x8xf32>
    %c0_48 = arith.constant 0 : index
    %c0_49 = arith.constant 0 : index
    %73 = vector.load %arg11[%c0_48, %c0_49] : memref<128x8xf32, #tpu.memory_space<vmem>>, vector<128x8xf32>
    %74 = arith.truncf %72 : vector<128x8xf32> to vector<128x8xbf16>
    %c3 = arith.constant 3 : index
    %c0_50 = arith.constant 0 : index
    %c0_51 = arith.constant 0 : index
    %75 = vector.load %arg4[%c3, %c0_50, %c0_51] : memref<9x8x8xbf16, #tpu.memory_space<vmem>>, vector<1x8x8xbf16>
    %76 = vector.shape_cast %75 : vector<1x8x8xbf16> to vector<8x8xbf16>
    %cst_52 = arith.constant dense<0.000000e+00> : vector<128x8xf32>
    %77 = tpu.matmul %74, %76, %cst_52 {dimension_numbers = #tpu.dot_dimension_numbers<[1], [0], [0], [1], [0, 0, 1, 1], [], []>} : vector<128x8xbf16>, vector<8x8xbf16>, vector<128x8xf32> -> vector<128x8xf32>
    %78 = arith.addf %73, %77 : vector<128x8xf32>
    %c0_53 = arith.constant 0 : index
    %c0_54 = arith.constant 0 : index
    %79 = vector.load %arg11[%c0_53, %c0_54] : memref<128x8xf32, #tpu.memory_space<vmem>>, vector<128x8xf32>
    tpu.vector_store %arg11[%c0_53, %c0_54], %78 {strides = array<i32>} : memref<128x8xf32, #tpu.memory_space<vmem>>, vector<128x8xf32>,
    %c16_55 = arith.constant 16 : index
    %c0_56 = arith.constant 0 : index
    %80 = vector.load %arg10[%c16_55, %c0_56] : memref<160x8xf32, #tpu.memory_space<vmem>>, vector<128x8xf32>
    %c0_57 = arith.constant 0 : index
    %c0_58 = arith.constant 0 : index
    %81 = vector.load %arg11[%c0_57, %c0_58] : memref<128x8xf32, #tpu.memory_space<vmem>>, vector<128x8xf32>
    %82 = arith.truncf %80 : vector<128x8xf32> to vector<128x8xbf16>
    %c4 = arith.constant 4 : index
    %c0_59 = arith.constant 0 : index
    %c0_60 = arith.constant 0 : index
    %83 = vector.load %arg4[%c4, %c0_59, %c0_60] : memref<9x8x8xbf16, #tpu.memory_space<vmem>>, vector<1x8x8xbf16>
    %84 = vector.shape_cast %83 : vector<1x8x8xbf16> to vector<8x8xbf16>
    %cst_61 = arith.constant dense<0.000000e+00> : vector<128x8xf32>
    %85 = tpu.matmul %82, %84, %cst_61 {dimension_numbers = #tpu.dot_dimension_numbers<[1], [0], [0], [1], [0, 0, 1, 1], [], []>} : vector<128x8xbf16>, vector<8x8xbf16>, vector<128x8xf32> -> vector<128x8xf32>
    %86 = arith.addf %81, %85 : vector<128x8xf32>
    %c0_62 = arith.constant 0 : index
    %c0_63 = arith.constant 0 : index
    %87 = vector.load %arg11[%c0_62, %c0_63] : memref<128x8xf32, #tpu.memory_space<vmem>>, vector<128x8xf32>
    tpu.vector_store %arg11[%c0_62, %c0_63], %86 {strides = array<i32>} : memref<128x8xf32, #tpu.memory_space<vmem>>, vector<128x8xf32>,
    %c17 = arith.constant 17 : index
    %c0_64 = arith.constant 0 : index
    %88 = vector.load %arg10[%c17, %c0_64] : memref<160x8xf32, #tpu.memory_space<vmem>>, vector<128x8xf32>
    %c7_i32_65 = arith.constant 7 : i32
    %89 = vector.broadcast %c7_i32_65 : i32 to vector<128x1xi32>
    %90 = arith.cmpi slt, %15, %89 : vector<128x1xi32>
    %cst_66 = arith.constant 0.000000e+00 : f32
    %91 = vector.shape_cast %90 : vector<128x1xi1> to vector<128x1xi1>
    %92 = vector.broadcast %91 : vector<128x1xi1> to vector<128x8xi1>
    %93 = vector.broadcast %cst_66 : f32 to vector<128x8xf32>
    %94 = arith.select %92, %88, %93 : vector<128x8xi1>, vector<128x8xf32>
    %c0_67 = arith.constant 0 : index
    %c0_68 = arith.constant 0 : index
    %95 = vector.load %arg11[%c0_67, %c0_68] : memref<128x8xf32, #tpu.memory_space<vmem>>, vector<128x8xf32>
    %96 = arith.truncf %94 : vector<128x8xf32> to vector<128x8xbf16>
    %c5 = arith.constant 5 : index
    %c0_69 = arith.constant 0 : index
    %c0_70 = arith.constant 0 : index
    %97 = vector.load %arg4[%c5, %c0_69, %c0_70] : memref<9x8x8xbf16, #tpu.memory_space<vmem>>, vector<1x8x8xbf16>
    %98 = vector.shape_cast %97 : vector<1x8x8xbf16> to vector<8x8xbf16>
    %cst_71 = arith.constant dense<0.000000e+00> : vector<128x8xf32>
    %99 = tpu.matmul %96, %98, %cst_71 {dimension_numbers = #tpu.dot_dimension_numbers<[1], [0], [0], [1], [0, 0, 1, 1], [], []>} : vector<128x8xbf16>, vector<8x8xbf16>, vector<128x8xf32> -> vector<128x8xf32>
    %100 = arith.addf %95, %99 : vector<128x8xf32>
    %c0_72 = arith.constant 0 : index
    %c0_73 = arith.constant 0 : index
    %101 = vector.load %arg11[%c0_72, %c0_73] : memref<128x8xf32, #tpu.memory_space<vmem>>, vector<128x8xf32>
    tpu.vector_store %arg11[%c0_72, %c0_73], %100 {strides = array<i32>} : memref<128x8xf32, #tpu.memory_space<vmem>>, vector<128x8xf32>,
    %c23 = arith.constant 23 : index
    %c0_74 = arith.constant 0 : index
    %102 = vector.load %arg10[%c23, %c0_74] : memref<160x8xf32, #tpu.memory_space<vmem>>, vector<128x8xf32>
    %c7_i32_75 = arith.constant 7 : i32
    %103 = vector.broadcast %c7_i32_75 : i32 to vector<128x1xi32>
    %104 = arith.cmpi slt, %14, %103 : vector<128x1xi32>
    %c1_i32_76 = arith.constant 1 : i32
    %105 = vector.broadcast %c1_i32_76 : i32 to vector<128x1xi32>
    %106 = arith.cmpi sge, %15, %105 : vector<128x1xi32>
    %107 = arith.andi %104, %106 : vector<128x1xi1>
    %cst_77 = arith.constant 0.000000e+00 : f32
    %108 = vector.shape_cast %107 : vector<128x1xi1> to vector<128x1xi1>
    %109 = vector.broadcast %108 : vector<128x1xi1> to vector<128x8xi1>
    %110 = vector.broadcast %cst_77 : f32 to vector<128x8xf32>
    %111 = arith.select %109, %102, %110 : vector<128x8xi1>, vector<128x8xf32>
    %c0_78 = arith.constant 0 : index
    %c0_79 = arith.constant 0 : index
    %112 = vector.load %arg11[%c0_78, %c0_79] : memref<128x8xf32, #tpu.memory_space<vmem>>, vector<128x8xf32>
    %113 = arith.truncf %111 : vector<128x8xf32> to vector<128x8xbf16>
    %c6 = arith.constant 6 : index
    %c0_80 = arith.constant 0 : index
    %c0_81 = arith.constant 0 : index
    %114 = vector.load %arg4[%c6, %c0_80, %c0_81] : memref<9x8x8xbf16, #tpu.memory_space<vmem>>, vector<1x8x8xbf16>
    %115 = vector.shape_cast %114 : vector<1x8x8xbf16> to vector<8x8xbf16>
    %cst_82 = arith.constant dense<0.000000e+00> : vector<128x8xf32>
    %116 = tpu.matmul %113, %115, %cst_82 {dimension_numbers = #tpu.dot_dimension_numbers<[1], [0], [0], [1], [0, 0, 1, 1], [], []>} : vector<128x8xbf16>, vector<8x8xbf16>, vector<128x8xf32> -> vector<128x8xf32>
    %117 = arith.addf %112, %116 : vector<128x8xf32>
    %c0_83 = arith.constant 0 : index
    %c0_84 = arith.constant 0 : index
    %118 = vector.load %arg11[%c0_83, %c0_84] : memref<128x8xf32, #tpu.memory_space<vmem>>, vector<128x8xf32>
    tpu.vector_store %arg11[%c0_83, %c0_84], %117 {strides = array<i32>} : memref<128x8xf32, #tpu.memory_space<vmem>>, vector<128x8xf32>,
    %c24 = arith.constant 24 : index
    %c0_85 = arith.constant 0 : index
    %119 = vector.load %arg10[%c24, %c0_85] : memref<160x8xf32, #tpu.memory_space<vmem>>, vector<128x8xf32>
    %c7_i32_86 = arith.constant 7 : i32
    %120 = vector.broadcast %c7_i32_86 : i32 to vector<128x1xi32>
    %121 = arith.cmpi slt, %14, %120 : vector<128x1xi32>
    %cst_87 = arith.constant 0.000000e+00 : f32
    %122 = vector.shape_cast %121 : vector<128x1xi1> to vector<128x1xi1>
    %123 = vector.broadcast %122 : vector<128x1xi1> to vector<128x8xi1>
    %124 = vector.broadcast %cst_87 : f32 to vector<128x8xf32>
    %125 = arith.select %123, %119, %124 : vector<128x8xi1>, vector<128x8xf32>
    %c0_88 = arith.constant 0 : index
    %c0_89 = arith.constant 0 : index
    %126 = vector.load %arg11[%c0_88, %c0_89] : memref<128x8xf32, #tpu.memory_space<vmem>>, vector<128x8xf32>
    %127 = arith.truncf %125 : vector<128x8xf32> to vector<128x8xbf16>
    %c7_90 = arith.constant 7 : index
    %c0_91 = arith.constant 0 : index
    %c0_92 = arith.constant 0 : index
    %128 = vector.load %arg4[%c7_90, %c0_91, %c0_92] : memref<9x8x8xbf16, #tpu.memory_space<vmem>>, vector<1x8x8xbf16>
    %129 = vector.shape_cast %128 : vector<1x8x8xbf16> to vector<8x8xbf16>
    %cst_93 = arith.constant dense<0.000000e+00> : vector<128x8xf32>
    %130 = tpu.matmul %127, %129, %cst_93 {dimension_numbers = #tpu.dot_dimension_numbers<[1], [0], [0], [1], [0, 0, 1, 1], [], []>} : vector<128x8xbf16>, vector<8x8xbf16>, vector<128x8xf32> -> vector<128x8xf32>
    %131 = arith.addf %126, %130 : vector<128x8xf32>
    %c0_94 = arith.constant 0 : index
    %c0_95 = arith.constant 0 : index
    %132 = vector.load %arg11[%c0_94, %c0_95] : memref<128x8xf32, #tpu.memory_space<vmem>>, vector<128x8xf32>
    tpu.vector_store %arg11[%c0_94, %c0_95], %131 {strides = array<i32>} : memref<128x8xf32, #tpu.memory_space<vmem>>, vector<128x8xf32>,
    %c25 = arith.constant 25 : index
    %c0_96 = arith.constant 0 : index
    %133 = vector.load %arg10[%c25, %c0_96] : memref<160x8xf32, #tpu.memory_space<vmem>>, vector<128x8xf32>
    %c7_i32_97 = arith.constant 7 : i32
    %134 = vector.broadcast %c7_i32_97 : i32 to vector<128x1xi32>
    %135 = arith.cmpi slt, %14, %134 : vector<128x1xi32>
    %c7_i32_98 = arith.constant 7 : i32
    %136 = vector.broadcast %c7_i32_98 : i32 to vector<128x1xi32>
    %137 = arith.cmpi slt, %15, %136 : vector<128x1xi32>
    %138 = arith.andi %135, %137 : vector<128x1xi1>
    %cst_99 = arith.constant 0.000000e+00 : f32
    %139 = vector.shape_cast %138 : vector<128x1xi1> to vector<128x1xi1>
    %140 = vector.broadcast %139 : vector<128x1xi1> to vector<128x8xi1>
    %141 = vector.broadcast %cst_99 : f32 to vector<128x8xf32>
    %142 = arith.select %140, %133, %141 : vector<128x8xi1>, vector<128x8xf32>
    %c0_100 = arith.constant 0 : index
    %c0_101 = arith.constant 0 : index
    %143 = vector.load %arg11[%c0_100, %c0_101] : memref<128x8xf32, #tpu.memory_space<vmem>>, vector<128x8xf32>
    %144 = arith.truncf %142 : vector<128x8xf32> to vector<128x8xbf16>
    %c8_102 = arith.constant 8 : index
    %c0_103 = arith.constant 0 : index
    %c0_104 = arith.constant 0 : index
    %145 = vector.load %arg4[%c8_102, %c0_103, %c0_104] : memref<9x8x8xbf16, #tpu.memory_space<vmem>>, vector<1x8x8xbf16>
    %146 = vector.shape_cast %145 : vector<1x8x8xbf16> to vector<8x8xbf16>
    %cst_105 = arith.constant dense<0.000000e+00> : vector<128x8xf32>
    %147 = tpu.matmul %144, %146, %cst_105 {dimension_numbers = #tpu.dot_dimension_numbers<[1], [0], [0], [1], [0, 0, 1, 1], [], []>} : vector<128x8xbf16>, vector<8x8xbf16>, vector<128x8xf32> -> vector<128x8xf32>
    %148 = arith.addf %143, %147 : vector<128x8xf32>
    %c0_106 = arith.constant 0 : index
    %c0_107 = arith.constant 0 : index
    %149 = vector.load %arg11[%c0_106, %c0_107] : memref<128x8xf32, #tpu.memory_space<vmem>>, vector<128x8xf32>
    tpu.vector_store %arg11[%c0_106, %c0_107], %148 {strides = array<i32>} : memref<128x8xf32, #tpu.memory_space<vmem>>, vector<128x8xf32>,
    %c0_108 = arith.constant 0 : index
    %c0_109 = arith.constant 0 : index
    %150 = vector.load %arg11[%c0_108, %c0_109] : memref<128x8xf32, #tpu.memory_space<vmem>>, vector<128x8xf32>
    %151 = arith.truncf %150 : vector<128x8xf32> to vector<128x8xbf16>
    %c0_110 = arith.constant 0 : index
    %c0_111 = arith.constant 0 : index
    %152 = vector.load %arg7[%c0_110, %c0_111] : memref<128x8xbf16, #tpu.memory_space<vmem>>, vector<128x8xbf16>
    tpu.vector_store %arg7[%c0_110, %c0_111], %151 {strides = array<i32>} : memref<128x8xbf16, #tpu.memory_space<vmem>>, vector<128x8xbf16>,
    %c0_112 = arith.constant 0 : index
    %c0_113 = arith.constant 0 : index
    %153 = vector.load %arg8[%c0_112, %c0_113] : memref<1x8xf32, #tpu.memory_space<vmem>>, vector<1x8xf32>
    %cst_114 = arith.constant dense<0.000000e+00> : vector<8xf32>
    %154 = vector.multi_reduction <add>, %150, %cst_114 [0] : vector<128x8xf32> to vector<8xf32>
    %155 = vector.shape_cast %154 : vector<8xf32> to vector<1x8xf32>
    %156 = arith.addf %153, %155 : vector<1x8xf32>
    %c0_115 = arith.constant 0 : index
    %c0_116 = arith.constant 0 : index
    %157 = vector.load %arg8[%c0_115, %c0_116] : memref<1x8xf32, #tpu.memory_space<vmem>>, vector<1x8xf32>
    tpu.vector_store %arg8[%c0_115, %c0_116], %156 {strides = array<i32>} : memref<1x8xf32, #tpu.memory_space<vmem>>, vector<1x8xf32>,
    %c0_117 = arith.constant 0 : index
    %c0_118 = arith.constant 0 : index
    %158 = vector.load %arg9[%c0_117, %c0_118] : memref<1x8xf32, #tpu.memory_space<vmem>>, vector<1x8xf32>
    %159 = arith.mulf %150, %150 : vector<128x8xf32>
    %cst_119 = arith.constant dense<0.000000e+00> : vector<8xf32>
    %160 = vector.multi_reduction <add>, %159, %cst_119 [0] : vector<128x8xf32> to vector<8xf32>
    %161 = vector.shape_cast %160 : vector<8xf32> to vector<1x8xf32>
    %162 = arith.addf %158, %161 : vector<1x8xf32>
    %c0_120 = arith.constant 0 : index
    %c0_121 = arith.constant 0 : index
    %163 = vector.load %arg9[%c0_120, %c0_121] : memref<1x8xf32, #tpu.memory_space<vmem>>, vector<1x8xf32>
    tpu.vector_store %arg9[%c0_120, %c0_121], %162 {strides = array<i32>} : memref<1x8xf32, #tpu.memory_space<vmem>>, vector<1x8xf32>,
    return
  }
  func.func @transform_0(%arg0: i32) -> (i32, i32) {
    %c0_i32 = arith.constant 0 : i32
    %c0_i32_0 = arith.constant 0 : i32
    return %arg0, %c0_i32 : i32, i32
  }
  func.func @transform_1(%arg0: i32) -> (i32, i32) {
    %c0_i32 = arith.constant 0 : i32
    %c0_i32_0 = arith.constant 0 : i32
    %c0_i32_1 = arith.constant 0 : i32
    return %c0_i32, %c0_i32_0 : i32, i32
  }
  func.func @transform_2(%arg0: i32) -> (i32, i32) {
    %c0_i32 = arith.constant 0 : i32
    %c0_i32_0 = arith.constant 0 : i32
    %c0_i32_1 = arith.constant 0 : i32
    return %c0_i32, %c0_i32_0 : i32, i32
  }
  func.func @transform_3(%arg0: i32) -> (i32, i32, i32) {
    %c0_i32 = arith.constant 0 : i32
    %c0_i32_0 = arith.constant 0 : i32
    %c0_i32_1 = arith.constant 0 : i32
    %c0_i32_2 = arith.constant 0 : i32
    return %c0_i32, %c0_i32_0, %c0_i32_1 : i32, i32, i32
  }
  func.func @transform_4(%arg0: i32) -> (i32, i32) {
    %c0_i32 = arith.constant 0 : i32
    %c0_i32_0 = arith.constant 0 : i32
    %c0_i32_1 = arith.constant 0 : i32
    return %c0_i32, %c0_i32_0 : i32, i32
  }
  func.func @transform_5(%arg0: i32) -> (i32, i32) {
    %c0_i32 = arith.constant 0 : i32
    %c0_i32_0 = arith.constant 0 : i32
    %c0_i32_1 = arith.constant 0 : i32
    return %c0_i32, %c0_i32_0 : i32, i32
  }
  func.func @transform_6(%arg0: i32) -> (i32, i32) {
    %c0_i32 = arith.constant 0 : i32
    %c0_i32_0 = arith.constant 0 : i32
    return %arg0, %c0_i32 : i32, i32
  }
  func.func @transform_7(%arg0: i32) -> (i32, i32) {
    %c0_i32 = arith.constant 0 : i32
    %c0_i32_0 = arith.constant 0 : i32
    %c0_i32_1 = arith.constant 0 : i32
    return %c0_i32, %c0_i32_0 : i32, i32
  }
  func.func @transform_8(%arg0: i32) -> (i32, i32) {
    %c0_i32 = arith.constant 0 : i32
    %c0_i32_0 = arith.constant 0 : i32
    %c0_i32_1 = arith.constant 0 : i32
    return %c0_i32, %c0_i32_0 : i32, i32
  }
}

module attributes {stable_mosaic.version = 11 : i64} {
  func.func @_bn_add_relu_kernel(%arg0: i32, %arg1: memref<8x128xbf16, #tpu.memory_space<vmem>>, %arg2: memref<1x128xf32, #tpu.memory_space<vmem>>, %arg3: memref<1x128xf32, #tpu.memory_space<vmem>>, %arg4: memref<8x128xbf16, #tpu.memory_space<vmem>>, %arg5: memref<8x128xf32, #tpu.memory_space<vmem>>) attributes {dimension_semantics = [#tpu.dimension_semantics<parallel>], iteration_bounds = array<i64: 1>, scalar_prefetch = 0 : i64, scratch_operands = 0 : i64, tpu.core_type = #tpu.core_type<tc>, window_params = [{transform_indices = @transform_0, window_bounds = array<i64: 8, 128>}, {pipeline_mode = #tpu.pipeline_mode<synchronous>, transform_indices = @transform_1, window_bounds = array<i64: 1, 128>}, {pipeline_mode = #tpu.pipeline_mode<synchronous>, transform_indices = @transform_2, window_bounds = array<i64: 1, 128>}, {transform_indices = @transform_3, window_bounds = array<i64: 8, 128>}, {transform_indices = @transform_4, window_bounds = array<i64: 8, 128>}]} {
    %c0 = arith.constant 0 : index
    %c0_0 = arith.constant 0 : index
    %0 = vector.load %arg1[%c0, %c0_0] : memref<8x128xbf16, #tpu.memory_space<vmem>>, vector<8x128xbf16>
    %1 = arith.extf %0 : vector<8x128xbf16> to vector<8x128xf32>
    %c0_1 = arith.constant 0 : index
    %c0_2 = arith.constant 0 : index
    %2 = vector.load %arg4[%c0_1, %c0_2] : memref<8x128xbf16, #tpu.memory_space<vmem>>, vector<8x128xbf16>
    %3 = arith.extf %2 : vector<8x128xbf16> to vector<8x128xf32>
    %c0_3 = arith.constant 0 : index
    %c0_4 = arith.constant 0 : index
    %4 = vector.load %arg2[%c0_3, %c0_4] : memref<1x128xf32, #tpu.memory_space<vmem>>, vector<1x128xf32>
    %5 = vector.broadcast %4 : vector<1x128xf32> to vector<8x128xf32>
    %6 = arith.mulf %1, %5 : vector<8x128xf32>
    %c0_5 = arith.constant 0 : index
    %c0_6 = arith.constant 0 : index
    %7 = vector.load %arg3[%c0_5, %c0_6] : memref<1x128xf32, #tpu.memory_space<vmem>>, vector<1x128xf32>
    %8 = vector.broadcast %7 : vector<1x128xf32> to vector<8x128xf32>
    %9 = arith.addf %6, %8 : vector<8x128xf32>
    %10 = arith.addf %9, %3 : vector<8x128xf32>
    %cst = arith.constant 0.000000e+00 : f32
    %11 = vector.broadcast %cst : f32 to vector<8x128xf32>
    %12 = arith.maximumf %10, %11 : vector<8x128xf32>
    %c0_7 = arith.constant 0 : index
    %c0_8 = arith.constant 0 : index
    %13 = vector.load %arg5[%c0_7, %c0_8] : memref<8x128xf32, #tpu.memory_space<vmem>>, vector<8x128xf32>
    tpu.vector_store %arg5[%c0_7, %c0_8], %12 {strides = array<i32>} : memref<8x128xf32, #tpu.memory_space<vmem>>, vector<8x128xf32>,
    return
  }
  func.func @transform_0(%arg0: i32) -> (i32, i32) {
    %c0_i32 = arith.constant 0 : i32
    %c0_i32_0 = arith.constant 0 : i32
    return %arg0, %c0_i32 : i32, i32
  }
  func.func @transform_1(%arg0: i32) -> (i32, i32) {
    %c0_i32 = arith.constant 0 : i32
    %c0_i32_0 = arith.constant 0 : i32
    %c0_i32_1 = arith.constant 0 : i32
    return %c0_i32, %c0_i32_0 : i32, i32
  }
  func.func @transform_2(%arg0: i32) -> (i32, i32) {
    %c0_i32 = arith.constant 0 : i32
    %c0_i32_0 = arith.constant 0 : i32
    %c0_i32_1 = arith.constant 0 : i32
    return %c0_i32, %c0_i32_0 : i32, i32
  }
  func.func @transform_3(%arg0: i32) -> (i32, i32) {
    %c0_i32 = arith.constant 0 : i32
    %c0_i32_0 = arith.constant 0 : i32
    return %arg0, %c0_i32 : i32, i32
  }
  func.func @transform_4(%arg0: i32) -> (i32, i32) {
    %c0_i32 = arith.constant 0 : i32
    %c0_i32_0 = arith.constant 0 : i32
    return %arg0, %c0_i32 : i32, i32
  }
}

</mosaic_0001>

<llo_original>
// kernel: basic_block_forward.3
$region0: #{basic_block_forward.3}
  #allocation0 [shape = 'u32[]', space=smem, size = 0x4, offset = 0x4, fixed_abs, tag = 'smem constant byte address 0x4 - core index']
  #allocation1 [shape = 'u32[144,128]{1,0:T(1,128)}', space=vmem, size = 0x12000, scoped, tag = 'internal scratch']
  %s0 = inlined_call_operand.vmem [shape: bf16[128,36], index: 0, kind: input, shape index: {}]
  %s1 = inlined_call_operand.vmem [shape: bf16[36,8], index: 1, kind: input, shape index: {}]
  %s2 = inlined_call_operand.vmem [shape: bf16[128,8], index: 2, kind: output, shape index: {0}]
  %s3 = inlined_call_operand.vmem [shape: f32[1,8], index: 3, kind: output, shape index: {1}]
  %s4 = inlined_call_operand.vmem [shape: f32[1,8], index: 4, kind: output, shape index: {2}]
  %5 = xla_tuple %s2, %s3, %s4
  %s6 = sld [smem:[#allocation0]]
  $region38: #{basic_block_forward.3} parent=0
    _
  %s8 = ssub.s32 1, %s6
  %s9 = scalar_select 0, %s8, %s6
  // Predicated region
  $region2: #{basic_block_forward.3} parent=0 // pred_check
    _
  $region3: #{basic_block_forward.3} parent=0 // pred_check_branch
    %11 = sbr.rel (0) target = $region5
  $region4: #{basic_block_forward.3} parent=0 // pred_region
    _
  $region5: #{basic_block_forward.3} parent=0 // pred_fallthru
    _
  // Predicated region
  $region6: #{basic_block_forward.3} parent=0 // pred_check
    _
  $region7: #{basic_block_forward.3} parent=0 // pred_check_branch
    %13 = sbr.rel (0) target = $region9
  $region8: #{basic_block_forward.3} parent=0 // pred_region
    _
  $region9: #{basic_block_forward.3} parent=0 // pred_fallthru
    _
  %p15 = scmp.eq.s32.totalorder 0, 0
  // Predicated region
  $region10: #{basic_block_forward.3} parent=0 // pred_check
    %p16 = pneg %p15
  $region11: #{basic_block_forward.3} parent=0 // pred_check_branch
    %18 = sbr.rel (%p16) target = $region13
  $region12: #{basic_block_forward.3} parent=0 // pred_region
    %vm19 = vcmask 57344
    %20 = vst.msk [vmem:[%s3] sm:$0x1] %vm19, 0.0
    %21 = vst.msk [vmem:[%s4] sm:$0x1] %vm19, 0.0
  $region13: #{basic_block_forward.3} parent=0 // pred_fallthru
    _
  %v22 = vld [vmem:[%s0] sm:$0xf]
  %v23 = vld [vmem:[%s0 + $0x4] sm:$0xf]
  %v24 = vld [vmem:[%s0 + $0x8] sm:$0xf]
  %v25 = vld [vmem:[%s0 + $0xc] sm:$0xf]
  %v26 = vld [vmem:[%s0 + $0x10] sm:$0xf]
  %v27 = vld [vmem:[%s0 + $0x14] sm:$0xf]
  %v28 = vld [vmem:[%s0 + $0x18] sm:$0xf]
  %v29 = vld [vmem:[%s0 + $0x1c] sm:$0xf]
  %v30 = vld [vmem:[%s0 + $0x20] sm:$0xf]
  %v31 = vld [vmem:[%s0 + $0x24] sm:$0xf]
  %v32 = vld [vmem:[%s0 + $0x28] sm:$0xf]
  %v33 = vld [vmem:[%s0 + $0x2c] sm:$0xf]
  %v34 = vld [vmem:[%s0 + $0x30] sm:$0xf]
  %v35 = vld [vmem:[%s0 + $0x34] sm:$0xf]
  %v36 = vld [vmem:[%s0 + $0x38] sm:$0xf]
  %v37 = vld [vmem:[%s0 + $0x3c] sm:$0xf]
  %v38 = vld [vmem:[%s1] sm:$0xf]
  %v39 = vld [vmem:[%s1 + $0x4] sm:$0xf]
  %v40 = vld [vmem:[%s1 + $0x8] sm:$0xf]
  %v41 = vld [vmem:[%s1 + $0xc] sm:$0xf]
  %v42 = vld [vmem:[%s1 + $0x10] sm:$0x3]
  %v59 = vunpack.c.l.b16 %v22
  %v60 = vunpack.c.l.b16 %v23
  %v61 = vunpack.c.l.b16 %v24
  %v62 = vunpack.c.l.b16 %v25
  %v63 = vunpack.c.l.b16 %v26
  %v64 = vunpack.c.l.b16 %v27
  %v65 = vunpack.c.l.b16 %v28
  %v66 = vunpack.c.l.b16 %v29
  %v67 = vunpack.c.l.b16 %v30
  %v68 = vunpack.c.l.b16 %v31
  %v69 = vunpack.c.l.b16 %v32
  %v70 = vunpack.c.l.b16 %v33
  %v71 = vunpack.c.l.b16 %v34
  %v72 = vunpack.c.l.b16 %v35
  %v73 = vunpack.c.l.b16 %v36
  %v74 = vunpack.c.l.b16 %v37
  %v75 = vpack.c.b16 %v60, %v59
  %v76 = vpack.c.b16 %v62, %v61
  %v77 = vpack.c.b16 %v64, %v63
  %v78 = vpack.c.b16 %v66, %v65
  %v79 = vpack.c.b16 %v68, %v67
  %v80 = vpack.c.b16 %v70, %v69
  %v81 = vpack.c.b16 %v72, %v71
  %v82 = vpack.c.b16 %v74, %v73
  %v88 = vunpack.c.l.b16 %v38
  %v89 = vunpack.c.l.b16 %v39
  %v90 = vunpack.c.l.b16 %v40
  %v91 = vunpack.c.l.b16 %v41
  %v92 = vunpack.c.l.b16 %v42
  %v93 = vpack.c.b16 %v89, %v88
  %v94 = vpack.c.b16 %v91, %v90
  %v95 = vpack.c.b16 %v92, %v92
  %vm98 = vcmask 293888
  %v100 = vsel %vm98, %v75, 0
  %v103 = vsel %vm98, %v76, 0
  %v106 = vsel %vm98, %v77, 0
  %v109 = vsel %vm98, %v78, 0
  %v112 = vsel %vm98, %v79, 0
  %v115 = vsel %vm98, %v80, 0
  %v118 = vsel %vm98, %v81, 0
  %v121 = vsel %vm98, %v82, 0
  %vm123 = vcmask 1041408
  %v125 = vsel %vm123, %v95, 0
  %127 = vmatprep.subr.bf16.mxu0 0
  %128 = vmatpush1.bf16.msra.mxu0 %v93
  %129 = vmatprep.subr.bf16.mxu0 0
  %130 = vmatpush1.bf16.msra.mxu0 %v94
  %131 = vmatprep.subr.bf16.mxu0 0
  %132 = vmatpush1.bf16.msra.mxu0 %v125
  %133 = vmatprep.subr.bf16.mxu0 0
  %134 = vmatpush1.bf16.msra.mxu0 0
  %135 = vmatprep.subr.bf16.mxu0 0
  %136 = vmatpush1.bf16.msra.mxu0 0
  %137 = vmatprep.subr.bf16.mxu0 0
  %138 = vmatpush1.bf16.msra.mxu0 0
  %139 = vmatprep.subr.bf16.mxu0 0
  %140 = vmatpush1.bf16.msra.mxu0 0
  %141 = vmatprep.subr.bf16.mxu0 0
  %142 = vmatpush1.bf16.msra.mxu0 0
  %143 = vmatprep.subr.bf16.mxu0 0
  %144 = vmatpush1.bf16.msra.mxu0 0
  %145 = vmatprep.subr.bf16.mxu0 0
  %146 = vmatpush1.bf16.msra.mxu0 0
  %147 = vmatprep.subr.bf16.mxu0 0
  %148 = vmatpush1.bf16.msra.mxu0 0
  %149 = vmatprep.subr.bf16.mxu0 0
  %150 = vmatpush1.bf16.msra.mxu0 0
  %151 = vmatprep.subr.bf16.mxu0 0
  %152 = vmatpush1.bf16.msra.mxu0 0
  %153 = vmatprep.subr.bf16.mxu0 0
  %154 = vmatpush1.bf16.msra.mxu0 0
  %155 = vmatprep.subr.bf16.mxu0 0
  %156 = vmatpush1.bf16.msra.mxu0 0
  %157 = vmatprep.subr.bf16.mxu0 0
  %158 = vmatpush1.bf16.msra.mxu0 0
  %159 = vmatprep.mubr.bf16.mxu0 0
  %160 = vmatmul.mubr.bf16.gmra.mrb[0].mxu0 %v100
  %v161 = vpop.f32.mrb[0].mxu0
  %v162 = vadd.f32 0.0, %v161
  %v163 = vpop.f32.mrb[0].mxu0
  %v164 = vpop.f32.mrb[0].mxu0
  %v165 = vadd.f32 0.0, %v164
  %v166 = vpop.f32.mrb[0].mxu0
  %167 = vmatprep.mubr.bf16.mxu0 0
  %168 = vmatmul.mubr.bf16.gmra.mrb[0].mxu0 %v103
  %v169 = vpop.f32.mrb[0].mxu0
  %v170 = vadd.f32 0.0, %v169
  %v171 = vpop.f32.mrb[0].mxu0
  %v172 = vpop.f32.mrb[0].mxu0
  %v173 = vadd.f32 0.0, %v172
  %v174 = vpop.f32.mrb[0].mxu0
  %175 = vmatprep.mubr.bf16.mxu0 0
  %176 = vmatmul.mubr.bf16.gmra.mrb[0].mxu0 %v106
  %v177 = vpop.f32.mrb[0].mxu0
  %v178 = vadd.f32 0.0, %v177
  %v179 = vpop.f32.mrb[0].mxu0
  %v180 = vpop.f32.mrb[0].mxu0
  %v181 = vadd.f32 0.0, %v180
  %v182 = vpop.f32.mrb[0].mxu0
  %183 = vmatprep.mubr.bf16.mxu0 0
  %184 = vmatmul.mubr.bf16.gmra.mrb[0].mxu0 %v109
  %v185 = vpop.f32.mrb[0].mxu0
  %v186 = vadd.f32 0.0, %v185
  %v187 = vpop.f32.mrb[0].mxu0
  %v188 = vpop.f32.mrb[0].mxu0
  %v189 = vadd.f32 0.0, %v188
  %v190 = vpop.f32.mrb[0].mxu0
  %191 = vmatprep.mubr.bf16.mxu0 0
  %192 = vmatmul.mubr.bf16.gmra.mrb[0].mxu0 %v112
  %v193 = vpop.f32.mrb[0].mxu0
  %v194 = vadd.f32 0.0, %v193
  %v195 = vpop.f32.mrb[0].mxu0
  %v196 = vpop.f32.mrb[0].mxu0
  %v197 = vadd.f32 0.0, %v196
  %v198 = vpop.f32.mrb[0].mxu0
  %199 = vmatprep.mubr.bf16.mxu0 0
  %200 = vmatmul.mubr.bf16.gmra.mrb[0].mxu0 %v115
  %v201 = vpop.f32.mrb[0].mxu0
  %v202 = vadd.f32 0.0, %v201
  %v203 = vpop.f32.mrb[0].mxu0
  %v204 = vpop.f32.mrb[0].mxu0
  %v205 = vadd.f32 0.0, %v204
  %v206 = vpop.f32.mrb[0].mxu0
  %207 = vmatprep.mubr.bf16.mxu0 0
  %208 = vmatmul.mubr.bf16.gmra.mrb[0].mxu0 %v118
  %v209 = vpop.f32.mrb[0].mxu0
  %v210 = vadd.f32 0.0, %v209
  %v211 = vpop.f32.mrb[0].mxu0
  %v212 = vpop.f32.mrb[0].mxu0
  %v213 = vadd.f32 0.0, %v212
  %v214 = vpop.f32.mrb[0].mxu0
  %215 = vmatprep.mubr.bf16.mxu0 0
  %216 = vmatmul.mubr.bf16.gmra.mrb[0].mxu0 %v121
  %v217 = vpop.f32.mrb[0].mxu0
  %v218 = vadd.f32 0.0, %v217
  %v219 = vpop.f32.mrb[0].mxu0
  %v220 = vpop.f32.mrb[0].mxu0
  %v221 = vadd.f32 0.0, %v220
  %v222 = vpop.f32.mrb[0].mxu0
  %223 = vdwg.mxu0
  %v224 = vpack.c.bf16 %v165, %v162
  %v225 = vpack.c.bf16 %v173, %v170
  %v226 = vpack.c.bf16 %v181, %v178
  %v227 = vpack.c.bf16 %v189, %v186
  %v228 = vpack.c.bf16 %v197, %v194
  %v229 = vpack.c.bf16 %v205, %v202
  %v230 = vpack.c.bf16 %v213, %v210
  %v231 = vpack.c.bf16 %v221, %v218
  %v240 = vunpack.c.l.b16 %v224
  %v241 = vunpack.c.h.b16 %v224
  %v242 = vunpack.c.l.b16 %v225
  %v243 = vunpack.c.h.b16 %v225
  %v244 = vunpack.c.l.b16 %v226
  %v245 = vunpack.c.h.b16 %v226
  %v246 = vunpack.c.l.b16 %v227
  %v247 = vunpack.c.h.b16 %v227
  %v248 = vunpack.c.l.b16 %v228
  %v249 = vunpack.c.h.b16 %v228
  %v250 = vunpack.c.l.b16 %v229
  %v251 = vunpack.c.h.b16 %v229
  %v252 = vunpack.c.l.b16 %v230
  %v253 = vunpack.c.h.b16 %v230
  %v254 = vunpack.c.l.b16 %v231
  %v255 = vunpack.c.h.b16 %v231
  %v256 = vpack.c.b16 %v240, %v240
  %v257 = vpack.c.b16 %v241, %v241
  %v258 = vpack.c.b16 %v242, %v242
  %v259 = vpack.c.b16 %v243, %v243
  %v260 = vpack.c.b16 %v244, %v244
  %v261 = vpack.c.b16 %v245, %v245
  %v262 = vpack.c.b16 %v246, %v246
  %v263 = vpack.c.b16 %v247, %v247
  %v264 = vpack.c.b16 %v248, %v248
  %v265 = vpack.c.b16 %v249, %v249
  %v266 = vpack.c.b16 %v250, %v250
  %v267 = vpack.c.b16 %v251, %v251
  %v268 = vpack.c.b16 %v252, %v252
  %v269 = vpack.c.b16 %v253, %v253
  %v270 = vpack.c.b16 %v254, %v254
  %v271 = vpack.c.b16 %v255, %v255
  %vm288 = vcmask 60416
  %289 = vst.msk [vmem:[%s2] sm:$0xf] %vm288, %v256
  %290 = vst.msk [vmem:[%s2 + $0x4] sm:$0xf] %vm288, %v257
  %291 = vst.msk [vmem:[%s2 + $0x8] sm:$0xf] %vm288, %v258
  %292 = vst.msk [vmem:[%s2 + $0xc] sm:$0xf] %vm288, %v259
  %293 = vst.msk [vmem:[%s2 + $0x10] sm:$0xf] %vm288, %v260
  %294 = vst.msk [vmem:[%s2 + $0x14] sm:$0xf] %vm288, %v261
  %295 = vst.msk [vmem:[%s2 + $0x18] sm:$0xf] %vm288, %v262
  %296 = vst.msk [vmem:[%s2 + $0x1c] sm:$0xf] %vm288, %v263
  %297 = vst.msk [vmem:[%s2 + $0x20] sm:$0xf] %vm288, %v264
  %298 = vst.msk [vmem:[%s2 + $0x24] sm:$0xf] %vm288, %v265
  %299 = vst.msk [vmem:[%s2 + $0x28] sm:$0xf] %vm288, %v266
  %300 = vst.msk [vmem:[%s2 + $0x2c] sm:$0xf] %vm288, %v267
  %301 = vst.msk [vmem:[%s2 + $0x30] sm:$0xf] %vm288, %v268
  %302 = vst.msk [vmem:[%s2 + $0x34] sm:$0xf] %vm288, %v269
  %303 = vst.msk [vmem:[%s2 + $0x38] sm:$0xf] %vm288, %v270
  %304 = vst.msk [vmem:[%s2 + $0x3c] sm:$0xf] %vm288, %v271
  %v305 = vld [vmem:[%s3] sm:$0x1]
  %vm306 = vcmask 64512
  %v307 = vsel %vm306, %v162, 0.0
  %v308 = vsel %vm306, %v165, 0.0
  %v309 = vadd.f32 %v307, %v308
  %v310 = vsel %vm306, %v170, 0.0
  %v311 = vadd.f32 %v309, %v310
  %v312 = vsel %vm306, %v173, 0.0
  %v313 = vadd.f32 %v311, %v312
  %v314 = vsel %vm306, %v178, 0.0
  %v315 = vadd.f32 %v313, %v314
  %v316 = vsel %vm306, %v181, 0.0
  %v317 = vadd.f32 %v315, %v316
  %v318 = vsel %vm306, %v186, 0.0
  %v319 = vadd.f32 %v317, %v318
  %v320 = vsel %vm306, %v189, 0.0
  %v321 = vadd.f32 %v319, %v320
  %v322 = vsel %vm306, %v194, 0.0
  %v323 = vadd.f32 %v321, %v322
  %v324 = vsel %vm306, %v197, 0.0
  %v325 = vadd.f32 %v323, %v324
  %v326 = vsel %vm306, %v202, 0.0
  %v327 = vadd.f32 %v325, %v326
  %v328 = vsel %vm306, %v205, 0.0
  %v329 = vadd.f32 %v327, %v328
  %v330 = vsel %vm306, %v210, 0.0
  %v331 = vadd.f32 %v329, %v330
  %v332 = vsel %vm306, %v213, 0.0
  %v333 = vadd.f32 %v331, %v332
  %v334 = vsel %vm306, %v218, 0.0
  %v335 = vadd.f32 %v333, %v334
  %v336 = vsel %vm306, %v221, 0.0
  %v337 = vadd.f32 %v335, %v336
  %v338 = vrot.slane %v337, 4
  %v339 = vadd.f32 %v337, %v338
  %v340 = vrot.slane %v339, 2
  %v341 = vadd.f32 %v339, %v340
  %v342 = vrot.slane %v341, 1
  %v343 = vadd.f32 %v341, %v342
  %v344 = vadd.f32 %v305, %v343
  %vm345 = vcmask 57344
  %346 = vst.msk [vmem:[%s3] sm:$0x1] %vm345, %v344
  %v347 = vld [vmem:[%s4] sm:$0x1]
  %v348 = vmul.f32 %v162, %v162
  %v349 = vmul.f32 %v165, %v165
  %v350 = vmul.f32 %v170, %v170
  %v351 = vmul.f32 %v173, %v173
  %v352 = vmul.f32 %v178, %v178
  %v353 = vmul.f32 %v181, %v181
  %v354 = vmul.f32 %v186, %v186
  %v355 = vmul.f32 %v189, %v189
  %v356 = vmul.f32 %v194, %v194
  %v357 = vmul.f32 %v197, %v197
  %v358 = vmul.f32 %v202, %v202
  %v359 = vmul.f32 %v205, %v205
  %v360 = vmul.f32 %v210, %v210
  %v361 = vmul.f32 %v213, %v213
  %v362 = vmul.f32 %v218, %v218
  %v363 = vmul.f32 %v221, %v221
  %v364 = vsel %vm306, %v348, 0.0
  %v365 = vsel %vm306, %v349, 0.0
  %v366 = vadd.f32 %v364, %v365
  %v367 = vsel %vm306, %v350, 0.0
  %v368 = vadd.f32 %v366, %v367
  %v369 = vsel %vm306, %v351, 0.0
  %v370 = vadd.f32 %v368, %v369
  %v371 = vsel %vm306, %v352, 0.0
  %v372 = vadd.f32 %v370, %v371
  %v373 = vsel %vm306, %v353, 0.0
  %v374 = vadd.f32 %v372, %v373
  %v375 = vsel %vm306, %v354, 0.0
  %v376 = vadd.f32 %v374, %v375
  %v377 = vsel %vm306, %v355, 0.0
  %v378 = vadd.f32 %v376, %v377
  %v379 = vsel %vm306, %v356, 0.0
  %v380 = vadd.f32 %v378, %v379
  %v381 = vsel %vm306, %v357, 0.0
  %v382 = vadd.f32 %v380, %v381
  %v383 = vsel %vm306, %v358, 0.0
  %v384 = vadd.f32 %v382, %v383
  %v385 = vsel %vm306, %v359, 0.0
  %v386 = vadd.f32 %v384, %v385
  %v387 = vsel %vm306, %v360, 0.0
  %v388 = vadd.f32 %v386, %v387
  %v389 = vsel %vm306, %v361, 0.0
  %v390 = vadd.f32 %v388, %v389
  %v391 = vsel %vm306, %v362, 0.0
  %v392 = vadd.f32 %v390, %v391
  %v393 = vsel %vm306, %v363, 0.0
  %v394 = vadd.f32 %v392, %v393
  %v395 = vrot.slane %v394, 4
  %v396 = vadd.f32 %v394, %v395
  %v397 = vrot.slane %v396, 2
  %v398 = vadd.f32 %v396, %v397
  %v399 = vrot.slane %v398, 1
  %v400 = vadd.f32 %v398, %v399
  %v401 = vadd.f32 %v347, %v400
  %402 = vst.msk [vmem:[%s4] sm:$0x1] %vm345, %v401
  // Predicated region
  $region14: #{basic_block_forward.3} parent=0 // pred_check
    _
  $region15: #{basic_block_forward.3} parent=0 // pred_check_branch
    %404 = sbr.rel (0) target = $region17
  $region16: #{basic_block_forward.3} parent=0 // pred_region
    _
  $region17: #{basic_block_forward.3} parent=0 // pred_fallthru
    _
  // Predicated region
  $region18: #{basic_block_forward.3} parent=0 // pred_check
    _
  $region19: #{basic_block_forward.3} parent=0 // pred_check_branch
    %406 = sbr.rel (0) target = $region21
  $region20: #{basic_block_forward.3} parent=0 // pred_region
    _
  $region21: #{basic_block_forward.3} parent=0 // pred_fallthru
    _
  // Predicated region
  $region22: #{basic_block_forward.3} parent=0 // pred_check
    _
  $region23: #{basic_block_forward.3} parent=0 // pred_check_branch
    %408 = sbr.rel (0) target = $region25
  $region24: #{basic_block_forward.3} parent=0 // pred_region
    _
  $region25: #{basic_block_forward.3} parent=0 // pred_fallthru
    _
  // Predicated region
  $region26: #{basic_block_forward.3} parent=0 // pred_check
    _
  $region27: #{basic_block_forward.3} parent=0 // pred_check_branch
    %410 = sbr.rel (0) target = $region29
  $region28: #{basic_block_forward.3} parent=0 // pred_region
    _
  $region29: #{basic_block_forward.3} parent=0 // pred_fallthru
    _
  // Predicated region
  $region30: #{basic_block_forward.3} parent=0 // pred_check
    _
  $region31: #{basic_block_forward.3} parent=0 // pred_check_branch
    %412 = sbr.rel (0) target = $region33
  $region32: #{basic_block_forward.3} parent=0 // pred_region
    _
  $region33: #{basic_block_forward.3} parent=0 // pred_fallthru
    _
  // Predicated region
  $region34: #{basic_block_forward.3} parent=0 // pred_check
    _
  $region35: #{basic_block_forward.3} parent=0 // pred_check_branch
    %414 = sbr.rel (0) target = $region37
  $region36: #{basic_block_forward.3} parent=0 // pred_region
    _
  $region37: #{basic_block_forward.3} parent=0 // pred_fallthru
    _

// kernel: basic_block_forward.5
$region0: #{basic_block_forward.5}
  #allocation0 [shape = 'u32[]', space=smem, size = 0x4, offset = 0x4, fixed_abs, tag = 'smem constant byte address 0x4 - core index']
  #allocation1 [shape = 'u32[144,128]{1,0:T(1,128)}', space=vmem, size = 0x12000, scoped, tag = 'internal scratch']
  %s0 = inlined_call_operand.vmem [shape: bf16[8,128], index: 0, kind: input, shape index: {}]
  %s1 = inlined_call_operand.vmem [shape: f32[1,128], index: 1, kind: input, shape index: {}]
  %s2 = inlined_call_operand.vmem [shape: f32[1,128], index: 2, kind: input, shape index: {}]
  %s3 = inlined_call_operand.vmem [shape: bf16[8,128], index: 3, kind: input, shape index: {}]
  %s4 = inlined_call_operand.vmem [shape: f32[8,128], index: 4, kind: output, shape index: {}]
  %s5 = sld [smem:[#allocation0]]
  $region26: #{basic_block_forward.5} parent=0
    _
  %s7 = ssub.s32 1, %s5
  %s8 = scalar_select 0, %s7, %s5
  // Predicated region
  $region2: #{basic_block_forward.5} parent=0 // pred_check
    _
  $region3: #{basic_block_forward.5} parent=0 // pred_check_branch
    %10 = sbr.rel (0) target = $region5
  $region4: #{basic_block_forward.5} parent=0 // pred_region
    _
  $region5: #{basic_block_forward.5} parent=0 // pred_fallthru
    _
  // Predicated region
  $region6: #{basic_block_forward.5} parent=0 // pred_check
    _
  $region7: #{basic_block_forward.5} parent=0 // pred_check_branch
    %12 = sbr.rel (0) target = $region9
  $region8: #{basic_block_forward.5} parent=0 // pred_region
    _
  $region9: #{basic_block_forward.5} parent=0 // pred_fallthru
    _
  // Predicated region
  $region10: #{basic_block_forward.5} parent=0 // pred_check
    _
  $region11: #{basic_block_forward.5} parent=0 // pred_check_branch
    %14 = sbr.rel (0) target = $region13
  $region12: #{basic_block_forward.5} parent=0 // pred_region
    _
  $region13: #{basic_block_forward.5} parent=0 // pred_fallthru
    _
  // Predicated region
  $region14: #{basic_block_forward.5} parent=0 // pred_check
    _
  $region15: #{basic_block_forward.5} parent=0 // pred_check_branch
    %16 = sbr.rel (0) target = $region17
  $region16: #{basic_block_forward.5} parent=0 // pred_region
    _
  $region17: #{basic_block_forward.5} parent=0 // pred_fallthru
    _
  %v17 = vld [vmem:[%s0] sm:$0xf]
  %v18 = vunpack.c.l.bf16 %v17
  %v19 = vld [vmem:[%s3] sm:$0xf]
  %v20 = vunpack.c.l.bf16 %v19
  %v21 = vld [vmem:[%s1] sm:$0x1]
  %v23 = vlaneseq
  %v24 = vshrl.u32 %v23, 7
  %v25 = vsub.s32 0, %v24
  %v26 = vrot.slane %v21, %v25
  %v28 = vmul.f32 %v18, %v26
  %v29 = vld [vmem:[%s2] sm:$0x1]
  %v31 = vlaneseq
  %v32 = vshrl.u32 %v31, 7
  %v33 = vsub.s32 0, %v32
  %v34 = vrot.slane %v29, %v33
  %v36 = vadd.f32 %v28, %v34
  %v37 = vadd.f32 %v36, %v20
  %v38 = vmax.f32 %v37, 0.0
  %39 = vst [vmem:[%s4] sm:$0xff] %v38
  // Predicated region
  $region18: #{basic_block_forward.5} parent=0 // pred_check
    _
  $region19: #{basic_block_forward.5} parent=0 // pred_check_branch
    %41 = sbr.rel (0) target = $region21
  $region20: #{basic_block_forward.5} parent=0 // pred_region
    _
  $region21: #{basic_block_forward.5} parent=0 // pred_fallthru
    _
  // Predicated region
  $region22: #{basic_block_forward.5} parent=0 // pred_check
    _
  $region23: #{basic_block_forward.5} parent=0 // pred_check_branch
    %43 = sbr.rel (0) target = $region25
  $region24: #{basic_block_forward.5} parent=0 // pred_region
    _
  $region25: #{basic_block_forward.5} parent=0 // pred_fallthru
    _

// kernel: basic_block_forward.4
$region0: #{basic_block_forward.4}
  #allocation0 [shape = 'u32[]', space=smem, size = 0x4, offset = 0x4, fixed_abs, tag = 'smem constant byte address 0x4 - core index']
  #allocation1 [shape = 'u32[144,128]{1,0:T(1,128)}', space=vmem, size = 0x12000, scoped, tag = 'internal scratch']
  #allocation2 [shape = 'f32[160,8]{1,0:T(8,128)}', space=vmem, size = 0x14000, scoped, tag = 'scratch operand']
  #allocation3 [shape = 'f32[128,8]{1,0:T(8,128)}', space=vmem, size = 0x10000, scoped, tag = 'scratch operand']
  %s0 = inlined_call_operand.vmem [shape: bf16[128,8], index: 0, kind: input, shape index: {}]
  %s1 = inlined_call_operand.vmem [shape: f32[1,8], index: 1, kind: input, shape index: {}]
  %s2 = inlined_call_operand.vmem [shape: f32[1,8], index: 2, kind: input, shape index: {}]
  %s3 = inlined_call_operand.vmem [shape: bf16[9,8,8], index: 3, kind: input, shape index: {}]
  %s4 = inlined_call_operand.vmem [shape: s32[128,1], index: 4, kind: input, shape index: {}]
  %s5 = inlined_call_operand.vmem [shape: s32[128,1], index: 5, kind: input, shape index: {}]
  %s6 = inlined_call_operand.vmem [shape: bf16[128,8], index: 6, kind: output, shape index: {0}]
  %s7 = inlined_call_operand.vmem [shape: f32[1,8], index: 7, kind: output, shape index: {1}]
  %s8 = inlined_call_operand.vmem [shape: f32[1,8], index: 8, kind: output, shape index: {2}]
  %9 = xla_tuple %s6, %s7, %s8
  %s10 = sld [smem:[#allocation0]]
  $region54: #{basic_block_forward.4} parent=0
    _
  %s12 = ssub.s32 1, %s10
  %s13 = scalar_select 0, %s12, %s10
  // Predicated region
  $region2: #{basic_block_forward.4} parent=0 // pred_check
    _
  $region3: #{basic_block_forward.4} parent=0 // pred_check_branch
    %15 = sbr.rel (0) target = $region5
  $region4: #{basic_block_forward.4} parent=0 // pred_region
    _
  $region5: #{basic_block_forward.4} parent=0 // pred_fallthru
    _
  // Predicated region
  $region6: #{basic_block_forward.4} parent=0 // pred_check
    _
  $region7: #{basic_block_forward.4} parent=0 // pred_check_branch
    %17 = sbr.rel (0) target = $region9
  $region8: #{basic_block_forward.4} parent=0 // pred_region
    _
  $region9: #{basic_block_forward.4} parent=0 // pred_fallthru
    _
  // Predicated region
  $region10: #{basic_block_forward.4} parent=0 // pred_check
    _
  $region11: #{basic_block_forward.4} parent=0 // pred_check_branch
    %19 = sbr.rel (0) target = $region13
  $region12: #{basic_block_forward.4} parent=0 // pred_region
    _
  $region13: #{basic_block_forward.4} parent=0 // pred_fallthru
    _
  // Predicated region
  $region14: #{basic_block_forward.4} parent=0 // pred_check
    _
  $region15: #{basic_block_forward.4} parent=0 // pred_check_branch
    %21 = sbr.rel (0) target = $region17
  $region16: #{basic_block_forward.4} parent=0 // pred_region
    _
  $region17: #{basic_block_forward.4} parent=0 // pred_fallthru
    _
  // Predicated region
  $region18: #{basic_block_forward.4} parent=0 // pred_check
    _
  $region19: #{basic_block_forward.4} parent=0 // pred_check_branch
    %23 = sbr.rel (0) target = $region21
  $region20: #{basic_block_forward.4} parent=0 // pred_region
    _
  $region21: #{basic_block_forward.4} parent=0 // pred_fallthru
    _
  // Predicated region
  $region22: #{basic_block_forward.4} parent=0 // pred_check
    _
  $region23: #{basic_block_forward.4} parent=0 // pred_check_branch
    %25 = sbr.rel (0) target = $region25
  $region24: #{basic_block_forward.4} parent=0 // pred_region
    _
  $region25: #{basic_block_forward.4} parent=0 // pred_fallthru
    _
  %p27 = scmp.eq.s32.totalorder 0, 0
  // Predicated region
  $region26: #{basic_block_forward.4} parent=0 // pred_check
    %p28 = pneg %p27
  $region27: #{basic_block_forward.4} parent=0 // pred_check_branch
    %30 = sbr.rel (%p28) target = $region29
  $region28: #{basic_block_forward.4} parent=0 // pred_region
    %vm31 = vcmask 57344
    %32 = vst.msk [vmem:[%s7] sm:$0x1] %vm31, 0.0
    %33 = vst.msk [vmem:[%s8] sm:$0x1] %vm31, 0.0
    %vm34 = vcmask 64512
    %35 = vst.msk [vmem:[#allocation2] sm:$0xff] %vm34, 0.0
    %36 = vst.msk [vmem:[#allocation2 + $0x8] sm:$0xff] %vm34, 0.0
    %37 = vst.msk [vmem:[#allocation2 + $0x90] sm:$0xff] %vm34, 0.0
    %38 = vst.msk [vmem:[#allocation2 + $0x98] sm:$0xff] %vm34, 0.0
  $region29: #{basic_block_forward.4} parent=0 // pred_fallthru
    _
  %v39 = vld [vmem:[%s0] sm:$0xf]
  %v40 = vld [vmem:[%s0 + $0x4] sm:$0xf]
  %v41 = vld [vmem:[%s0 + $0x8] sm:$0xf]
  %v42 = vld [vmem:[%s0 + $0xc] sm:$0xf]
  %v43 = vld [vmem:[%s0 + $0x10] sm:$0xf]
  %v44 = vld [vmem:[%s0 + $0x14] sm:$0xf]
  %v45 = vld [vmem:[%s0 + $0x18] sm:$0xf]
  %v46 = vld [vmem:[%s0 + $0x1c] sm:$0xf]
  %v47 = vld [vmem:[%s0 + $0x20] sm:$0xf]
  %v48 = vld [vmem:[%s0 + $0x24] sm:$0xf]
  %v49 = vld [vmem:[%s0 + $0x28] sm:$0xf]
  %v50 = vld [vmem:[%s0 + $0x2c] sm:$0xf]
  %v51 = vld [vmem:[%s0 + $0x30] sm:$0xf]
  %v52 = vld [vmem:[%s0 + $0x34] sm:$0xf]
  %v53 = vld [vmem:[%s0 + $0x38] sm:$0xf]
  %v54 = vld [vmem:[%s0 + $0x3c] sm:$0xf]
  %v55 = vunpack.c.l.bf16 %v39
  %v56 = vunpack.c.l.bf16 %v40
  %v57 = vunpack.c.l.bf16 %v41
  %v58 = vunpack.c.l.bf16 %v42
  %v59 = vunpack.c.l.bf16 %v43
  %v60 = vunpack.c.l.bf16 %v44
  %v61 = vunpack.c.l.bf16 %v45
  %v62 = vunpack.c.l.bf16 %v46
  %v63 = vunpack.c.l.bf16 %v47
  %v64 = vunpack.c.l.bf16 %v48
  %v65 = vunpack.c.l.bf16 %v49
  %v66 = vunpack.c.l.bf16 %v50
  %v67 = vunpack.c.l.bf16 %v51
  %v68 = vunpack.c.l.bf16 %v52
  %v69 = vunpack.c.l.bf16 %v53
  %v70 = vunpack.c.l.bf16 %v54
  %v71 = vld [vmem:[%s1] sm:$0x1]
  %v73 = vlaneseq
  %v74 = vshrl.u32 %v73, 7
  %v75 = vsub.s32 0, %v74
  %v76 = vrot.slane %v71, %v75
  %v78 = vmul.f32 %v55, %v76
  %v79 = vmul.f32 %v56, %v76
  %v80 = vmul.f32 %v57, %v76
  %v81 = vmul.f32 %v58, %v76
  %v82 = vmul.f32 %v59, %v76
  %v83 = vmul.f32 %v60, %v76
  %v84 = vmul.f32 %v61, %v76
  %v85 = vmul.f32 %v62, %v76
  %v86 = vmul.f32 %v63, %v76
  %v87 = vmul.f32 %v64, %v76
  %v88 = vmul.f32 %v65, %v76
  %v89 = vmul.f32 %v66, %v76
  %v90 = vmul.f32 %v67, %v76
  %v91 = vmul.f32 %v68, %v76
  %v92 = vmul.f32 %v69, %v76
  %v93 = vmul.f32 %v70, %v76
  %v94 = vld [vmem:[%s2] sm:$0x1]
  %v96 = vlaneseq
  %v97 = vshrl.u32 %v96, 7
  %v98 = vsub.s32 0, %v97
  %v99 = vrot.slane %v94, %v98
  %v101 = vadd.f32 %v78, %v99
  %v102 = vadd.f32 %v79, %v99
  %v103 = vadd.f32 %v80, %v99
  %v104 = vadd.f32 %v81, %v99
  %v105 = vadd.f32 %v82, %v99
  %v106 = vadd.f32 %v83, %v99
  %v107 = vadd.f32 %v84, %v99
  %v108 = vadd.f32 %v85, %v99
  %v109 = vadd.f32 %v86, %v99
  %v110 = vadd.f32 %v87, %v99
  %v111 = vadd.f32 %v88, %v99
  %v112 = vadd.f32 %v89, %v99
  %v113 = vadd.f32 %v90, %v99
  %v114 = vadd.f32 %v91, %v99
  %v115 = vadd.f32 %v92, %v99
  %v116 = vadd.f32 %v93, %v99
  %v117 = vmax.f32 %v101, 0.0
  %v118 = vmax.f32 %v102, 0.0
  %v119 = vmax.f32 %v103, 0.0
  %v120 = vmax.f32 %v104, 0.0
  %v121 = vmax.f32 %v105, 0.0
  %v122 = vmax.f32 %v106, 0.0
  %v123 = vmax.f32 %v107, 0.0
  %v124 = vmax.f32 %v108, 0.0
  %v125 = vmax.f32 %v109, 0.0
  %v126 = vmax.f32 %v110, 0.0
  %v127 = vmax.f32 %v111, 0.0
  %v128 = vmax.f32 %v112, 0.0
  %v129 = vmax.f32 %v113, 0.0
  %v130 = vmax.f32 %v114, 0.0
  %v131 = vmax.f32 %v115, 0.0
  %v132 = vmax.f32 %v116, 0.0
  %vm133 = vcmask 64512
  %134 = vst.msk [vmem:[#allocation2 + $0x10] sm:$0xff] %vm133, %v117
  %135 = vst.msk [vmem:[#allocation2 + $0x18] sm:$0xff] %vm133, %v118
  %136 = vst.msk [vmem:[#allocation2 + $0x20] sm:$0xff] %vm133, %v119
  %137 = vst.msk [vmem:[#allocation2 + $0x28] sm:$0xff] %vm133, %v120
  %138 = vst.msk [vmem:[#allocation2 + $0x30] sm:$0xff] %vm133, %v121
  %139 = vst.msk [vmem:[#allocation2 + $0x38] sm:$0xff] %vm133, %v122
  %140 = vst.msk [vmem:[#allocation2 + $0x40] sm:$0xff] %vm133, %v123
  %141 = vst.msk [vmem:[#allocation2 + $0x48] sm:$0xff] %vm133, %v124
  %142 = vst.msk [vmem:[#allocation2 + $0x50] sm:$0xff] %vm133, %v125
  %143 = vst.msk [vmem:[#allocation2 + $0x58] sm:$0xff] %vm133, %v126
  %144 = vst.msk [vmem:[#allocation2 + $0x60] sm:$0xff] %vm133, %v127
  %145 = vst.msk [vmem:[#allocation2 + $0x68] sm:$0xff] %vm133, %v128
  %146 = vst.msk [vmem:[#allocation2 + $0x70] sm:$0xff] %vm133, %v129
  %147 = vst.msk [vmem:[#allocation2 + $0x78] sm:$0xff] %vm133, %v130
  %148 = vst.msk [vmem:[#allocation2 + $0x80] sm:$0xff] %vm133, %v131
  %149 = vst.msk [vmem:[#allocation2 + $0x88] sm:$0xff] %vm133, %v132
  %v150 = vld [vmem:[%s4] sm:$0xff]
  %v151 = vld [vmem:[%s4 + $0x8] sm:$0xff]
  %v152 = vld [vmem:[%s4 + $0x10] sm:$0xff]
  %v153 = vld [vmem:[%s4 + $0x18] sm:$0xff]
  %v154 = vld [vmem:[%s4 + $0x20] sm:$0xff]
  %v155 = vld [vmem:[%s4 + $0x28] sm:$0xff]
  %v156 = vld [vmem:[%s4 + $0x30] sm:$0xff]
  %v157 = vld [vmem:[%s4 + $0x38] sm:$0xff]
  %v158 = vld [vmem:[%s4 + $0x40] sm:$0xff]
  %v159 = vld [vmem:[%s4 + $0x48] sm:$0xff]
  %v160 = vld [vmem:[%s4 + $0x50] sm:$0xff]
  %v161 = vld [vmem:[%s4 + $0x58] sm:$0xff]
  %v162 = vld [vmem:[%s4 + $0x60] sm:$0xff]
  %v163 = vld [vmem:[%s4 + $0x68] sm:$0xff]
  %v164 = vld [vmem:[%s4 + $0x70] sm:$0xff]
  %v165 = vld [vmem:[%s4 + $0x78] sm:$0xff]
  %v166 = vld [vmem:[%s5] sm:$0xff]
  %v167 = vld [vmem:[%s5 + $0x8] sm:$0xff]
  %v168 = vld [vmem:[%s5 + $0x10] sm:$0xff]
  %v169 = vld [vmem:[%s5 + $0x18] sm:$0xff]
  %v170 = vld [vmem:[%s5 + $0x20] sm:$0xff]
  %v171 = vld [vmem:[%s5 + $0x28] sm:$0xff]
  %v172 = vld [vmem:[%s5 + $0x30] sm:$0xff]
  %v173 = vld [vmem:[%s5 + $0x38] sm:$0xff]
  %v174 = vld [vmem:[%s5 + $0x40] sm:$0xff]
  %v175 = vld [vmem:[%s5 + $0x48] sm:$0xff]
  %v176 = vld [vmem:[%s5 + $0x50] sm:$0xff]
  %v177 = vld [vmem:[%s5 + $0x58] sm:$0xff]
  %v178 = vld [vmem:[%s5 + $0x60] sm:$0xff]
  %v179 = vld [vmem:[%s5 + $0x68] sm:$0xff]
  %v180 = vld [vmem:[%s5 + $0x70] sm:$0xff]
  %v181 = vld [vmem:[%s5 + $0x78] sm:$0xff]
  %182 = vst.msk [vmem:[#allocation3] sm:$0xff] %vm133, 0.0
  %183 = vst.msk [vmem:[#allocation3 + $0x8] sm:$0xff] %vm133, 0.0
  %184 = vst.msk [vmem:[#allocation3 + $0x10] sm:$0xff] %vm133, 0.0
  %185 = vst.msk [vmem:[#allocation3 + $0x18] sm:$0xff] %vm133, 0.0
  %186 = vst.msk [vmem:[#allocation3 + $0x20] sm:$0xff] %vm133, 0.0
  %187 = vst.msk [vmem:[#allocation3 + $0x28] sm:$0xff] %vm133, 0.0
  %188 = vst.msk [vmem:[#allocation3 + $0x30] sm:$0xff] %vm133, 0.0
  %189 = vst.msk [vmem:[#allocation3 + $0x38] sm:$0xff] %vm133, 0.0
  %190 = vst.msk [vmem:[#allocation3 + $0x40] sm:$0xff] %vm133, 0.0
  %191 = vst.msk [vmem:[#allocation3 + $0x48] sm:$0xff] %vm133, 0.0
  %192 = vst.msk [vmem:[#allocation3 + $0x50] sm:$0xff] %vm133, 0.0
  %193 = vst.msk [vmem:[#allocation3 + $0x58] sm:$0xff] %vm133, 0.0
  %194 = vst.msk [vmem:[#allocation3 + $0x60] sm:$0xff] %vm133, 0.0
  %195 = vst.msk [vmem:[#allocation3 + $0x68] sm:$0xff] %vm133, 0.0
  %196 = vst.msk [vmem:[#allocation3 + $0x70] sm:$0xff] %vm133, 0.0
  %197 = vst.msk [vmem:[#allocation3 + $0x78] sm:$0xff] %vm133, 0.0
  %v198 = vld [vmem:[#allocation2 + $0x7] sm:$0xff]
  %v199 = vld [vmem:[#allocation2 + $0xf] sm:$0xff]
  %v200 = vld [vmem:[#allocation2 + $0x17] sm:$0xff]
  %v201 = vld [vmem:[#allocation2 + $0x1f] sm:$0xff]
  %v202 = vld [vmem:[#allocation2 + $0x27] sm:$0xff]
  %v203 = vld [vmem:[#allocation2 + $0x2f] sm:$0xff]
  %v204 = vld [vmem:[#allocation2 + $0x37] sm:$0xff]
  %v205 = vld [vmem:[#allocation2 + $0x3f] sm:$0xff]
  %v206 = vld [vmem:[#allocation2 + $0x47] sm:$0xff]
  %v207 = vld [vmem:[#allocation2 + $0x4f] sm:$0xff]
  %v208 = vld [vmem:[#allocation2 + $0x57] sm:$0xff]
  %v209 = vld [vmem:[#allocation2 + $0x5f] sm:$0xff]
  %v210 = vld [vmem:[#allocation2 + $0x67] sm:$0xff]
  %v211 = vld [vmem:[#allocation2 + $0x6f] sm:$0xff]
  %v212 = vld [vmem:[#allocation2 + $0x77] sm:$0xff]
  %v213 = vld [vmem:[#allocation2 + $0x7f] sm:$0xff]
  %vm214 = vcmp.ge.s32.totalorder %v150, 1
  %vm215 = vcmp.ge.s32.totalorder %v151, 1
  %vm216 = vcmp.ge.s32.totalorder %v152, 1
  %vm217 = vcmp.ge.s32.totalorder %v153, 1
  %vm218 = vcmp.ge.s32.totalorder %v154, 1
  %vm219 = vcmp.ge.s32.totalorder %v155, 1
  %vm220 = vcmp.ge.s32.totalorder %v156, 1
  %vm221 = vcmp.ge.s32.totalorder %v157, 1
  %vm222 = vcmp.ge.s32.totalorder %v158, 1
  %vm223 = vcmp.ge.s32.totalorder %v159, 1
  %vm224 = vcmp.ge.s32.totalorder %v160, 1
  %vm225 = vcmp.ge.s32.totalorder %v161, 1
  %vm226 = vcmp.ge.s32.totalorder %v162, 1
  %vm227 = vcmp.ge.s32.totalorder %v163, 1
  %vm228 = vcmp.ge.s32.totalorder %v164, 1
  %vm229 = vcmp.ge.s32.totalorder %v165, 1
  %vm230 = vcmp.ge.s32.totalorder %v166, 1
  %vm231 = vcmp.ge.s32.totalorder %v167, 1
  %vm232 = vcmp.ge.s32.totalorder %v168, 1
  %vm233 = vcmp.ge.s32.totalorder %v169, 1
  %vm234 = vcmp.ge.s32.totalorder %v170, 1
  %vm235 = vcmp.ge.s32.totalorder %v171, 1
  %vm236 = vcmp.ge.s32.totalorder %v172, 1
  %vm237 = vcmp.ge.s32.totalorder %v173, 1
  %vm238 = vcmp.ge.s32.totalorder %v174, 1
  %vm239 = vcmp.ge.s32.totalorder %v175, 1
  %vm240 = vcmp.ge.s32.totalorder %v176, 1
  %vm241 = vcmp.ge.s32.totalorder %v177, 1
  %vm242 = vcmp.ge.s32.totalorder %v178, 1
  %vm243 = vcmp.ge.s32.totalorder %v179, 1
  %vm244 = vcmp.ge.s32.totalorder %v180, 1
  %vm245 = vcmp.ge.s32.totalorder %v181, 1
  %vm246 = vmand %vm214, %vm230
  %vm247 = vmand %vm215, %vm231
  %vm248 = vmand %vm216, %vm232
  %vm249 = vmand %vm217, %vm233
  %vm250 = vmand %vm218, %vm234
  %vm251 = vmand %vm219, %vm235
  %vm252 = vmand %vm220, %vm236
  %vm253 = vmand %vm221, %vm237
  %vm254 = vmand %vm222, %vm238
  %vm255 = vmand %vm223, %vm239
  %vm256 = vmand %vm224, %vm240
  %vm257 = vmand %vm225, %vm241
  %vm258 = vmand %vm226, %vm242
  %vm259 = vmand %vm227, %vm243
  %vm260 = vmand %vm228, %vm244
  %vm261 = vmand %vm229, %vm245
  %v262 = vsel %vm246, 1, 0
  %v263 = vsel %vm247, 1, 0
  %v264 = vsel %vm248, 1, 0
  %v265 = vsel %vm249, 1, 0
  %v266 = vsel %vm250, 1, 0
  %v267 = vsel %vm251, 1, 0
  %v268 = vsel %vm252, 1, 0
  %v269 = vsel %vm253, 1, 0
  %v270 = vsel %vm254, 1, 0
  %v271 = vsel %vm255, 1, 0
  %v272 = vsel %vm256, 1, 0
  %v273 = vsel %vm257, 1, 0
  %v274 = vsel %vm258, 1, 0
  %v275 = vsel %vm259, 1, 0
  %v276 = vsel %vm260, 1, 0
  %v277 = vsel %vm261, 1, 0
  %278 = vset.pattern.permute.xlu0 0
  %279 = vperm.xlu0 %278, %v262
  %v280 = vpop.permute.xlu0 %279
  %281 = vset.pattern.permute.xlu0 0
  %282 = vperm.xlu0 %281, %v263
  %v283 = vpop.permute.xlu0 %282
  %284 = vset.pattern.permute.xlu0 0
  %285 = vperm.xlu0 %284, %v264
  %v286 = vpop.permute.xlu0 %285
  %287 = vset.pattern.permute.xlu0 0
  %288 = vperm.xlu0 %287, %v265
  %v289 = vpop.permute.xlu0 %288
  %290 = vset.pattern.permute.xlu0 0
  %291 = vperm.xlu0 %290, %v266
  %v292 = vpop.permute.xlu0 %291
  %293 = vset.pattern.permute.xlu0 0
  %294 = vperm.xlu0 %293, %v267
  %v295 = vpop.permute.xlu0 %294
  %296 = vset.pattern.permute.xlu0 0
  %297 = vperm.xlu0 %296, %v268
  %v298 = vpop.permute.xlu0 %297
  %299 = vset.pattern.permute.xlu0 0
  %300 = vperm.xlu0 %299, %v269
  %v301 = vpop.permute.xlu0 %300
  %302 = vset.pattern.permute.xlu0 0
  %303 = vperm.xlu0 %302, %v270
  %v304 = vpop.permute.xlu0 %303
  %305 = vset.pattern.permute.xlu0 0
  %306 = vperm.xlu0 %305, %v271
  %v307 = vpop.permute.xlu0 %306
  %308 = vset.pattern.permute.xlu0 0
  %309 = vperm.xlu0 %308, %v272
  %v310 = vpop.permute.xlu0 %309
  %311 = vset.pattern.permute.xlu0 0
  %312 = vperm.xlu0 %311, %v273
  %v313 = vpop.permute.xlu0 %312
  %314 = vset.pattern.permute.xlu0 0
  %315 = vperm.xlu0 %314, %v274
  %v316 = vpop.permute.xlu0 %315
  %317 = vset.pattern.permute.xlu0 0
  %318 = vperm.xlu0 %317, %v275
  %v319 = vpop.permute.xlu0 %318
  %320 = vset.pattern.permute.xlu0 0
  %321 = vperm.xlu0 %320, %v276
  %v322 = vpop.permute.xlu0 %321
  %323 = vset.pattern.permute.xlu0 0
  %324 = vperm.xlu0 %323, %v277
  %v325 = vpop.permute.xlu0 %324
  %vm326 = vcmp.eq.s32.totalorder %v280, 1
  %vm327 = vcmp.eq.s32.totalorder %v283, 1
  %vm328 = vcmp.eq.s32.totalorder %v286, 1
  %vm329 = vcmp.eq.s32.totalorder %v289, 1
  %vm330 = vcmp.eq.s32.totalorder %v292, 1
  %vm331 = vcmp.eq.s32.totalorder %v295, 1
  %vm332 = vcmp.eq.s32.totalorder %v298, 1
  %vm333 = vcmp.eq.s32.totalorder %v301, 1
  %vm334 = vcmp.eq.s32.totalorder %v304, 1
  %vm335 = vcmp.eq.s32.totalorder %v307, 1
  %vm336 = vcmp.eq.s32.totalorder %v310, 1
  %vm337 = vcmp.eq.s32.totalorder %v313, 1
  %vm338 = vcmp.eq.s32.totalorder %v316, 1
  %vm339 = vcmp.eq.s32.totalorder %v319, 1
  %vm340 = vcmp.eq.s32.totalorder %v322, 1
  %vm341 = vcmp.eq.s32.totalorder %v325, 1
  %v342 = vsel %vm326, %v198, 0.0
  %v343 = vsel %vm327, %v199, 0.0
  %v344 = vsel %vm328, %v200, 0.0
  %v345 = vsel %vm329, %v201, 0.0
  %v346 = vsel %vm330, %v202, 0.0
  %v347 = vsel %vm331, %v203, 0.0
  %v348 = vsel %vm332, %v204, 0.0
  %v349 = vsel %vm333, %v205, 0.0
  %v350 = vsel %vm334, %v206, 0.0
  %v351 = vsel %vm335, %v207, 0.0
  %v352 = vsel %vm336, %v208, 0.0
  %v353 = vsel %vm337, %v209, 0.0
  %v354 = vsel %vm338, %v210, 0.0
  %v355 = vsel %vm339, %v211, 0.0
  %v356 = vsel %vm340, %v212, 0.0
  %v357 = vsel %vm341, %v213, 0.0
  %v358 = vld [vmem:[#allocation3] sm:$0xff]
  %v359 = vld [vmem:[#allocation3 + $0x8] sm:$0xff]
  %v360 = vld [vmem:[#allocation3 + $0x10] sm:$0xff]
  %v361 = vld [vmem:[#allocation3 + $0x18] sm:$0xff]
  %v362 = vld [vmem:[#allocation3 + $0x20] sm:$0xff]
  %v363 = vld [vmem:[#allocation3 + $0x28] sm:$0xff]
  %v364 = vld [vmem:[#allocation3 + $0x30] sm:$0xff]
  %v365 = vld [vmem:[#allocation3 + $0x38] sm:$0xff]
  %v366 = vld [vmem:[#allocation3 + $0x40] sm:$0xff]
  %v367 = vld [vmem:[#allocation3 + $0x48] sm:$0xff]
  %v368 = vld [vmem:[#allocation3 + $0x50] sm:$0xff]
  %v369 = vld [vmem:[#allocation3 + $0x58] sm:$0xff]
  %v370 = vld [vmem:[#allocation3 + $0x60] sm:$0xff]
  %v371 = vld [vmem:[#allocation3 + $0x68] sm:$0xff]
  %v372 = vld [vmem:[#allocation3 + $0x70] sm:$0xff]
  %v373 = vld [vmem:[#allocation3 + $0x78] sm:$0xff]
  %v374 = vpack.c.bf16 %v343, %v342
  %v375 = vpack.c.bf16 %v345, %v344
  %v376 = vpack.c.bf16 %v347, %v346
  %v377 = vpack.c.bf16 %v349, %v348
  %v378 = vpack.c.bf16 %v351, %v350
  %v379 = vpack.c.bf16 %v353, %v352
  %v380 = vpack.c.bf16 %v355, %v354
  %v381 = vpack.c.bf16 %v357, %v356
  %v382 = vld [vmem:[%s3] sm:$0xf]
  %v384 = vsel %vm133, %v374, 0
  %v387 = vsel %vm133, %v375, 0
  %v390 = vsel %vm133, %v376, 0
  %v393 = vsel %vm133, %v377, 0
  %v396 = vsel %vm133, %v378, 0
  %v399 = vsel %vm133, %v379, 0
  %v402 = vsel %vm133, %v380, 0
  %v405 = vsel %vm133, %v381, 0
  %vm407 = vcmask 1043456
  %v409 = vsel %vm407, %v382, 0
  %411 = vmatprep.subr.bf16.mxu0 0
  %412 = vmatpush1.bf16.msra.mxu0 %v409
  %413 = vmatprep.subr.bf16.mxu0 0
  %414 = vmatpush1.bf16.msra.mxu0 0
  %415 = vmatprep.subr.bf16.mxu0 0
  %416 = vmatpush1.bf16.msra.mxu0 0
  %417 = vmatprep.subr.bf16.mxu0 0
  %418 = vmatpush1.bf16.msra.mxu0 0
  %419 = vmatprep.subr.bf16.mxu0 0
  %420 = vmatpush1.bf16.msra.mxu0 0
  %421 = vmatprep.subr.bf16.mxu0 0
  %422 = vmatpush1.bf16.msra.mxu0 0
  %423 = vmatprep.subr.bf16.mxu0 0
  %424 = vmatpush1.bf16.msra.mxu0 0
  %425 = vmatprep.subr.bf16.mxu0 0
  %426 = vmatpush1.bf16.msra.mxu0 0
  %427 = vmatprep.subr.bf16.mxu0 0
  %428 = vmatpush1.bf16.msra.mxu0 0
  %429 = vmatprep.subr.bf16.mxu0 0
  %430 = vmatpush1.bf16.msra.mxu0 0
  %431 = vmatprep.subr.bf16.mxu0 0
  %432 = vmatpush1.bf16.msra.mxu0 0
  %433 = vmatprep.subr.bf16.mxu0 0
  %434 = vmatpush1.bf16.msra.mxu0 0
  %435 = vmatprep.subr.bf16.mxu0 0
  %436 = vmatpush1.bf16.msra.mxu0 0
  %437 = vmatprep.subr.bf16.mxu0 0
  %438 = vmatpush1.bf16.msra.mxu0 0
  %439 = vmatprep.subr.bf16.mxu0 0
  %440 = vmatpush1.bf16.msra.mxu0 0
  %441 = vmatprep.subr.bf16.mxu0 0
  %442 = vmatpush1.bf16.msra.mxu0 0
  %443 = vmatprep.mubr.bf16.mxu0 0
  %444 = vmatmul.mubr.bf16.gmra.mrb[0].mxu0 %v384
  %v445 = vpop.f32.mrb[0].mxu0
  %v446 = vadd.f32 0.0, %v445
  %v447 = vpop.f32.mrb[0].mxu0
  %v448 = vpop.f32.mrb[0].mxu0
  %v449 = vadd.f32 0.0, %v448
  %v450 = vpop.f32.mrb[0].mxu0
  %451 = vmatprep.mubr.bf16.mxu0 0
  %452 = vmatmul.mubr.bf16.gmra.mrb[0].mxu0 %v387
  %v453 = vpop.f32.mrb[0].mxu0
  %v454 = vadd.f32 0.0, %v453
  %v455 = vpop.f32.mrb[0].mxu0
  %v456 = vpop.f32.mrb[0].mxu0
  %v457 = vadd.f32 0.0, %v456
  %v458 = vpop.f32.mrb[0].mxu0
  %459 = vmatprep.mubr.bf16.mxu0 0
  %460 = vmatmul.mubr.bf16.gmra.mrb[0].mxu0 %v390
  %v461 = vpop.f32.mrb[0].mxu0
  %v462 = vadd.f32 0.0, %v461
  %v463 = vpop.f32.mrb[0].mxu0
  %v464 = vpop.f32.mrb[0].mxu0
  %v465 = vadd.f32 0.0, %v464
  %v466 = vpop.f32.mrb[0].mxu0
  %467 = vmatprep.mubr.bf16.mxu0 0
  %468 = vmatmul.mubr.bf16.gmra.mrb[0].mxu0 %v393
  %v469 = vpop.f32.mrb[0].mxu0
  %v470 = vadd.f32 0.0, %v469
  %v471 = vpop.f32.mrb[0].mxu0
  %v472 = vpop.f32.mrb[0].mxu0
  %v473 = vadd.f32 0.0, %v472
  %v474 = vpop.f32.mrb[0].mxu0
  %475 = vmatprep.mubr.bf16.mxu0 0
  %476 = vmatmul.mubr.bf16.gmra.mrb[0].mxu0 %v396
  %v477 = vpop.f32.mrb[0].mxu0
  %v478 = vadd.f32 0.0, %v477
  %v479 = vpop.f32.mrb[0].mxu0
  %v480 = vpop.f32.mrb[0].mxu0
  %v481 = vadd.f32 0.0, %v480
  %v482 = vpop.f32.mrb[0].mxu0
  %483 = vmatprep.mubr.bf16.mxu0 0
  %484 = vmatmul.mubr.bf16.gmra.mrb[0].mxu0 %v399
  %v485 = vpop.f32.mrb[0].mxu0
  %v486 = vadd.f32 0.0, %v485
  %v487 = vpop.f32.mrb[0].mxu0
  %v488 = vpop.f32.mrb[0].mxu0
  %v489 = vadd.f32 0.0, %v488
  %v490 = vpop.f32.mrb[0].mxu0
  %491 = vmatprep.mubr.bf16.mxu0 0
  %492 = vmatmul.mubr.bf16.gmra.mrb[0].mxu0 %v402
  %v493 = vpop.f32.mrb[0].mxu0
  %v494 = vadd.f32 0.0, %v493
  %v495 = vpop.f32.mrb[0].mxu0
  %v496 = vpop.f32.mrb[0].mxu0
  %v497 = vadd.f32 0.0, %v496
  %v498 = vpop.f32.mrb[0].mxu0
  %499 = vmatprep.mubr.bf16.mxu0 0
  %500 = vmatmul.mubr.bf16.gmra.mrb[0].mxu0 %v405
  %v501 = vpop.f32.mrb[0].mxu0
  %v502 = vadd.f32 0.0, %v501
  %v503 = vpop.f32.mrb[0].mxu0
  %v504 = vpop.f32.mrb[0].mxu0
  %v505 = vadd.f32 0.0, %v504
  %v506 = vpop.f32.mrb[0].mxu0
  %507 = vdwg.mxu0
  %v508 = vadd.f32 %v358, %v446
  %v509 = vadd.f32 %v359, %v449
  %v510 = vadd.f32 %v360, %v454
  %v511 = vadd.f32 %v361, %v457
  %v512 = vadd.f32 %v362, %v462
  %v513 = vadd.f32 %v363, %v465
  %v514 = vadd.f32 %v364, %v470
  %v515 = vadd.f32 %v365, %v473
  %v516 = vadd.f32 %v366, %v478
  %v517 = vadd.f32 %v367, %v481
  %v518 = vadd.f32 %v368, %v486
  %v519 = vadd.f32 %v369, %v489
  %v520 = vadd.f32 %v370, %v494
  %v521 = vadd.f32 %v371, %v497
  %v522 = vadd.f32 %v372, %v502
  %v523 = vadd.f32 %v373, %v505
  %524 = vst.msk [vmem:[#allocation3] sm:$0xff] %vm133, %v508
  %525 = vst.msk [vmem:[#allocation3 + $0x8] sm:$0xff] %vm133, %v509
  %526 = vst.msk [vmem:[#allocation3 + $0x10] sm:$0xff] %vm133, %v510
  %527 = vst.msk [vmem:[#allocation3 + $0x18] sm:$0xff] %vm133, %v511
  %528 = vst.msk [vmem:[#allocation3 + $0x20] sm:$0xff] %vm133, %v512
  %529 = vst.msk [vmem:[#allocation3 + $0x28] sm:$0xff] %vm133, %v513
  %530 = vst.msk [vmem:[#allocation3 + $0x30] sm:$0xff] %vm133, %v514
  %531 = vst.msk [vmem:[#allocation3 + $0x38] sm:$0xff] %vm133, %v515
  %532 = vst.msk [vmem:[#allocation3 + $0x40] sm:$0xff] %vm133, %v516
  %533 = vst.msk [vmem:[#allocation3 + $0x48] sm:$0xff] %vm133, %v517
  %534 = vst.msk [vmem:[#allocation3 + $0x50] sm:$0xff] %vm133, %v518
  %535 = vst.msk [vmem:[#allocation3 + $0x58] sm:$0xff] %vm133, %v519
  %536 = vst.msk [vmem:[#allocation3 + $0x60] sm:$0xff] %vm133, %v520
  %537 = vst.msk [vmem:[#allocation3 + $0x68] sm:$0xff] %vm133, %v521
  %538 = vst.msk [vmem:[#allocation3 + $0x70] sm:$0xff] %vm133, %v522
  %539 = vst.msk [vmem:[#allocation3 + $0x78] sm:$0xff] %vm133, %v523
  %v540 = vld [vmem:[#allocation2 + $0x8] sm:$0xff]
  %v541 = vld [vmem:[#allocation2 + $0x10] sm:$0xff]
  %v542 = vld [vmem:[#allocation2 + $0x18] sm:$0xff]
  %v543 = vld [vmem:[#allocation2 + $0x20] sm:$0xff]
  %v544 = vld [vmem:[#allocation2 + $0x28] sm:$0xff]
  %v545 = vld [vmem:[#allocation2 + $0x30] sm:$0xff]
  %v546 = vld [vmem:[#allocation2 + $0x38] sm:$0xff]
  %v547 = vld [vmem:[#allocation2 + $0x40] sm:$0xff]
  %v548 = vld [vmem:[#allocation2 + $0x48] sm:$0xff]
  %v549 = vld [vmem:[#allocation2 + $0x50] sm:$0xff]
  %v550 = vld [vmem:[#allocation2 + $0x58] sm:$0xff]
  %v551 = vld [vmem:[#allocation2 + $0x60] sm:$0xff]
  %v552 = vld [vmem:[#allocation2 + $0x68] sm:$0xff]
  %v553 = vld [vmem:[#allocation2 + $0x70] sm:$0xff]
  %v554 = vld [vmem:[#allocation2 + $0x78] sm:$0xff]
  %v555 = vld [vmem:[#allocation2 + $0x80] sm:$0xff]
  %v556 = vsel %vm214, 1, 0
  %v557 = vsel %vm215, 1, 0
  %v558 = vsel %vm216, 1, 0
  %v559 = vsel %vm217, 1, 0
  %v560 = vsel %vm218, 1, 0
  %v561 = vsel %vm219, 1, 0
  %v562 = vsel %vm220, 1, 0
  %v563 = vsel %vm221, 1, 0
  %v564 = vsel %vm222, 1, 0
  %v565 = vsel %vm223, 1, 0
  %v566 = vsel %vm224, 1, 0
  %v567 = vsel %vm225, 1, 0
  %v568 = vsel %vm226, 1, 0
  %v569 = vsel %vm227, 1, 0
  %v570 = vsel %vm228, 1, 0
  %v571 = vsel %vm229, 1, 0
  %572 = vset.pattern.permute.xlu0 0
  %573 = vperm.xlu0 %572, %v556
  %v574 = vpop.permute.xlu0 %573
  %575 = vset.pattern.permute.xlu0 0
  %576 = vperm.xlu0 %575, %v557
  %v577 = vpop.permute.xlu0 %576
  %578 = vset.pattern.permute.xlu0 0
  %579 = vperm.xlu0 %578, %v558
  %v580 = vpop.permute.xlu0 %579
  %581 = vset.pattern.permute.xlu0 0
  %582 = vperm.xlu0 %581, %v559
  %v583 = vpop.permute.xlu0 %582
  %584 = vset.pattern.permute.xlu0 0
  %585 = vperm.xlu0 %584, %v560
  %v586 = vpop.permute.xlu0 %585
  %587 = vset.pattern.permute.xlu0 0
  %588 = vperm.xlu0 %587, %v561
  %v589 = vpop.permute.xlu0 %588
  %590 = vset.pattern.permute.xlu0 0
  %591 = vperm.xlu0 %590, %v562
  %v592 = vpop.permute.xlu0 %591
  %593 = vset.pattern.permute.xlu0 0
  %594 = vperm.xlu0 %593, %v563
  %v595 = vpop.permute.xlu0 %594
  %596 = vset.pattern.permute.xlu0 0
  %597 = vperm.xlu0 %596, %v564
  %v598 = vpop.permute.xlu0 %597
  %599 = vset.pattern.permute.xlu0 0
  %600 = vperm.xlu0 %599, %v565
  %v601 = vpop.permute.xlu0 %600
  %602 = vset.pattern.permute.xlu0 0
  %603 = vperm.xlu0 %602, %v566
  %v604 = vpop.permute.xlu0 %603
  %605 = vset.pattern.permute.xlu0 0
  %606 = vperm.xlu0 %605, %v567
  %v607 = vpop.permute.xlu0 %606
  %608 = vset.pattern.permute.xlu0 0
  %609 = vperm.xlu0 %608, %v568
  %v610 = vpop.permute.xlu0 %609
  %611 = vset.pattern.permute.xlu0 0
  %612 = vperm.xlu0 %611, %v569
  %v613 = vpop.permute.xlu0 %612
  %614 = vset.pattern.permute.xlu0 0
  %615 = vperm.xlu0 %614, %v570
  %v616 = vpop.permute.xlu0 %615
  %617 = vset.pattern.permute.xlu0 0
  %618 = vperm.xlu0 %617, %v571
  %v619 = vpop.permute.xlu0 %618
  %vm620 = vcmp.eq.s32.totalorder %v574, 1
  %vm621 = vcmp.eq.s32.totalorder %v577, 1
  %vm622 = vcmp.eq.s32.totalorder %v580, 1
  %vm623 = vcmp.eq.s32.totalorder %v583, 1
  %vm624 = vcmp.eq.s32.totalorder %v586, 1
  %vm625 = vcmp.eq.s32.totalorder %v589, 1
  %vm626 = vcmp.eq.s32.totalorder %v592, 1
  %vm627 = vcmp.eq.s32.totalorder %v595, 1
  %vm628 = vcmp.eq.s32.totalorder %v598, 1
  %vm629 = vcmp.eq.s32.totalorder %v601, 1
  %vm630 = vcmp.eq.s32.totalorder %v604, 1
  %vm631 = vcmp.eq.s32.totalorder %v607, 1
  %vm632 = vcmp.eq.s32.totalorder %v610, 1
  %vm633 = vcmp.eq.s32.totalorder %v613, 1
  %vm634 = vcmp.eq.s32.totalorder %v616, 1
  %vm635 = vcmp.eq.s32.totalorder %v619, 1
  %v636 = vsel %vm620, %v540, 0.0
  %v637 = vsel %vm621, %v541, 0.0
  %v638 = vsel %vm622, %v542, 0.0
  %v639 = vsel %vm623, %v543, 0.0
  %v640 = vsel %vm624, %v544, 0.0
  %v641 = vsel %vm625, %v545, 0.0
  %v642 = vsel %vm626, %v546, 0.0
  %v643 = vsel %vm627, %v547, 0.0
  %v644 = vsel %vm628, %v548, 0.0
  %v645 = vsel %vm629, %v549, 0.0
  %v646 = vsel %vm630, %v550, 0.0
  %v647 = vsel %vm631, %v551, 0.0
  %v648 = vsel %vm632, %v552, 0.0
  %v649 = vsel %vm633, %v553, 0.0
  %v650 = vsel %vm634, %v554, 0.0
  %v651 = vsel %vm635, %v555, 0.0
  %v652 = vld [vmem:[#allocation3] sm:$0xff]
  %v653 = vld [vmem:[#allocation3 + $0x8] sm:$0xff]
  %v654 = vld [vmem:[#allocation3 + $0x10] sm:$0xff]
  %v655 = vld [vmem:[#allocation3 + $0x18] sm:$0xff]
  %v656 = vld [vmem:[#allocation3 + $0x20] sm:$0xff]
  %v657 = vld [vmem:[#allocation3 + $0x28] sm:$0xff]
  %v658 = vld [vmem:[#allocation3 + $0x30] sm:$0xff]
  %v659 = vld [vmem:[#allocation3 + $0x38] sm:$0xff]
  %v660 = vld [vmem:[#allocation3 + $0x40] sm:$0xff]
  %v661 = vld [vmem:[#allocation3 + $0x48] sm:$0xff]
  %v662 = vld [vmem:[#allocation3 + $0x50] sm:$0xff]
  %v663 = vld [vmem:[#allocation3 + $0x58] sm:$0xff]
  %v664 = vld [vmem:[#allocation3 + $0x60] sm:$0xff]
  %v665 = vld [vmem:[#allocation3 + $0x68] sm:$0xff]
  %v666 = vld [vmem:[#allocation3 + $0x70] sm:$0xff]
  %v667 = vld [vmem:[#allocation3 + $0x78] sm:$0xff]
  %v668 = vpack.c.bf16 %v637, %v636
  %v669 = vpack.c.bf16 %v639, %v638
  %v670 = vpack.c.bf16 %v641, %v640
  %v671 = vpack.c.bf16 %v643, %v642
  %v672 = vpack.c.bf16 %v645, %v644
  %v673 = vpack.c.bf16 %v647, %v646
  %v674 = vpack.c.bf16 %v649, %v648
  %v675 = vpack.c.bf16 %v651, %v650
  %s676 = scalar_lea.vmem %s3, 4
  %v677 = vld [vmem:[%s676] sm:$0xf]
  %v679 = vsel %vm133, %v668, 0
  %v682 = vsel %vm133, %v669, 0
  %v685 = vsel %vm133, %v670, 0
  %v688 = vsel %vm133, %v671, 0
  %v691 = vsel %vm133, %v672, 0
  %v694 = vsel %vm133, %v673, 0
  %v697 = vsel %vm133, %v674, 0
  %v700 = vsel %vm133, %v675, 0
  %v703 = vsel %vm407, %v677, 0
  %705 = vmatprep.subr.bf16.mxu0 0
  %706 = vmatpush1.bf16.msra.mxu0 %v703
  %707 = vmatprep.subr.bf16.mxu0 0
  %708 = vmatpush1.bf16.msra.mxu0 0
  %709 = vmatprep.subr.bf16.mxu0 0
  %710 = vmatpush1.bf16.msra.mxu0 0
  %711 = vmatprep.subr.bf16.mxu0 0
  %712 = vmatpush1.bf16.msra.mxu0 0
  %713 = vmatprep.subr.bf16.mxu0 0
  %714 = vmatpush1.bf16.msra.mxu0 0
  %715 = vmatprep.subr.bf16.mxu0 0
  %716 = vmatpush1.bf16.msra.mxu0 0
  %717 = vmatprep.subr.bf16.mxu0 0
  %718 = vmatpush1.bf16.msra.mxu0 0
  %719 = vmatprep.subr.bf16.mxu0 0
  %720 = vmatpush1.bf16.msra.mxu0 0
  %721 = vmatprep.subr.bf16.mxu0 0
  %722 = vmatpush1.bf16.msra.mxu0 0
  %723 = vmatprep.subr.bf16.mxu0 0
  %724 = vmatpush1.bf16.msra.mxu0 0
  %725 = vmatprep.subr.bf16.mxu0 0
  %726 = vmatpush1.bf16.msra.mxu0 0
  %727 = vmatprep.subr.bf16.mxu0 0
  %728 = vmatpush1.bf16.msra.mxu0 0
  %729 = vmatprep.subr.bf16.mxu0 0
  %730 = vmatpush1.bf16.msra.mxu0 0
  %731 = vmatprep.subr.bf16.mxu0 0
  %732 = vmatpush1.bf16.msra.mxu0 0
  %733 = vmatprep.subr.bf16.mxu0 0
  %734 = vmatpush1.bf16.msra.mxu0 0
  %735 = vmatprep.subr.bf16.mxu0 0
  %736 = vmatpush1.bf16.msra.mxu0 0
  %737 = vmatprep.mubr.bf16.mxu0 0
  %738 = vmatmul.mubr.bf16.gmra.mrb[0].mxu0 %v679
  %v739 = vpop.f32.mrb[0].mxu0
  %v740 = vadd.f32 0.0, %v739
  %v741 = vpop.f32.mrb[0].mxu0
  %v742 = vpop.f32.mrb[0].mxu0
  %v743 = vadd.f32 0.0, %v742
  %v744 = vpop.f32.mrb[0].mxu0
  %745 = vmatprep.mubr.bf16.mxu0 0
  %746 = vmatmul.mubr.bf16.gmra.mrb[0].mxu0 %v682
  %v747 = vpop.f32.mrb[0].mxu0
  %v748 = vadd.f32 0.0, %v747
  %v749 = vpop.f32.mrb[0].mxu0
  %v750 = vpop.f32.mrb[0].mxu0
  %v751 = vadd.f32 0.0, %v750
  %v752 = vpop.f32.mrb[0].mxu0
  %753 = vmatprep.mubr.bf16.mxu0 0
  %754 = vmatmul.mubr.bf16.gmra.mrb[0].mxu0 %v685
  %v755 = vpop.f32.mrb[0].mxu0
  %v756 = vadd.f32 0.0, %v755
  %v757 = vpop.f32.mrb[0].mxu0
  %v758 = vpop.f32.mrb[0].mxu0
  %v759 = vadd.f32 0.0, %v758
  %v760 = vpop.f32.mrb[0].mxu0
  %761 = vmatprep.mubr.bf16.mxu0 0
  %762 = vmatmul.mubr.bf16.gmra.mrb[0].mxu0 %v688
  %v763 = vpop.f32.mrb[0].mxu0
  %v764 = vadd.f32 0.0, %v763
  %v765 = vpop.f32.mrb[0].mxu0
  %v766 = vpop.f32.mrb[0].mxu0
  %v767 = vadd.f32 0.0, %v766
  %v768 = vpop.f32.mrb[0].mxu0
  %769 = vmatprep.mubr.bf16.mxu0 0
  %770 = vmatmul.mubr.bf16.gmra.mrb[0].mxu0 %v691
  %v771 = vpop.f32.mrb[0].mxu0
  %v772 = vadd.f32 0.0, %v771
  %v773 = vpop.f32.mrb[0].mxu0
  %v774 = vpop.f32.mrb[0].mxu0
  %v775 = vadd.f32 0.0, %v774
  %v776 = vpop.f32.mrb[0].mxu0
  %777 = vmatprep.mubr.bf16.mxu0 0
  %778 = vmatmul.mubr.bf16.gmra.mrb[0].mxu0 %v694
  %v779 = vpop.f32.mrb[0].mxu0
  %v780 = vadd.f32 0.0, %v779
  %v781 = vpop.f32.mrb[0].mxu0
  %v782 = vpop.f32.mrb[0].mxu0
  %v783 = vadd.f32 0.0, %v782
  %v784 = vpop.f32.mrb[0].mxu0
  %785 = vmatprep.mubr.bf16.mxu0 0
  %786 = vmatmul.mubr.bf16.gmra.mrb[0].mxu0 %v697
  %v787 = vpop.f32.mrb[0].mxu0
  %v788 = vadd.f32 0.0, %v787
  %v789 = vpop.f32.mrb[0].mxu0
  %v790 = vpop.f32.mrb[0].mxu0
  %v791 = vadd.f32 0.0, %v790
  %v792 = vpop.f32.mrb[0].mxu0
  %793 = vmatprep.mubr.bf16.mxu0 0
  %794 = vmatmul.mubr.bf16.gmra.mrb[0].mxu0 %v700
  %v795 = vpop.f32.mrb[0].mxu0
  %v796 = vadd.f32 0.0, %v795
  %v797 = vpop.f32.mrb[0].mxu0
  %v798 = vpop.f32.mrb[0].mxu0
  %v799 = vadd.f32 0.0, %v798
  %v800 = vpop.f32.mrb[0].mxu0
  %801 = vdwg.mxu0
  %v802 = vadd.f32 %v652, %v740
  %v803 = vadd.f32 %v653, %v743
  %v804 = vadd.f32 %v654, %v748
  %v805 = vadd.f32 %v655, %v751
  %v806 = vadd.f32 %v656, %v756
  %v807 = vadd.f32 %v657, %v759
  %v808 = vadd.f32 %v658, %v764
  %v809 = vadd.f32 %v659, %v767
  %v810 = vadd.f32 %v660, %v772
  %v811 = vadd.f32 %v661, %v775
  %v812 = vadd.f32 %v662, %v780
  %v813 = vadd.f32 %v663, %v783
  %v814 = vadd.f32 %v664, %v788
  %v815 = vadd.f32 %v665, %v791
  %v816 = vadd.f32 %v666, %v796
  %v817 = vadd.f32 %v667, %v799
  %818 = vst.msk [vmem:[#allocation3] sm:$0xff] %vm133, %v802
  %819 = vst.msk [vmem:[#allocation3 + $0x8] sm:$0xff] %vm133, %v803
  %820 = vst.msk [vmem:[#allocation3 + $0x10] sm:$0xff] %vm133, %v804
  %821 = vst.msk [vmem:[#allocation3 + $0x18] sm:$0xff] %vm133, %v805
  %822 = vst.msk [vmem:[#allocation3 + $0x20] sm:$0xff] %vm133, %v806
  %823 = vst.msk [vmem:[#allocation3 + $0x28] sm:$0xff] %vm133, %v807
  %824 = vst.msk [vmem:[#allocation3 + $0x30] sm:$0xff] %vm133, %v808
  %825 = vst.msk [vmem:[#allocation3 + $0x38] sm:$0xff] %vm133, %v809
  %826 = vst.msk [vmem:[#allocation3 + $0x40] sm:$0xff] %vm133, %v810
  %827 = vst.msk [vmem:[#allocation3 + $0x48] sm:$0xff] %vm133, %v811
  %828 = vst.msk [vmem:[#allocation3 + $0x50] sm:$0xff] %vm133, %v812
  %829 = vst.msk [vmem:[#allocation3 + $0x58] sm:$0xff] %vm133, %v813
  %830 = vst.msk [vmem:[#allocation3 + $0x60] sm:$0xff] %vm133, %v814
  %831 = vst.msk [vmem:[#allocation3 + $0x68] sm:$0xff] %vm133, %v815
  %832 = vst.msk [vmem:[#allocation3 + $0x70] sm:$0xff] %vm133, %v816
  %833 = vst.msk [vmem:[#allocation3 + $0x78] sm:$0xff] %vm133, %v817
  %v834 = vld [vmem:[#allocation2 + $0x9] sm:$0xff]
  %v835 = vld [vmem:[#allocation2 + $0x11] sm:$0xff]
  %v836 = vld [vmem:[#allocation2 + $0x19] sm:$0xff]
  %v837 = vld [vmem:[#allocation2 + $0x21] sm:$0xff]
  %v838 = vld [vmem:[#allocation2 + $0x29] sm:$0xff]
  %v839 = vld [vmem:[#allocation2 + $0x31] sm:$0xff]
  %v840 = vld [vmem:[#allocation2 + $0x39] sm:$0xff]
  %v841 = vld [vmem:[#allocation2 + $0x41] sm:$0xff]
  %v842 = vld [vmem:[#allocation2 + $0x49] sm:$0xff]
  %v843 = vld [vmem:[#allocation2 + $0x51] sm:$0xff]
  %v844 = vld [vmem:[#allocation2 + $0x59] sm:$0xff]
  %v845 = vld [vmem:[#allocation2 + $0x61] sm:$0xff]
  %v846 = vld [vmem:[#allocation2 + $0x69] sm:$0xff]
  %v847 = vld [vmem:[#allocation2 + $0x71] sm:$0xff]
  %v848 = vld [vmem:[#allocation2 + $0x79] sm:$0xff]
  %v849 = vld [vmem:[#allocation2 + $0x81] sm:$0xff]
  %vm850 = vcmp.lt.s32.totalorder %v166, 7
  %vm851 = vcmp.lt.s32.totalorder %v167, 7
  %vm852 = vcmp.lt.s32.totalorder %v168, 7
  %vm853 = vcmp.lt.s32.totalorder %v169, 7
  %vm854 = vcmp.lt.s32.totalorder %v170, 7
  %vm855 = vcmp.lt.s32.totalorder %v171, 7
  %vm856 = vcmp.lt.s32.totalorder %v172, 7
  %vm857 = vcmp.lt.s32.totalorder %v173, 7
  %vm858 = vcmp.lt.s32.totalorder %v174, 7
  %vm859 = vcmp.lt.s32.totalorder %v175, 7
  %vm860 = vcmp.lt.s32.totalorder %v176, 7
  %vm861 = vcmp.lt.s32.totalorder %v177, 7
  %vm862 = vcmp.lt.s32.totalorder %v178, 7
  %vm863 = vcmp.lt.s32.totalorder %v179, 7
  %vm864 = vcmp.lt.s32.totalorder %v180, 7
  %vm865 = vcmp.lt.s32.totalorder %v181, 7
  %vm866 = vmand %vm214, %vm850
  %vm867 = vmand %vm215, %vm851
  %vm868 = vmand %vm216, %vm852
  %vm869 = vmand %vm217, %vm853
  %vm870 = vmand %vm218, %vm854
  %vm871 = vmand %vm219, %vm855
  %vm872 = vmand %vm220, %vm856
  %vm873 = vmand %vm221, %vm857
  %vm874 = vmand %vm222, %vm858
  %vm875 = vmand %vm223, %vm859
  %vm876 = vmand %vm224, %vm860
  %vm877 = vmand %vm225, %vm861
  %vm878 = vmand %vm226, %vm862
  %vm879 = vmand %vm227, %vm863
  %vm880 = vmand %vm228, %vm864
  %vm881 = vmand %vm229, %vm865
  %v882 = vsel %vm866, 1, 0
  %v883 = vsel %vm867, 1, 0
  %v884 = vsel %vm868, 1, 0
  %v885 = vsel %vm869, 1, 0
  %v886 = vsel %vm870, 1, 0
  %v887 = vsel %vm871, 1, 0
  %v888 = vsel %vm872, 1, 0
  %v889 = vsel %vm873, 1, 0
  %v890 = vsel %vm874, 1, 0
  %v891 = vsel %vm875, 1, 0
  %v892 = vsel %vm876, 1, 0
  %v893 = vsel %vm877, 1, 0
  %v894 = vsel %vm878, 1, 0
  %v895 = vsel %vm879, 1, 0
  %v896 = vsel %vm880, 1, 0
  %v897 = vsel %vm881, 1, 0
  %898 = vset.pattern.permute.xlu0 0
  %899 = vperm.xlu0 %898, %v882
  %v900 = vpop.permute.xlu0 %899
  %901 = vset.pattern.permute.xlu0 0
  %902 = vperm.xlu0 %901, %v883
  %v903 = vpop.permute.xlu0 %902
  %904 = vset.pattern.permute.xlu0 0
  %905 = vperm.xlu0 %904, %v884
  %v906 = vpop.permute.xlu0 %905
  %907 = vset.pattern.permute.xlu0 0
  %908 = vperm.xlu0 %907, %v885
  %v909 = vpop.permute.xlu0 %908
  %910 = vset.pattern.permute.xlu0 0
  %911 = vperm.xlu0 %910, %v886
  %v912 = vpop.permute.xlu0 %911
  %913 = vset.pattern.permute.xlu0 0
  %914 = vperm.xlu0 %913, %v887
  %v915 = vpop.permute.xlu0 %914
  %916 = vset.pattern.permute.xlu0 0
  %917 = vperm.xlu0 %916, %v888
  %v918 = vpop.permute.xlu0 %917
  %919 = vset.pattern.permute.xlu0 0
  %920 = vperm.xlu0 %919, %v889
  %v921 = vpop.permute.xlu0 %920
  %922 = vset.pattern.permute.xlu0 0
  %923 = vperm.xlu0 %922, %v890
  %v924 = vpop.permute.xlu0 %923
  %925 = vset.pattern.permute.xlu0 0
  %926 = vperm.xlu0 %925, %v891
  %v927 = vpop.permute.xlu0 %926
  %928 = vset.pattern.permute.xlu0 0
  %929 = vperm.xlu0 %928, %v892
  %v930 = vpop.permute.xlu0 %929
  %931 = vset.pattern.permute.xlu0 0
  %932 = vperm.xlu0 %931, %v893
  %v933 = vpop.permute.xlu0 %932
  %934 = vset.pattern.permute.xlu0 0
  %935 = vperm.xlu0 %934, %v894
  %v936 = vpop.permute.xlu0 %935
  %937 = vset.pattern.permute.xlu0 0
  %938 = vperm.xlu0 %937, %v895
  %v939 = vpop.permute.xlu0 %938
  %940 = vset.pattern.permute.xlu0 0
  %941 = vperm.xlu0 %940, %v896
  %v942 = vpop.permute.xlu0 %941
  %943 = vset.pattern.permute.xlu0 0
  %944 = vperm.xlu0 %943, %v897
  %v945 = vpop.permute.xlu0 %944
  %vm946 = vcmp.eq.s32.totalorder %v900, 1
  %vm947 = vcmp.eq.s32.totalorder %v903, 1
  %vm948 = vcmp.eq.s32.totalorder %v906, 1
  %vm949 = vcmp.eq.s32.totalorder %v909, 1
  %vm950 = vcmp.eq.s32.totalorder %v912, 1
  %vm951 = vcmp.eq.s32.totalorder %v915, 1
  %vm952 = vcmp.eq.s32.totalorder %v918, 1
  %vm953 = vcmp.eq.s32.totalorder %v921, 1
  %vm954 = vcmp.eq.s32.totalorder %v924, 1
  %vm955 = vcmp.eq.s32.totalorder %v927, 1
  %vm956 = vcmp.eq.s32.totalorder %v930, 1
  %vm957 = vcmp.eq.s32.totalorder %v933, 1
  %vm958 = vcmp.eq.s32.totalorder %v936, 1
  %vm959 = vcmp.eq.s32.totalorder %v939, 1
  %vm960 = vcmp.eq.s32.totalorder %v942, 1
  %vm961 = vcmp.eq.s32.totalorder %v945, 1
  %v962 = vsel %vm946, %v834, 0.0
  %v963 = vsel %vm947, %v835, 0.0
  %v964 = vsel %vm948, %v836, 0.0
  %v965 = vsel %vm949, %v837, 0.0
  %v966 = vsel %vm950, %v838, 0.0
  %v967 = vsel %vm951, %v839, 0.0
  %v968 = vsel %vm952, %v840, 0.0
  %v969 = vsel %vm953, %v841, 0.0
  %v970 = vsel %vm954, %v842, 0.0
  %v971 = vsel %vm955, %v843, 0.0
  %v972 = vsel %vm956, %v844, 0.0
  %v973 = vsel %vm957, %v845, 0.0
  %v974 = vsel %vm958, %v846, 0.0
  %v975 = vsel %vm959, %v847, 0.0
  %v976 = vsel %vm960, %v848, 0.0
  %v977 = vsel %vm961, %v849, 0.0
  %v978 = vld [vmem:[#allocation3] sm:$0xff]
  %v979 = vld [vmem:[#allocation3 + $0x8] sm:$0xff]
  %v980 = vld [vmem:[#allocation3 + $0x10] sm:$0xff]
  %v981 = vld [vmem:[#allocation3 + $0x18] sm:$0xff]
  %v982 = vld [vmem:[#allocation3 + $0x20] sm:$0xff]
  %v983 = vld [vmem:[#allocation3 + $0x28] sm:$0xff]
  %v984 = vld [vmem:[#allocation3 + $0x30] sm:$0xff]
  %v985 = vld [vmem:[#allocation3 + $0x38] sm:$0xff]
  %v986 = vld [vmem:[#allocation3 + $0x40] sm:$0xff]
  %v987 = vld [vmem:[#allocation3 + $0x48] sm:$0xff]
  %v988 = vld [vmem:[#allocation3 + $0x50] sm:$0xff]
  %v989 = vld [vmem:[#allocation3 + $0x58] sm:$0xff]
  %v990 = vld [vmem:[#allocation3 + $0x60] sm:$0xff]
  %v991 = vld [vmem:[#allocation3 + $0x68] sm:$0xff]
  %v992 = vld [vmem:[#allocation3 + $0x70] sm:$0xff]
  %v993 = vld [vmem:[#allocation3 + $0x78] sm:$0xff]
  %v994 = vpack.c.bf16 %v963, %v962
  %v995 = vpack.c.bf16 %v965, %v964
  %v996 = vpack.c.bf16 %v967, %v966
  %v997 = vpack.c.bf16 %v969, %v968
  %v998 = vpack.c.bf16 %v971, %v970
  %v999 = vpack.c.bf16 %v973, %v972
  %v1000 = vpack.c.bf16 %v975, %v974
  %v1001 = vpack.c.bf16 %v977, %v976
  %s1002 = scalar_lea.vmem %s3, 8
  %v1003 = vld [vmem:[%s1002] sm:$0xf]
  %v1005 = vsel %vm133, %v994, 0
  %v1008 = vsel %vm133, %v995, 0
  %v1011 = vsel %vm133, %v996, 0
  %v1014 = vsel %vm133, %v997, 0
  %v1017 = vsel %vm133, %v998, 0
  %v1020 = vsel %vm133, %v999, 0
  %v1023 = vsel %vm133, %v1000, 0
  %v1026 = vsel %vm133, %v1001, 0
  %v1029 = vsel %vm407, %v1003, 0
  %1031 = vmatprep.subr.bf16.mxu0 0
  %1032 = vmatpush1.bf16.msra.mxu0 %v1029
  %1033 = vmatprep.subr.bf16.mxu0 0
  %1034 = vmatpush1.bf16.msra.mxu0 0
  %1035 = vmatprep.subr.bf16.mxu0 0
  %1036 = vmatpush1.bf16.msra.mxu0 0
  %1037 = vmatprep.subr.bf16.mxu0 0
  %1038 = vmatpush1.bf16.msra.mxu0 0
  %1039 = vmatprep.subr.bf16.mxu0 0
  %1040 = vmatpush1.bf16.msra.mxu0 0
  %1041 = vmatprep.subr.bf16.mxu0 0
  %1042 = vmatpush1.bf16.msra.mxu0 0
  %1043 = vmatprep.subr.bf16.mxu0 0
  %1044 = vmatpush1.bf16.msra.mxu0 0
  %1045 = vmatprep.subr.bf16.mxu0 0
  %1046 = vmatpush1.bf16.msra.mxu0 0
  %1047 = vmatprep.subr.bf16.mxu0 0
  %1048 = vmatpush1.bf16.msra.mxu0 0
  %1049 = vmatprep.subr.bf16.mxu0 0
  %1050 = vmatpush1.bf16.msra.mxu0 0
  %1051 = vmatprep.subr.bf16.mxu0 0
  %1052 = vmatpush1.bf16.msra.mxu0 0
  %1053 = vmatprep.subr.bf16.mxu0 0
  %1054 = vmatpush1.bf16.msra.mxu0 0
  %1055 = vmatprep.subr.bf16.mxu0 0
  %1056 = vmatpush1.bf16.msra.mxu0 0
  %1057 = vmatprep.subr.bf16.mxu0 0
  %1058 = vmatpush1.bf16.msra.mxu0 0
  %1059 = vmatprep.subr.bf16.mxu0 0
  %1060 = vmatpush1.bf16.msra.mxu0 0
  %1061 = vmatprep.subr.bf16.mxu0 0
  %1062 = vmatpush1.bf16.msra.mxu0 0
  %1063 = vmatprep.mubr.bf16.mxu0 0
  %1064 = vmatmul.mubr.bf16.gmra.mrb[0].mxu0 %v1005
  %v1065 = vpop.f32.mrb[0].mxu0
  %v1066 = vadd.f32 0.0, %v1065
  %v1067 = vpop.f32.mrb[0].mxu0
  %v1068 = vpop.f32.mrb[0].mxu0
  %v1069 = vadd.f32 0.0, %v1068
  %v1070 = vpop.f32.mrb[0].mxu0
  %1071 = vmatprep.mubr.bf16.mxu0 0
  %1072 = vmatmul.mubr.bf16.gmra.mrb[0].mxu0 %v1008
  %v1073 = vpop.f32.mrb[0].mxu0
  %v1074 = vadd.f32 0.0, %v1073
  %v1075 = vpop.f32.mrb[0].mxu0
  %v1076 = vpop.f32.mrb[0].mxu0
  %v1077 = vadd.f32 0.0, %v1076
  %v1078 = vpop.f32.mrb[0].mxu0
  %1079 = vmatprep.mubr.bf16.mxu0 0
  %1080 = vmatmul.mubr.bf16.gmra.mrb[0].mxu0 %v1011
  %v1081 = vpop.f32.mrb[0].mxu0
  %v1082 = vadd.f32 0.0, %v1081
  %v1083 = vpop.f32.mrb[0].mxu0
  %v1084 = vpop.f32.mrb[0].mxu0
  %v1085 = vadd.f32 0.0, %v1084
  %v1086 = vpop.f32.mrb[0].mxu0
  %1087 = vmatprep.mubr.bf16.mxu0 0
  %1088 = vmatmul.mubr.bf16.gmra.mrb[0].mxu0 %v1014
  %v1089 = vpop.f32.mrb[0].mxu0
  %v1090 = vadd.f32 0.0, %v1089
  %v1091 = vpop.f32.mrb[0].mxu0
  %v1092 = vpop.f32.mrb[0].mxu0
  %v1093 = vadd.f32 0.0, %v1092
  %v1094 = vpop.f32.mrb[0].mxu0
  %1095 = vmatprep.mubr.bf16.mxu0 0
  %1096 = vmatmul.mubr.bf16.gmra.mrb[0].mxu0 %v1017
  %v1097 = vpop.f32.mrb[0].mxu0
  %v1098 = vadd.f32 0.0, %v1097
  %v1099 = vpop.f32.mrb[0].mxu0
  %v1100 = vpop.f32.mrb[0].mxu0
  %v1101 = vadd.f32 0.0, %v1100
  %v1102 = vpop.f32.mrb[0].mxu0
  %1103 = vmatprep.mubr.bf16.mxu0 0
  %1104 = vmatmul.mubr.bf16.gmra.mrb[0].mxu0 %v1020
  %v1105 = vpop.f32.mrb[0].mxu0
  %v1106 = vadd.f32 0.0, %v1105
  %v1107 = vpop.f32.mrb[0].mxu0
  %v1108 = vpop.f32.mrb[0].mxu0
  %v1109 = vadd.f32 0.0, %v1108
  %v1110 = vpop.f32.mrb[0].mxu0
  %1111 = vmatprep.mubr.bf16.mxu0 0
  %1112 = vmatmul.mubr.bf16.gmra.mrb[0].mxu0 %v1023
  %v1113 = vpop.f32.mrb[0].mxu0
  %v1114 = vadd.f32 0.0, %v1113
  %v1115 = vpop.f32.mrb[0].mxu0
  %v1116 = vpop.f32.mrb[0].mxu0
  %v1117 = vadd.f32 0.0, %v1116
  %v1118 = vpop.f32.mrb[0].mxu0
  %1119 = vmatprep.mubr.bf16.mxu0 0
  %1120 = vmatmul.mubr.bf16.gmra.mrb[0].mxu0 %v1026
  %v1121 = vpop.f32.mrb[0].mxu0
  %v1122 = vadd.f32 0.0, %v1121
  %v1123 = vpop.f32.mrb[0].mxu0
  %v1124 = vpop.f32.mrb[0].mxu0
  %v1125 = vadd.f32 0.0, %v1124
  %v1126 = vpop.f32.mrb[0].mxu0
  %1127 = vdwg.mxu0
  %v1128 = vadd.f32 %v978, %v1066
  %v1129 = vadd.f32 %v979, %v1069
  %v1130 = vadd.f32 %v980, %v1074
  %v1131 = vadd.f32 %v981, %v1077
  %v1132 = vadd.f32 %v982, %v1082
  %v1133 = vadd.f32 %v983, %v1085
  %v1134 = vadd.f32 %v984, %v1090
  %v1135 = vadd.f32 %v985, %v1093
  %v1136 = vadd.f32 %v986, %v1098
  %v1137 = vadd.f32 %v987, %v1101
  %v1138 = vadd.f32 %v988, %v1106
  %v1139 = vadd.f32 %v989, %v1109
  %v1140 = vadd.f32 %v990, %v1114
  %v1141 = vadd.f32 %v991, %v1117
  %v1142 = vadd.f32 %v992, %v1122
  %v1143 = vadd.f32 %v993, %v1125
  %1144 = vst.msk [vmem:[#allocation3] sm:$0xff] %vm133, %v1128
  %1145 = vst.msk [vmem:[#allocation3 + $0x8] sm:$0xff] %vm133, %v1129
  %1146 = vst.msk [vmem:[#allocation3 + $0x10] sm:$0xff] %vm133, %v1130
  %1147 = vst.msk [vmem:[#allocation3 + $0x18] sm:$0xff] %vm133, %v1131
  %1148 = vst.msk [vmem:[#allocation3 + $0x20] sm:$0xff] %vm133, %v1132
  %1149 = vst.msk [vmem:[#allocation3 + $0x28] sm:$0xff] %vm133, %v1133
  %1150 = vst.msk [vmem:[#allocation3 + $0x30] sm:$0xff] %vm133, %v1134
  %1151 = vst.msk [vmem:[#allocation3 + $0x38] sm:$0xff] %vm133, %v1135
  %1152 = vst.msk [vmem:[#allocation3 + $0x40] sm:$0xff] %vm133, %v1136
  %1153 = vst.msk [vmem:[#allocation3 + $0x48] sm:$0xff] %vm133, %v1137
  %1154 = vst.msk [vmem:[#allocation3 + $0x50] sm:$0xff] %vm133, %v1138
  %1155 = vst.msk [vmem:[#allocation3 + $0x58] sm:$0xff] %vm133, %v1139
  %1156 = vst.msk [vmem:[#allocation3 + $0x60] sm:$0xff] %vm133, %v1140
  %1157 = vst.msk [vmem:[#allocation3 + $0x68] sm:$0xff] %vm133, %v1141
  %1158 = vst.msk [vmem:[#allocation3 + $0x70] sm:$0xff] %vm133, %v1142
  %1159 = vst.msk [vmem:[#allocation3 + $0x78] sm:$0xff] %vm133, %v1143
  %v1160 = vld [vmem:[#allocation2 + $0xf] sm:$0xff]
  %v1161 = vld [vmem:[#allocation2 + $0x17] sm:$0xff]
  %v1162 = vld [vmem:[#allocation2 + $0x1f] sm:$0xff]
  %v1163 = vld [vmem:[#allocation2 + $0x27] sm:$0xff]
  %v1164 = vld [vmem:[#allocation2 + $0x2f] sm:$0xff]
  %v1165 = vld [vmem:[#allocation2 + $0x37] sm:$0xff]
  %v1166 = vld [vmem:[#allocation2 + $0x3f] sm:$0xff]
  %v1167 = vld [vmem:[#allocation2 + $0x47] sm:$0xff]
  %v1168 = vld [vmem:[#allocation2 + $0x4f] sm:$0xff]
  %v1169 = vld [vmem:[#allocation2 + $0x57] sm:$0xff]
  %v1170 = vld [vmem:[#allocation2 + $0x5f] sm:$0xff]
  %v1171 = vld [vmem:[#allocation2 + $0x67] sm:$0xff]
  %v1172 = vld [vmem:[#allocation2 + $0x6f] sm:$0xff]
  %v1173 = vld [vmem:[#allocation2 + $0x77] sm:$0xff]
  %v1174 = vld [vmem:[#allocation2 + $0x7f] sm:$0xff]
  %v1175 = vld [vmem:[#allocation2 + $0x87] sm:$0xff]
  %v1176 = vsel %vm230, 1, 0
  %v1177 = vsel %vm231, 1, 0
  %v1178 = vsel %vm232, 1, 0
  %v1179 = vsel %vm233, 1, 0
  %v1180 = vsel %vm234, 1, 0
  %v1181 = vsel %vm235, 1, 0
  %v1182 = vsel %vm236, 1, 0
  %v1183 = vsel %vm237, 1, 0
  %v1184 = vsel %vm238, 1, 0
  %v1185 = vsel %vm239, 1, 0
  %v1186 = vsel %vm240, 1, 0
  %v1187 = vsel %vm241, 1, 0
  %v1188 = vsel %vm242, 1, 0
  %v1189 = vsel %vm243, 1, 0
  %v1190 = vsel %vm244, 1, 0
  %v1191 = vsel %vm245, 1, 0
  %1192 = vset.pattern.permute.xlu0 0
  %1193 = vperm.xlu0 %1192, %v1176
  %v1194 = vpop.permute.xlu0 %1193
  %1195 = vset.pattern.permute.xlu0 0
  %1196 = vperm.xlu0 %1195, %v1177
  %v1197 = vpop.permute.xlu0 %1196
  %1198 = vset.pattern.permute.xlu0 0
  %1199 = vperm.xlu0 %1198, %v1178
  %v1200 = vpop.permute.xlu0 %1199
  %1201 = vset.pattern.permute.xlu0 0
  %1202 = vperm.xlu0 %1201, %v1179
  %v1203 = vpop.permute.xlu0 %1202
  %1204 = vset.pattern.permute.xlu0 0
  %1205 = vperm.xlu0 %1204, %v1180
  %v1206 = vpop.permute.xlu0 %1205
  %1207 = vset.pattern.permute.xlu0 0
  %1208 = vperm.xlu0 %1207, %v1181
  %v1209 = vpop.permute.xlu0 %1208
  %1210 = vset.pattern.permute.xlu0 0
  %1211 = vperm.xlu0 %1210, %v1182
  %v1212 = vpop.permute.xlu0 %1211
  %1213 = vset.pattern.permute.xlu0 0
  %1214 = vperm.xlu0 %1213, %v1183
  %v1215 = vpop.permute.xlu0 %1214
  %1216 = vset.pattern.permute.xlu0 0
  %1217 = vperm.xlu0 %1216, %v1184
  %v1218 = vpop.permute.xlu0 %1217
  %1219 = vset.pattern.permute.xlu0 0
  %1220 = vperm.xlu0 %1219, %v1185
  %v1221 = vpop.permute.xlu0 %1220
  %1222 = vset.pattern.permute.xlu0 0
  %1223 = vperm.xlu0 %1222, %v1186
  %v1224 = vpop.permute.xlu0 %1223
  %1225 = vset.pattern.permute.xlu0 0
  %1226 = vperm.xlu0 %1225, %v1187
  %v1227 = vpop.permute.xlu0 %1226
  %1228 = vset.pattern.permute.xlu0 0
  %1229 = vperm.xlu0 %1228, %v1188
  %v1230 = vpop.permute.xlu0 %1229
  %1231 = vset.pattern.permute.xlu0 0
  %1232 = vperm.xlu0 %1231, %v1189
  %v1233 = vpop.permute.xlu0 %1232
  %1234 = vset.pattern.permute.xlu0 0
  %1235 = vperm.xlu0 %1234, %v1190
  %v1236 = vpop.permute.xlu0 %1235
  %1237 = vset.pattern.permute.xlu0 0
  %1238 = vperm.xlu0 %1237, %v1191
  %v1239 = vpop.permute.xlu0 %1238
  %vm1240 = vcmp.eq.s32.totalorder %v1194, 1
  %vm1241 = vcmp.eq.s32.totalorder %v1197, 1
  %vm1242 = vcmp.eq.s32.totalorder %v1200, 1
  %vm1243 = vcmp.eq.s32.totalorder %v1203, 1
  %vm1244 = vcmp.eq.s32.totalorder %v1206, 1
  %vm1245 = vcmp.eq.s32.totalorder %v1209, 1
  %vm1246 = vcmp.eq.s32.totalorder %v1212, 1
  %vm1247 = vcmp.eq.s32.totalorder %v1215, 1
  %vm1248 = vcmp.eq.s32.totalorder %v1218, 1
  %vm1249 = vcmp.eq.s32.totalorder %v1221, 1
  %vm1250 = vcmp.eq.s32.totalorder %v1224, 1
  %vm1251 = vcmp.eq.s32.totalorder %v1227, 1
  %vm1252 = vcmp.eq.s32.totalorder %v1230, 1
  %vm1253 = vcmp.eq.s32.totalorder %v1233, 1
  %vm1254 = vcmp.eq.s32.totalorder %v1236, 1
  %vm1255 = vcmp.eq.s32.totalorder %v1239, 1
  %v1256 = vsel %vm1240, %v1160, 0.0
  %v1257 = vsel %vm1241, %v1161, 0.0
  %v1258 = vsel %vm1242, %v1162, 0.0
  %v1259 = vsel %vm1243, %v1163, 0.0
  %v1260 = vsel %vm1244, %v1164, 0.0
  %v1261 = vsel %vm1245, %v1165, 0.0
  %v1262 = vsel %vm1246, %v1166, 0.0
  %v1263 = vsel %vm1247, %v1167, 0.0
  %v1264 = vsel %vm1248, %v1168, 0.0
  %v1265 = vsel %vm1249, %v1169, 0.0
  %v1266 = vsel %vm1250, %v1170, 0.0
  %v1267 = vsel %vm1251, %v1171, 0.0
  %v1268 = vsel %vm1252, %v1172, 0.0
  %v1269 = vsel %vm1253, %v1173, 0.0
  %v1270 = vsel %vm1254, %v1174, 0.0
  %v1271 = vsel %vm1255, %v1175, 0.0
  %v1272 = vld [vmem:[#allocation3] sm:$0xff]
  %v1273 = vld [vmem:[#allocation3 + $0x8] sm:$0xff]
  %v1274 = vld [vmem:[#allocation3 + $0x10] sm:$0xff]
  %v1275 = vld [vmem:[#allocation3 + $0x18] sm:$0xff]
  %v1276 = vld [vmem:[#allocation3 + $0x20] sm:$0xff]
  %v1277 = vld [vmem:[#allocation3 + $0x28] sm:$0xff]
  %v1278 = vld [vmem:[#allocation3 + $0x30] sm:$0xff]
  %v1279 = vld [vmem:[#allocation3 + $0x38] sm:$0xff]
  %v1280 = vld [vmem:[#allocation3 + $0x40] sm:$0xff]
  %v1281 = vld [vmem:[#allocation3 + $0x48] sm:$0xff]
  %v1282 = vld [vmem:[#allocation3 + $0x50] sm:$0xff]
  %v1283 = vld [vmem:[#allocation3 + $0x58] sm:$0xff]
  %v1284 = vld [vmem:[#allocation3 + $0x60] sm:$0xff]
  %v1285 = vld [vmem:[#allocation3 + $0x68] sm:$0xff]
  %v1286 = vld [vmem:[#allocation3 + $0x70] sm:$0xff]
  %v1287 = vld [vmem:[#allocation3 + $0x78] sm:$0xff]
  %v1288 = vpack.c.bf16 %v1257, %v1256
  %v1289 = vpack.c.bf16 %v1259, %v1258
  %v1290 = vpack.c.bf16 %v1261, %v1260
  %v1291 = vpack.c.bf16 %v1263, %v1262
  %v1292 = vpack.c.bf16 %v1265, %v1264
  %v1293 = vpack.c.bf16 %v1267, %v1266
  %v1294 = vpack.c.bf16 %v1269, %v1268
  %v1295 = vpack.c.bf16 %v1271, %v1270
  %s1296 = scalar_lea.vmem %s3, 12
  %v1297 = vld [vmem:[%s1296] sm:$0xf]
  %v1299 = vsel %vm133, %v1288, 0
  %v1302 = vsel %vm133, %v1289, 0
  %v1305 = vsel %vm133, %v1290, 0
  %v1308 = vsel %vm133, %v1291, 0
  %v1311 = vsel %vm133, %v1292, 0
  %v1314 = vsel %vm133, %v1293, 0
  %v1317 = vsel %vm133, %v1294, 0
  %v1320 = vsel %vm133, %v1295, 0
  %v1323 = vsel %vm407, %v1297, 0
  %1325 = vmatprep.subr.bf16.mxu0 0
  %1326 = vmatpush1.bf16.msra.mxu0 %v1323
  %1327 = vmatprep.subr.bf16.mxu0 0
  %1328 = vmatpush1.bf16.msra.mxu0 0
  %1329 = vmatprep.subr.bf16.mxu0 0
  %1330 = vmatpush1.bf16.msra.mxu0 0
  %1331 = vmatprep.subr.bf16.mxu0 0
  %1332 = vmatpush1.bf16.msra.mxu0 0
  %1333 = vmatprep.subr.bf16.mxu0 0
  %1334 = vmatpush1.bf16.msra.mxu0 0
  %1335 = vmatprep.subr.bf16.mxu0 0
  %1336 = vmatpush1.bf16.msra.mxu0 0
  %1337 = vmatprep.subr.bf16.mxu0 0
  %1338 = vmatpush1.bf16.msra.mxu0 0
  %1339 = vmatprep.subr.bf16.mxu0 0
  %1340 = vmatpush1.bf16.msra.mxu0 0
  %1341 = vmatprep.subr.bf16.mxu0 0
  %1342 = vmatpush1.bf16.msra.mxu0 0
  %1343 = vmatprep.subr.bf16.mxu0 0
  %1344 = vmatpush1.bf16.msra.mxu0 0
  %1345 = vmatprep.subr.bf16.mxu0 0
  %1346 = vmatpush1.bf16.msra.mxu0 0
  %1347 = vmatprep.subr.bf16.mxu0 0
  %1348 = vmatpush1.bf16.msra.mxu0 0
  %1349 = vmatprep.subr.bf16.mxu0 0
  %1350 = vmatpush1.bf16.msra.mxu0 0
  %1351 = vmatprep.subr.bf16.mxu0 0
  %1352 = vmatpush1.bf16.msra.mxu0 0
  %1353 = vmatprep.subr.bf16.mxu0 0
  %1354 = vmatpush1.bf16.msra.mxu0 0
  %1355 = vmatprep.subr.bf16.mxu0 0
  %1356 = vmatpush1.bf16.msra.mxu0 0
  %1357 = vmatprep.mubr.bf16.mxu0 0
  %1358 = vmatmul.mubr.bf16.gmra.mrb[0].mxu0 %v1299
  %v1359 = vpop.f32.mrb[0].mxu0
  %v1360 = vadd.f32 0.0, %v1359
  %v1361 = vpop.f32.mrb[0].mxu0
  %v1362 = vpop.f32.mrb[0].mxu0
  %v1363 = vadd.f32 0.0, %v1362
  %v1364 = vpop.f32.mrb[0].mxu0
  %1365 = vmatprep.mubr.bf16.mxu0 0
  %1366 = vmatmul.mubr.bf16.gmra.mrb[0].mxu0 %v1302
  %v1367 = vpop.f32.mrb[0].mxu0
  %v1368 = vadd.f32 0.0, %v1367
  %v1369 = vpop.f32.mrb[0].mxu0
  %v1370 = vpop.f32.mrb[0].mxu0
  %v1371 = vadd.f32 0.0, %v1370
  %v1372 = vpop.f32.mrb[0].mxu0
  %1373 = vmatprep.mubr.bf16.mxu0 0
  %1374 = vmatmul.mubr.bf16.gmra.mrb[0].mxu0 %v1305
  %v1375 = vpop.f32.mrb[0].mxu0
  %v1376 = vadd.f32 0.0, %v1375
  %v1377 = vpop.f32.mrb[0].mxu0
  %v1378 = vpop.f32.mrb[0].mxu0
  %v1379 = vadd.f32 0.0, %v1378
  %v1380 = vpop.f32.mrb[0].mxu0
  %1381 = vmatprep.mubr.bf16.mxu0 0
  %1382 = vmatmul.mubr.bf16.gmra.mrb[0].mxu0 %v1308
  %v1383 = vpop.f32.mrb[0].mxu0
  %v1384 = vadd.f32 0.0, %v1383
  %v1385 = vpop.f32.mrb[0].mxu0
  %v1386 = vpop.f32.mrb[0].mxu0
  %v1387 = vadd.f32 0.0, %v1386
  %v1388 = vpop.f32.mrb[0].mxu0
  %1389 = vmatprep.mubr.bf16.mxu0 0
  %1390 = vmatmul.mubr.bf16.gmra.mrb[0].mxu0 %v1311
  %v1391 = vpop.f32.mrb[0].mxu0
  %v1392 = vadd.f32 0.0, %v1391
  %v1393 = vpop.f32.mrb[0].mxu0
  %v1394 = vpop.f32.mrb[0].mxu0
  %v1395 = vadd.f32 0.0, %v1394
  %v1396 = vpop.f32.mrb[0].mxu0
  %1397 = vmatprep.mubr.bf16.mxu0 0
  %1398 = vmatmul.mubr.bf16.gmra.mrb[0].mxu0 %v1314
  %v1399 = vpop.f32.mrb[0].mxu0
  %v1400 = vadd.f32 0.0, %v1399
  %v1401 = vpop.f32.mrb[0].mxu0
  %v1402 = vpop.f32.mrb[0].mxu0
  %v1403 = vadd.f32 0.0, %v1402
  %v1404 = vpop.f32.mrb[0].mxu0
  %1405 = vmatprep.mubr.bf16.mxu0 0
  %1406 = vmatmul.mubr.bf16.gmra.mrb[0].mxu0 %v1317
  %v1407 = vpop.f32.mrb[0].mxu0
  %v1408 = vadd.f32 0.0, %v1407
  %v1409 = vpop.f32.mrb[0].mxu0
  %v1410 = vpop.f32.mrb[0].mxu0
  %v1411 = vadd.f32 0.0, %v1410
  %v1412 = vpop.f32.mrb[0].mxu0
  %1413 = vmatprep.mubr.bf16.mxu0 0
  %1414 = vmatmul.mubr.bf16.gmra.mrb[0].mxu0 %v1320
  %v1415 = vpop.f32.mrb[0].mxu0
  %v1416 = vadd.f32 0.0, %v1415
  %v1417 = vpop.f32.mrb[0].mxu0
  %v1418 = vpop.f32.mrb[0].mxu0
  %v1419 = vadd.f32 0.0, %v1418
  %v1420 = vpop.f32.mrb[0].mxu0
  %1421 = vdwg.mxu0
  %v1422 = vadd.f32 %v1272, %v1360
  %v1423 = vadd.f32 %v1273, %v1363
  %v1424 = vadd.f32 %v1274, %v1368
  %v1425 = vadd.f32 %v1275, %v1371
  %v1426 = vadd.f32 %v1276, %v1376
  %v1427 = vadd.f32 %v1277, %v1379
  %v1428 = vadd.f32 %v1278, %v1384
  %v1429 = vadd.f32 %v1279, %v1387
  %v1430 = vadd.f32 %v1280, %v1392
  %v1431 = vadd.f32 %v1281, %v1395
  %v1432 = vadd.f32 %v1282, %v1400
  %v1433 = vadd.f32 %v1283, %v1403
  %v1434 = vadd.f32 %v1284, %v1408
  %v1435 = vadd.f32 %v1285, %v1411
  %v1436 = vadd.f32 %v1286, %v1416
  %v1437 = vadd.f32 %v1287, %v1419
  %1438 = vst.msk [vmem:[#allocation3] sm:$0xff] %vm133, %v1422
  %1439 = vst.msk [vmem:[#allocation3 + $0x8] sm:$0xff] %vm133, %v1423
  %1440 = vst.msk [vmem:[#allocation3 + $0x10] sm:$0xff] %vm133, %v1424
  %1441 = vst.msk [vmem:[#allocation3 + $0x18] sm:$0xff] %vm133, %v1425
  %1442 = vst.msk [vmem:[#allocation3 + $0x20] sm:$0xff] %vm133, %v1426
  %1443 = vst.msk [vmem:[#allocation3 + $0x28] sm:$0xff] %vm133, %v1427
  %1444 = vst.msk [vmem:[#allocation3 + $0x30] sm:$0xff] %vm133, %v1428
  %1445 = vst.msk [vmem:[#allocation3 + $0x38] sm:$0xff] %vm133, %v1429
  %1446 = vst.msk [vmem:[#allocation3 + $0x40] sm:$0xff] %vm133, %v1430
  %1447 = vst.msk [vmem:[#allocation3 + $0x48] sm:$0xff] %vm133, %v1431
  %1448 = vst.msk [vmem:[#allocation3 + $0x50] sm:$0xff] %vm133, %v1432
  %1449 = vst.msk [vmem:[#allocation3 + $0x58] sm:$0xff] %vm133, %v1433
  %1450 = vst.msk [vmem:[#allocation3 + $0x60] sm:$0xff] %vm133, %v1434
  %1451 = vst.msk [vmem:[#allocation3 + $0x68] sm:$0xff] %vm133, %v1435
  %1452 = vst.msk [vmem:[#allocation3 + $0x70] sm:$0xff] %vm133, %v1436
  %1453 = vst.msk [vmem:[#allocation3 + $0x78] sm:$0xff] %vm133, %v1437
  %v1454 = vld [vmem:[#allocation2 + $0x10] sm:$0xff]
  %v1455 = vld [vmem:[#allocation2 + $0x18] sm:$0xff]
  %v1456 = vld [vmem:[#allocation2 + $0x20] sm:$0xff]
  %v1457 = vld [vmem:[#allocation2 + $0x28] sm:$0xff]
  %v1458 = vld [vmem:[#allocation2 + $0x30] sm:$0xff]
  %v1459 = vld [vmem:[#allocation2 + $0x38] sm:$0xff]
  %v1460 = vld [vmem:[#allocation2 + $0x40] sm:$0xff]
  %v1461 = vld [vmem:[#allocation2 + $0x48] sm:$0xff]
  %v1462 = vld [vmem:[#allocation2 + $0x50] sm:$0xff]
  %v1463 = vld [vmem:[#allocation2 + $0x58] sm:$0xff]
  %v1464 = vld [vmem:[#allocation2 + $0x60] sm:$0xff]
  %v1465 = vld [vmem:[#allocation2 + $0x68] sm:$0xff]
  %v1466 = vld [vmem:[#allocation2 + $0x70] sm:$0xff]
  %v1467 = vld [vmem:[#allocation2 + $0x78] sm:$0xff]
  %v1468 = vld [vmem:[#allocation2 + $0x80] sm:$0xff]
  %v1469 = vld [vmem:[#allocation2 + $0x88] sm:$0xff]
  %v1470 = vld [vmem:[#allocation3] sm:$0xff]
  %v1471 = vld [vmem:[#allocation3 + $0x8] sm:$0xff]
  %v1472 = vld [vmem:[#allocation3 + $0x10] sm:$0xff]
  %v1473 = vld [vmem:[#allocation3 + $0x18] sm:$0xff]
  %v1474 = vld [vmem:[#allocation3 + $0x20] sm:$0xff]
  %v1475 = vld [vmem:[#allocation3 + $0x28] sm:$0xff]
  %v1476 = vld [vmem:[#allocation3 + $0x30] sm:$0xff]
  %v1477 = vld [vmem:[#allocation3 + $0x38] sm:$0xff]
  %v1478 = vld [vmem:[#allocation3 + $0x40] sm:$0xff]
  %v1479 = vld [vmem:[#allocation3 + $0x48] sm:$0xff]
  %v1480 = vld [vmem:[#allocation3 + $0x50] sm:$0xff]
  %v1481 = vld [vmem:[#allocation3 + $0x58] sm:$0xff]
  %v1482 = vld [vmem:[#allocation3 + $0x60] sm:$0xff]
  %v1483 = vld [vmem:[#allocation3 + $0x68] sm:$0xff]
  %v1484 = vld [vmem:[#allocation3 + $0x70] sm:$0xff]
  %v1485 = vld [vmem:[#allocation3 + $0x78] sm:$0xff]
  %v1486 = vpack.c.bf16 %v1455, %v1454
  %v1487 = vpack.c.bf16 %v1457, %v1456
  %v1488 = vpack.c.bf16 %v1459, %v1458
  %v1489 = vpack.c.bf16 %v1461, %v1460
  %v1490 = vpack.c.bf16 %v1463, %v1462
  %v1491 = vpack.c.bf16 %v1465, %v1464
  %v1492 = vpack.c.bf16 %v1467, %v1466
  %v1493 = vpack.c.bf16 %v1469, %v1468
  %s1494 = scalar_lea.vmem %s3, 16
  %v1495 = vld [vmem:[%s1494] sm:$0xf]
  %v1497 = vsel %vm133, %v1486, 0
  %v1500 = vsel %vm133, %v1487, 0
  %v1503 = vsel %vm133, %v1488, 0
  %v1506 = vsel %vm133, %v1489, 0
  %v1509 = vsel %vm133, %v1490, 0
  %v1512 = vsel %vm133, %v1491, 0
  %v1515 = vsel %vm133, %v1492, 0
  %v1518 = vsel %vm133, %v1493, 0
  %v1521 = vsel %vm407, %v1495, 0
  %1523 = vmatprep.subr.bf16.mxu0 0
  %1524 = vmatpush1.bf16.msra.mxu0 %v1521
  %1525 = vmatprep.subr.bf16.mxu0 0
  %1526 = vmatpush1.bf16.msra.mxu0 0
  %1527 = vmatprep.subr.bf16.mxu0 0
  %1528 = vmatpush1.bf16.msra.mxu0 0
  %1529 = vmatprep.subr.bf16.mxu0 0
  %1530 = vmatpush1.bf16.msra.mxu0 0
  %1531 = vmatprep.subr.bf16.mxu0 0
  %1532 = vmatpush1.bf16.msra.mxu0 0
  %1533 = vmatprep.subr.bf16.mxu0 0
  %1534 = vmatpush1.bf16.msra.mxu0 0
  %1535 = vmatprep.subr.bf16.mxu0 0
  %1536 = vmatpush1.bf16.msra.mxu0 0
  %1537 = vmatprep.subr.bf16.mxu0 0
  %1538 = vmatpush1.bf16.msra.mxu0 0
  %1539 = vmatprep.subr.bf16.mxu0 0
  %1540 = vmatpush1.bf16.msra.mxu0 0
  %1541 = vmatprep.subr.bf16.mxu0 0
  %1542 = vmatpush1.bf16.msra.mxu0 0
  %1543 = vmatprep.subr.bf16.mxu0 0
  %1544 = vmatpush1.bf16.msra.mxu0 0
  %1545 = vmatprep.subr.bf16.mxu0 0
  %1546 = vmatpush1.bf16.msra.mxu0 0
  %1547 = vmatprep.subr.bf16.mxu0 0
  %1548 = vmatpush1.bf16.msra.mxu0 0
  %1549 = vmatprep.subr.bf16.mxu0 0
  %1550 = vmatpush1.bf16.msra.mxu0 0
  %1551 = vmatprep.subr.bf16.mxu0 0
  %1552 = vmatpush1.bf16.msra.mxu0 0
  %1553 = vmatprep.subr.bf16.mxu0 0
  %1554 = vmatpush1.bf16.msra.mxu0 0
  %1555 = vmatprep.mubr.bf16.mxu0 0
  %1556 = vmatmul.mubr.bf16.gmra.mrb[0].mxu0 %v1497
  %v1557 = vpop.f32.mrb[0].mxu0
  %v1558 = vadd.f32 0.0, %v1557
  %v1559 = vpop.f32.mrb[0].mxu0
  %v1560 = vpop.f32.mrb[0].mxu0
  %v1561 = vadd.f32 0.0, %v1560
  %v1562 = vpop.f32.mrb[0].mxu0
  %1563 = vmatprep.mubr.bf16.mxu0 0
  %1564 = vmatmul.mubr.bf16.gmra.mrb[0].mxu0 %v1500
  %v1565 = vpop.f32.mrb[0].mxu0
  %v1566 = vadd.f32 0.0, %v1565
  %v1567 = vpop.f32.mrb[0].mxu0
  %v1568 = vpop.f32.mrb[0].mxu0
  %v1569 = vadd.f32 0.0, %v1568
  %v1570 = vpop.f32.mrb[0].mxu0
  %1571 = vmatprep.mubr.bf16.mxu0 0
  %1572 = vmatmul.mubr.bf16.gmra.mrb[0].mxu0 %v1503
  %v1573 = vpop.f32.mrb[0].mxu0
  %v1574 = vadd.f32 0.0, %v1573
  %v1575 = vpop.f32.mrb[0].mxu0
  %v1576 = vpop.f32.mrb[0].mxu0
  %v1577 = vadd.f32 0.0, %v1576
  %v1578 = vpop.f32.mrb[0].mxu0
  %1579 = vmatprep.mubr.bf16.mxu0 0
  %1580 = vmatmul.mubr.bf16.gmra.mrb[0].mxu0 %v1506
  %v1581 = vpop.f32.mrb[0].mxu0
  %v1582 = vadd.f32 0.0, %v1581
  %v1583 = vpop.f32.mrb[0].mxu0
  %v1584 = vpop.f32.mrb[0].mxu0
  %v1585 = vadd.f32 0.0, %v1584
  %v1586 = vpop.f32.mrb[0].mxu0
  %1587 = vmatprep.mubr.bf16.mxu0 0
  %1588 = vmatmul.mubr.bf16.gmra.mrb[0].mxu0 %v1509
  %v1589 = vpop.f32.mrb[0].mxu0
  %v1590 = vadd.f32 0.0, %v1589
  %v1591 = vpop.f32.mrb[0].mxu0
  %v1592 = vpop.f32.mrb[0].mxu0
  %v1593 = vadd.f32 0.0, %v1592
  %v1594 = vpop.f32.mrb[0].mxu0
  %1595 = vmatprep.mubr.bf16.mxu0 0
  %1596 = vmatmul.mubr.bf16.gmra.mrb[0].mxu0 %v1512
  %v1597 = vpop.f32.mrb[0].mxu0
  %v1598 = vadd.f32 0.0, %v1597
  %v1599 = vpop.f32.mrb[0].mxu0
  %v1600 = vpop.f32.mrb[0].mxu0
  %v1601 = vadd.f32 0.0, %v1600
  %v1602 = vpop.f32.mrb[0].mxu0
  %1603 = vmatprep.mubr.bf16.mxu0 0
  %1604 = vmatmul.mubr.bf16.gmra.mrb[0].mxu0 %v1515
  %v1605 = vpop.f32.mrb[0].mxu0
  %v1606 = vadd.f32 0.0, %v1605
  %v1607 = vpop.f32.mrb[0].mxu0
  %v1608 = vpop.f32.mrb[0].mxu0
  %v1609 = vadd.f32 0.0, %v1608
  %v1610 = vpop.f32.mrb[0].mxu0
  %1611 = vmatprep.mubr.bf16.mxu0 0
  %1612 = vmatmul.mubr.bf16.gmra.mrb[0].mxu0 %v1518
  %v1613 = vpop.f32.mrb[0].mxu0
  %v1614 = vadd.f32 0.0, %v1613
  %v1615 = vpop.f32.mrb[0].mxu0
  %v1616 = vpop.f32.mrb[0].mxu0
  %v1617 = vadd.f32 0.0, %v1616
  %v1618 = vpop.f32.mrb[0].mxu0
  %1619 = vdwg.mxu0
  %v1620 = vadd.f32 %v1470, %v1558
  %v1621 = vadd.f32 %v1471, %v1561
  %v1622 = vadd.f32 %v1472, %v1566
  %v1623 = vadd.f32 %v1473, %v1569
  %v1624 = vadd.f32 %v1474, %v1574
  %v1625 = vadd.f32 %v1475, %v1577
  %v1626 = vadd.f32 %v1476, %v1582
  %v1627 = vadd.f32 %v1477, %v1585
  %v1628 = vadd.f32 %v1478, %v1590
  %v1629 = vadd.f32 %v1479, %v1593
  %v1630 = vadd.f32 %v1480, %v1598
  %v1631 = vadd.f32 %v1481, %v1601
  %v1632 = vadd.f32 %v1482, %v1606
  %v1633 = vadd.f32 %v1483, %v1609
  %v1634 = vadd.f32 %v1484, %v1614
  %v1635 = vadd.f32 %v1485, %v1617
  %1636 = vst.msk [vmem:[#allocation3] sm:$0xff] %vm133, %v1620
  %1637 = vst.msk [vmem:[#allocation3 + $0x8] sm:$0xff] %vm133, %v1621
  %1638 = vst.msk [vmem:[#allocation3 + $0x10] sm:$0xff] %vm133, %v1622
  %1639 = vst.msk [vmem:[#allocation3 + $0x18] sm:$0xff] %vm133, %v1623
  %1640 = vst.msk [vmem:[#allocation3 + $0x20] sm:$0xff] %vm133, %v1624
  %1641 = vst.msk [vmem:[#allocation3 + $0x28] sm:$0xff] %vm133, %v1625
  %1642 = vst.msk [vmem:[#allocation3 + $0x30] sm:$0xff] %vm133, %v1626
  %1643 = vst.msk [vmem:[#allocation3 + $0x38] sm:$0xff] %vm133, %v1627
  %1644 = vst.msk [vmem:[#allocation3 + $0x40] sm:$0xff] %vm133, %v1628
  %1645 = vst.msk [vmem:[#allocation3 + $0x48] sm:$0xff] %vm133, %v1629
  %1646 = vst.msk [vmem:[#allocation3 + $0x50] sm:$0xff] %vm133, %v1630
  %1647 = vst.msk [vmem:[#allocation3 + $0x58] sm:$0xff] %vm133, %v1631
  %1648 = vst.msk [vmem:[#allocation3 + $0x60] sm:$0xff] %vm133, %v1632
  %1649 = vst.msk [vmem:[#allocation3 + $0x68] sm:$0xff] %vm133, %v1633
  %1650 = vst.msk [vmem:[#allocation3 + $0x70] sm:$0xff] %vm133, %v1634
  %1651 = vst.msk [vmem:[#allocation3 + $0x78] sm:$0xff] %vm133, %v1635
  %v1652 = vld [vmem:[#allocation2 + $0x11] sm:$0xff]
  %v1653 = vld [vmem:[#allocation2 + $0x19] sm:$0xff]
  %v1654 = vld [vmem:[#allocation2 + $0x21] sm:$0xff]
  %v1655 = vld [vmem:[#allocation2 + $0x29] sm:$0xff]
  %v1656 = vld [vmem:[#allocation2 + $0x31] sm:$0xff]
  %v1657 = vld [vmem:[#allocation2 + $0x39] sm:$0xff]
  %v1658 = vld [vmem:[#allocation2 + $0x41] sm:$0xff]
  %v1659 = vld [vmem:[#allocation2 + $0x49] sm:$0xff]
  %v1660 = vld [vmem:[#allocation2 + $0x51] sm:$0xff]
  %v1661 = vld [vmem:[#allocation2 + $0x59] sm:$0xff]
  %v1662 = vld [vmem:[#allocation2 + $0x61] sm:$0xff]
  %v1663 = vld [vmem:[#allocation2 + $0x69] sm:$0xff]
  %v1664 = vld [vmem:[#allocation2 + $0x71] sm:$0xff]
  %v1665 = vld [vmem:[#allocation2 + $0x79] sm:$0xff]
  %v1666 = vld [vmem:[#allocation2 + $0x81] sm:$0xff]
  %v1667 = vld [vmem:[#allocation2 + $0x89] sm:$0xff]
  %v1668 = vsel %vm850, 1, 0
  %v1669 = vsel %vm851, 1, 0
  %v1670 = vsel %vm852, 1, 0
  %v1671 = vsel %vm853, 1, 0
  %v1672 = vsel %vm854, 1, 0
  %v1673 = vsel %vm855, 1, 0
  %v1674 = vsel %vm856, 1, 0
  %v1675 = vsel %vm857, 1, 0
  %v1676 = vsel %vm858, 1, 0
  %v1677 = vsel %vm859, 1, 0
  %v1678 = vsel %vm860, 1, 0
  %v1679 = vsel %vm861, 1, 0
  %v1680 = vsel %vm862, 1, 0
  %v1681 = vsel %vm863, 1, 0
  %v1682 = vsel %vm864, 1, 0
  %v1683 = vsel %vm865, 1, 0
  %1684 = vset.pattern.permute.xlu0 0
  %1685 = vperm.xlu0 %1684, %v1668
  %v1686 = vpop.permute.xlu0 %1685
  %1687 = vset.pattern.permute.xlu0 0
  %1688 = vperm.xlu0 %1687, %v1669
  %v1689 = vpop.permute.xlu0 %1688
  %1690 = vset.pattern.permute.xlu0 0
  %1691 = vperm.xlu0 %1690, %v1670
  %v1692 = vpop.permute.xlu0 %1691
  %1693 = vset.pattern.permute.xlu0 0
  %1694 = vperm.xlu0 %1693, %v1671
  %v1695 = vpop.permute.xlu0 %1694
  %1696 = vset.pattern.permute.xlu0 0
  %1697 = vperm.xlu0 %1696, %v1672
  %v1698 = vpop.permute.xlu0 %1697
  %1699 = vset.pattern.permute.xlu0 0
  %1700 = vperm.xlu0 %1699, %v1673
  %v1701 = vpop.permute.xlu0 %1700
  %1702 = vset.pattern.permute.xlu0 0
  %1703 = vperm.xlu0 %1702, %v1674
  %v1704 = vpop.permute.xlu0 %1703
  %1705 = vset.pattern.permute.xlu0 0
  %1706 = vperm.xlu0 %1705, %v1675
  %v1707 = vpop.permute.xlu0 %1706
  %1708 = vset.pattern.permute.xlu0 0
  %1709 = vperm.xlu0 %1708, %v1676
  %v1710 = vpop.permute.xlu0 %1709
  %1711 = vset.pattern.permute.xlu0 0
  %1712 = vperm.xlu0 %1711, %v1677
  %v1713 = vpop.permute.xlu0 %1712
  %1714 = vset.pattern.permute.xlu0 0
  %1715 = vperm.xlu0 %1714, %v1678
  %v1716 = vpop.permute.xlu0 %1715
  %1717 = vset.pattern.permute.xlu0 0
  %1718 = vperm.xlu0 %1717, %v1679
  %v1719 = vpop.permute.xlu0 %1718
  %1720 = vset.pattern.permute.xlu0 0
  %1721 = vperm.xlu0 %1720, %v1680
  %v1722 = vpop.permute.xlu0 %1721
  %1723 = vset.pattern.permute.xlu0 0
  %1724 = vperm.xlu0 %1723, %v1681
  %v1725 = vpop.permute.xlu0 %1724
  %1726 = vset.pattern.permute.xlu0 0
  %1727 = vperm.xlu0 %1726, %v1682
  %v1728 = vpop.permute.xlu0 %1727
  %1729 = vset.pattern.permute.xlu0 0
  %1730 = vperm.xlu0 %1729, %v1683
  %v1731 = vpop.permute.xlu0 %1730
  %vm1732 = vcmp.eq.s32.totalorder %v1686, 1
  %vm1733 = vcmp.eq.s32.totalorder %v1689, 1
  %vm1734 = vcmp.eq.s32.totalorder %v1692, 1
  %vm1735 = vcmp.eq.s32.totalorder %v1695, 1
  %vm1736 = vcmp.eq.s32.totalorder %v1698, 1
  %vm1737 = vcmp.eq.s32.totalorder %v1701, 1
  %vm1738 = vcmp.eq.s32.totalorder %v1704, 1
  %vm1739 = vcmp.eq.s32.totalorder %v1707, 1
  %vm1740 = vcmp.eq.s32.totalorder %v1710, 1
  %vm1741 = vcmp.eq.s32.totalorder %v1713, 1
  %vm1742 = vcmp.eq.s32.totalorder %v1716, 1
  %vm1743 = vcmp.eq.s32.totalorder %v1719, 1
  %vm1744 = vcmp.eq.s32.totalorder %v1722, 1
  %vm1745 = vcmp.eq.s32.totalorder %v1725, 1
  %vm1746 = vcmp.eq.s32.totalorder %v1728, 1
  %vm1747 = vcmp.eq.s32.totalorder %v1731, 1
  %v1748 = vsel %vm1732, %v1652, 0.0
  %v1749 = vsel %vm1733, %v1653, 0.0
  %v1750 = vsel %vm1734, %v1654, 0.0
  %v1751 = vsel %vm1735, %v1655, 0.0
  %v1752 = vsel %vm1736, %v1656, 0.0
  %v1753 = vsel %vm1737, %v1657, 0.0
  %v1754 = vsel %vm1738, %v1658, 0.0
  %v1755 = vsel %vm1739, %v1659, 0.0
  %v1756 = vsel %vm1740, %v1660, 0.0
  %v1757 = vsel %vm1741, %v1661, 0.0
  %v1758 = vsel %vm1742, %v1662, 0.0
  %v1759 = vsel %vm1743, %v1663, 0.0
  %v1760 = vsel %vm1744, %v1664, 0.0
  %v1761 = vsel %vm1745, %v1665, 0.0
  %v1762 = vsel %vm1746, %v1666, 0.0
  %v1763 = vsel %vm1747, %v1667, 0.0
  %v1764 = vld [vmem:[#allocation3] sm:$0xff]
  %v1765 = vld [vmem:[#allocation3 + $0x8] sm:$0xff]
  %v1766 = vld [vmem:[#allocation3 + $0x10] sm:$0xff]
  %v1767 = vld [vmem:[#allocation3 + $0x18] sm:$0xff]
  %v1768 = vld [vmem:[#allocation3 + $0x20] sm:$0xff]
  %v1769 = vld [vmem:[#allocation3 + $0x28] sm:$0xff]
  %v1770 = vld [vmem:[#allocation3 + $0x30] sm:$0xff]
  %v1771 = vld [vmem:[#allocation3 + $0x38] sm:$0xff]
  %v1772 = vld [vmem:[#allocation3 + $0x40] sm:$0xff]
  %v1773 = vld [vmem:[#allocation3 + $0x48] sm:$0xff]
  %v1774 = vld [vmem:[#allocation3 + $0x50] sm:$0xff]
  %v1775 = vld [vmem:[#allocation3 + $0x58] sm:$0xff]
  %v1776 = vld [vmem:[#allocation3 + $0x60] sm:$0xff]
  %v1777 = vld [vmem:[#allocation3 + $0x68] sm:$0xff]
  %v1778 = vld [vmem:[#allocation3 + $0x70] sm:$0xff]
  %v1779 = vld [vmem:[#allocation3 + $0x78] sm:$0xff]
  %v1780 = vpack.c.bf16 %v1749, %v1748
  %v1781 = vpack.c.bf16 %v1751, %v1750
  %v1782 = vpack.c.bf16 %v1753, %v1752
  %v1783 = vpack.c.bf16 %v1755, %v1754
  %v1784 = vpack.c.bf16 %v1757, %v1756
  %v1785 = vpack.c.bf16 %v1759, %v1758
  %v1786 = vpack.c.bf16 %v1761, %v1760
  %v1787 = vpack.c.bf16 %v1763, %v1762
  %s1788 = scalar_lea.vmem %s3, 20
  %v1789 = vld [vmem:[%s1788] sm:$0xf]
  %v1791 = vsel %vm133, %v1780, 0
  %v1794 = vsel %vm133, %v1781, 0
  %v1797 = vsel %vm133, %v1782, 0
  %v1800 = vsel %vm133, %v1783, 0
  %v1803 = vsel %vm133, %v1784, 0
  %v1806 = vsel %vm133, %v1785, 0
  %v1809 = vsel %vm133, %v1786, 0
  %v1812 = vsel %vm133, %v1787, 0
  %v1815 = vsel %vm407, %v1789, 0
  %1817 = vmatprep.subr.bf16.mxu0 0
  %1818 = vmatpush1.bf16.msra.mxu0 %v1815
  %1819 = vmatprep.subr.bf16.mxu0 0
  %1820 = vmatpush1.bf16.msra.mxu0 0
  %1821 = vmatprep.subr.bf16.mxu0 0
  %1822 = vmatpush1.bf16.msra.mxu0 0
  %1823 = vmatprep.subr.bf16.mxu0 0
  %1824 = vmatpush1.bf16.msra.mxu0 0
  %1825 = vmatprep.subr.bf16.mxu0 0
  %1826 = vmatpush1.bf16.msra.mxu0 0
  %1827 = vmatprep.subr.bf16.mxu0 0
  %1828 = vmatpush1.bf16.msra.mxu0 0
  %1829 = vmatprep.subr.bf16.mxu0 0
  %1830 = vmatpush1.bf16.msra.mxu0 0
  %1831 = vmatprep.subr.bf16.mxu0 0
  %1832 = vmatpush1.bf16.msra.mxu0 0
  %1833 = vmatprep.subr.bf16.mxu0 0
  %1834 = vmatpush1.bf16.msra.mxu0 0
  %1835 = vmatprep.subr.bf16.mxu0 0
  %1836 = vmatpush1.bf16.msra.mxu0 0
  %1837 = vmatprep.subr.bf16.mxu0 0
  %1838 = vmatpush1.bf16.msra.mxu0 0
  %1839 = vmatprep.subr.bf16.mxu0 0
  %1840 = vmatpush1.bf16.msra.mxu0 0
  %1841 = vmatprep.subr.bf16.mxu0 0
  %1842 = vmatpush1.bf16.msra.mxu0 0
  %1843 = vmatprep.subr.bf16.mxu0 0
  %1844 = vmatpush1.bf16.msra.mxu0 0
  %1845 = vmatprep.subr.bf16.mxu0 0
  %1846 = vmatpush1.bf16.msra.mxu0 0
  %1847 = vmatprep.subr.bf16.mxu0 0
  %1848 = vmatpush1.bf16.msra.mxu0 0
  %1849 = vmatprep.mubr.bf16.mxu0 0
  %1850 = vmatmul.mubr.bf16.gmra.mrb[0].mxu0 %v1791
  %v1851 = vpop.f32.mrb[0].mxu0
  %v1852 = vadd.f32 0.0, %v1851
  %v1853 = vpop.f32.mrb[0].mxu0
  %v1854 = vpop.f32.mrb[0].mxu0
  %v1855 = vadd.f32 0.0, %v1854
  %v1856 = vpop.f32.mrb[0].mxu0
  %1857 = vmatprep.mubr.bf16.mxu0 0
  %1858 = vmatmul.mubr.bf16.gmra.mrb[0].mxu0 %v1794
  %v1859 = vpop.f32.mrb[0].mxu0
  %v1860 = vadd.f32 0.0, %v1859
  %v1861 = vpop.f32.mrb[0].mxu0
  %v1862 = vpop.f32.mrb[0].mxu0
  %v1863 = vadd.f32 0.0, %v1862
  %v1864 = vpop.f32.mrb[0].mxu0
  %1865 = vmatprep.mubr.bf16.mxu0 0
  %1866 = vmatmul.mubr.bf16.gmra.mrb[0].mxu0 %v1797
  %v1867 = vpop.f32.mrb[0].mxu0
  %v1868 = vadd.f32 0.0, %v1867
  %v1869 = vpop.f32.mrb[0].mxu0
  %v1870 = vpop.f32.mrb[0].mxu0
  %v1871 = vadd.f32 0.0, %v1870
  %v1872 = vpop.f32.mrb[0].mxu0
  %1873 = vmatprep.mubr.bf16.mxu0 0
  %1874 = vmatmul.mubr.bf16.gmra.mrb[0].mxu0 %v1800
  %v1875 = vpop.f32.mrb[0].mxu0
  %v1876 = vadd.f32 0.0, %v1875
  %v1877 = vpop.f32.mrb[0].mxu0
  %v1878 = vpop.f32.mrb[0].mxu0
  %v1879 = vadd.f32 0.0, %v1878
  %v1880 = vpop.f32.mrb[0].mxu0
  %1881 = vmatprep.mubr.bf16.mxu0 0
  %1882 = vmatmul.mubr.bf16.gmra.mrb[0].mxu0 %v1803
  %v1883 = vpop.f32.mrb[0].mxu0
  %v1884 = vadd.f32 0.0, %v1883
  %v1885 = vpop.f32.mrb[0].mxu0
  %v1886 = vpop.f32.mrb[0].mxu0
  %v1887 = vadd.f32 0.0, %v1886
  %v1888 = vpop.f32.mrb[0].mxu0
  %1889 = vmatprep.mubr.bf16.mxu0 0
  %1890 = vmatmul.mubr.bf16.gmra.mrb[0].mxu0 %v1806
  %v1891 = vpop.f32.mrb[0].mxu0
  %v1892 = vadd.f32 0.0, %v1891
  %v1893 = vpop.f32.mrb[0].mxu0
  %v1894 = vpop.f32.mrb[0].mxu0
  %v1895 = vadd.f32 0.0, %v1894
  %v1896 = vpop.f32.mrb[0].mxu0
  %1897 = vmatprep.mubr.bf16.mxu0 0
  %1898 = vmatmul.mubr.bf16.gmra.mrb[0].mxu0 %v1809
  %v1899 = vpop.f32.mrb[0].mxu0
  %v1900 = vadd.f32 0.0, %v1899
  %v1901 = vpop.f32.mrb[0].mxu0
  %v1902 = vpop.f32.mrb[0].mxu0
  %v1903 = vadd.f32 0.0, %v1902
  %v1904 = vpop.f32.mrb[0].mxu0
  %1905 = vmatprep.mubr.bf16.mxu0 0
  %1906 = vmatmul.mubr.bf16.gmra.mrb[0].mxu0 %v1812
  %v1907 = vpop.f32.mrb[0].mxu0
  %v1908 = vadd.f32 0.0, %v1907
  %v1909 = vpop.f32.mrb[0].mxu0
  %v1910 = vpop.f32.mrb[0].mxu0
  %v1911 = vadd.f32 0.0, %v1910
  %v1912 = vpop.f32.mrb[0].mxu0
  %1913 = vdwg.mxu0
  %v1914 = vadd.f32 %v1764, %v1852
  %v1915 = vadd.f32 %v1765, %v1855
  %v1916 = vadd.f32 %v1766, %v1860
  %v1917 = vadd.f32 %v1767, %v1863
  %v1918 = vadd.f32 %v1768, %v1868
  %v1919 = vadd.f32 %v1769, %v1871
  %v1920 = vadd.f32 %v1770, %v1876
  %v1921 = vadd.f32 %v1771, %v1879
  %v1922 = vadd.f32 %v1772, %v1884
  %v1923 = vadd.f32 %v1773, %v1887
  %v1924 = vadd.f32 %v1774, %v1892
  %v1925 = vadd.f32 %v1775, %v1895
  %v1926 = vadd.f32 %v1776, %v1900
  %v1927 = vadd.f32 %v1777, %v1903
  %v1928 = vadd.f32 %v1778, %v1908
  %v1929 = vadd.f32 %v1779, %v1911
  %1930 = vst.msk [vmem:[#allocation3] sm:$0xff] %vm133, %v1914
  %1931 = vst.msk [vmem:[#allocation3 + $0x8] sm:$0xff] %vm133, %v1915
  %1932 = vst.msk [vmem:[#allocation3 + $0x10] sm:$0xff] %vm133, %v1916
  %1933 = vst.msk [vmem:[#allocation3 + $0x18] sm:$0xff] %vm133, %v1917
  %1934 = vst.msk [vmem:[#allocation3 + $0x20] sm:$0xff] %vm133, %v1918
  %1935 = vst.msk [vmem:[#allocation3 + $0x28] sm:$0xff] %vm133, %v1919
  %1936 = vst.msk [vmem:[#allocation3 + $0x30] sm:$0xff] %vm133, %v1920
  %1937 = vst.msk [vmem:[#allocation3 + $0x38] sm:$0xff] %vm133, %v1921
  %1938 = vst.msk [vmem:[#allocation3 + $0x40] sm:$0xff] %vm133, %v1922
  %1939 = vst.msk [vmem:[#allocation3 + $0x48] sm:$0xff] %vm133, %v1923
  %1940 = vst.msk [vmem:[#allocation3 + $0x50] sm:$0xff] %vm133, %v1924
  %1941 = vst.msk [vmem:[#allocation3 + $0x58] sm:$0xff] %vm133, %v1925
  %1942 = vst.msk [vmem:[#allocation3 + $0x60] sm:$0xff] %vm133, %v1926
  %1943 = vst.msk [vmem:[#allocation3 + $0x68] sm:$0xff] %vm133, %v1927
  %1944 = vst.msk [vmem:[#allocation3 + $0x70] sm:$0xff] %vm133, %v1928
  %1945 = vst.msk [vmem:[#allocation3 + $0x78] sm:$0xff] %vm133, %v1929
  %v1946 = vld [vmem:[#allocation2 + $0x17] sm:$0xff]
  %v1947 = vld [vmem:[#allocation2 + $0x1f] sm:$0xff]
  %v1948 = vld [vmem:[#allocation2 + $0x27] sm:$0xff]
  %v1949 = vld [vmem:[#allocation2 + $0x2f] sm:$0xff]
  %v1950 = vld [vmem:[#allocation2 + $0x37] sm:$0xff]
  %v1951 = vld [vmem:[#allocation2 + $0x3f] sm:$0xff]
  %v1952 = vld [vmem:[#allocation2 + $0x47] sm:$0xff]
  %v1953 = vld [vmem:[#allocation2 + $0x4f] sm:$0xff]
  %v1954 = vld [vmem:[#allocation2 + $0x57] sm:$0xff]
  %v1955 = vld [vmem:[#allocation2 + $0x5f] sm:$0xff]
  %v1956 = vld [vmem:[#allocation2 + $0x67] sm:$0xff]
  %v1957 = vld [vmem:[#allocation2 + $0x6f] sm:$0xff]
  %v1958 = vld [vmem:[#allocation2 + $0x77] sm:$0xff]
  %v1959 = vld [vmem:[#allocation2 + $0x7f] sm:$0xff]
  %v1960 = vld [vmem:[#allocation2 + $0x87] sm:$0xff]
  %v1961 = vld [vmem:[#allocation2 + $0x8f] sm:$0xff]
  %vm1962 = vcmp.lt.s32.totalorder %v150, 7
  %vm1963 = vcmp.lt.s32.totalorder %v151, 7
  %vm1964 = vcmp.lt.s32.totalorder %v152, 7
  %vm1965 = vcmp.lt.s32.totalorder %v153, 7
  %vm1966 = vcmp.lt.s32.totalorder %v154, 7
  %vm1967 = vcmp.lt.s32.totalorder %v155, 7
  %vm1968 = vcmp.lt.s32.totalorder %v156, 7
  %vm1969 = vcmp.lt.s32.totalorder %v157, 7
  %vm1970 = vcmp.lt.s32.totalorder %v158, 7
  %vm1971 = vcmp.lt.s32.totalorder %v159, 7
  %vm1972 = vcmp.lt.s32.totalorder %v160, 7
  %vm1973 = vcmp.lt.s32.totalorder %v161, 7
  %vm1974 = vcmp.lt.s32.totalorder %v162, 7
  %vm1975 = vcmp.lt.s32.totalorder %v163, 7
  %vm1976 = vcmp.lt.s32.totalorder %v164, 7
  %vm1977 = vcmp.lt.s32.totalorder %v165, 7
  %vm1978 = vmand %vm1962, %vm230
  %vm1979 = vmand %vm1963, %vm231
  %vm1980 = vmand %vm1964, %vm232
  %vm1981 = vmand %vm1965, %vm233
  %vm1982 = vmand %vm1966, %vm234
  %vm1983 = vmand %vm1967, %vm235
  %vm1984 = vmand %vm1968, %vm236
  %vm1985 = vmand %vm1969, %vm237
  %vm1986 = vmand %vm1970, %vm238
  %vm1987 = vmand %vm1971, %vm239
  %vm1988 = vmand %vm1972, %vm240
  %vm1989 = vmand %vm1973, %vm241
  %vm1990 = vmand %vm1974, %vm242
  %vm1991 = vmand %vm1975, %vm243
  %vm1992 = vmand %vm1976, %vm244
  %vm1993 = vmand %vm1977, %vm245
  %v1994 = vsel %vm1978, 1, 0
  %v1995 = vsel %vm1979, 1, 0
  %v1996 = vsel %vm1980, 1, 0
  %v1997 = vsel %vm1981, 1, 0
  %v1998 = vsel %vm1982, 1, 0
  %v1999 = vsel %vm1983, 1, 0
  %v2000 = vsel %vm1984, 1, 0
  %v2001 = vsel %vm1985, 1, 0
  %v2002 = vsel %vm1986, 1, 0
  %v2003 = vsel %vm1987, 1, 0
  %v2004 = vsel %vm1988, 1, 0
  %v2005 = vsel %vm1989, 1, 0
  %v2006 = vsel %vm1990, 1, 0
  %v2007 = vsel %vm1991, 1, 0
  %v2008 = vsel %vm1992, 1, 0
  %v2009 = vsel %vm1993, 1, 0
  %2010 = vset.pattern.permute.xlu0 0
  %2011 = vperm.xlu0 %2010, %v1994
  %v2012 = vpop.permute.xlu0 %2011
  %2013 = vset.pattern.permute.xlu0 0
  %2014 = vperm.xlu0 %2013, %v1995
  %v2015 = vpop.permute.xlu0 %2014
  %2016 = vset.pattern.permute.xlu0 0
  %2017 = vperm.xlu0 %2016, %v1996
  %v2018 = vpop.permute.xlu0 %2017
  %2019 = vset.pattern.permute.xlu0 0
  %2020 = vperm.xlu0 %2019, %v1997
  %v2021 = vpop.permute.xlu0 %2020
  %2022 = vset.pattern.permute.xlu0 0
  %2023 = vperm.xlu0 %2022, %v1998
  %v2024 = vpop.permute.xlu0 %2023
  %2025 = vset.pattern.permute.xlu0 0
  %2026 = vperm.xlu0 %2025, %v1999
  %v2027 = vpop.permute.xlu0 %2026
  %2028 = vset.pattern.permute.xlu0 0
  %2029 = vperm.xlu0 %2028, %v2000
  %v2030 = vpop.permute.xlu0 %2029
  %2031 = vset.pattern.permute.xlu0 0
  %2032 = vperm.xlu0 %2031, %v2001
  %v2033 = vpop.permute.xlu0 %2032
  %2034 = vset.pattern.permute.xlu0 0
  %2035 = vperm.xlu0 %2034, %v2002
  %v2036 = vpop.permute.xlu0 %2035
  %2037 = vset.pattern.permute.xlu0 0
  %2038 = vperm.xlu0 %2037, %v2003
  %v2039 = vpop.permute.xlu0 %2038
  %2040 = vset.pattern.permute.xlu0 0
  %2041 = vperm.xlu0 %2040, %v2004
  %v2042 = vpop.permute.xlu0 %2041
  %2043 = vset.pattern.permute.xlu0 0
  %2044 = vperm.xlu0 %2043, %v2005
  %v2045 = vpop.permute.xlu0 %2044
  %2046 = vset.pattern.permute.xlu0 0
  %2047 = vperm.xlu0 %2046, %v2006
  %v2048 = vpop.permute.xlu0 %2047
  %2049 = vset.pattern.permute.xlu0 0
  %2050 = vperm.xlu0 %2049, %v2007
  %v2051 = vpop.permute.xlu0 %2050
  %2052 = vset.pattern.permute.xlu0 0
  %2053 = vperm.xlu0 %2052, %v2008
  %v2054 = vpop.permute.xlu0 %2053
  %2055 = vset.pattern.permute.xlu0 0
  %2056 = vperm.xlu0 %2055, %v2009
  %v2057 = vpop.permute.xlu0 %2056
  %vm2058 = vcmp.eq.s32.totalorder %v2012, 1
  %vm2059 = vcmp.eq.s32.totalorder %v2015, 1
  %vm2060 = vcmp.eq.s32.totalorder %v2018, 1
  %vm2061 = vcmp.eq.s32.totalorder %v2021, 1
  %vm2062 = vcmp.eq.s32.totalorder %v2024, 1
  %vm2063 = vcmp.eq.s32.totalorder %v2027, 1
  %vm2064 = vcmp.eq.s32.totalorder %v2030, 1
  %vm2065 = vcmp.eq.s32.totalorder %v2033, 1
  %vm2066 = vcmp.eq.s32.totalorder %v2036, 1
  %vm2067 = vcmp.eq.s32.totalorder %v2039, 1
  %vm2068 = vcmp.eq.s32.totalorder %v2042, 1
  %vm2069 = vcmp.eq.s32.totalorder %v2045, 1
  %vm2070 = vcmp.eq.s32.totalorder %v2048, 1
  %vm2071 = vcmp.eq.s32.totalorder %v2051, 1
  %vm2072 = vcmp.eq.s32.totalorder %v2054, 1
  %vm2073 = vcmp.eq.s32.totalorder %v2057, 1
  %v2074 = vsel %vm2058, %v1946, 0.0
  %v2075 = vsel %vm2059, %v1947, 0.0
  %v2076 = vsel %vm2060, %v1948, 0.0
  %v2077 = vsel %vm2061, %v1949, 0.0
  %v2078 = vsel %vm2062, %v1950, 0.0
  %v2079 = vsel %vm2063, %v1951, 0.0
  %v2080 = vsel %vm2064, %v1952, 0.0
  %v2081 = vsel %vm2065, %v1953, 0.0
  %v2082 = vsel %vm2066, %v1954, 0.0
  %v2083 = vsel %vm2067, %v1955, 0.0
  %v2084 = vsel %vm2068, %v1956, 0.0
  %v2085 = vsel %vm2069, %v1957, 0.0
  %v2086 = vsel %vm2070, %v1958, 0.0
  %v2087 = vsel %vm2071, %v1959, 0.0
  %v2088 = vsel %vm2072, %v1960, 0.0
  %v2089 = vsel %vm2073, %v1961, 0.0
  %v2090 = vld [vmem:[#allocation3] sm:$0xff]
  %v2091 = vld [vmem:[#allocation3 + $0x8] sm:$0xff]
  %v2092 = vld [vmem:[#allocation3 + $0x10] sm:$0xff]
  %v2093 = vld [vmem:[#allocation3 + $0x18] sm:$0xff]
  %v2094 = vld [vmem:[#allocation3 + $0x20] sm:$0xff]
  %v2095 = vld [vmem:[#allocation3 + $0x28] sm:$0xff]
  %v2096 = vld [vmem:[#allocation3 + $0x30] sm:$0xff]
  %v2097 = vld [vmem:[#allocation3 + $0x38] sm:$0xff]
  %v2098 = vld [vmem:[#allocation3 + $0x40] sm:$0xff]
  %v2099 = vld [vmem:[#allocation3 + $0x48] sm:$0xff]
  %v2100 = vld [vmem:[#allocation3 + $0x50] sm:$0xff]
  %v2101 = vld [vmem:[#allocation3 + $0x58] sm:$0xff]
  %v2102 = vld [vmem:[#allocation3 + $0x60] sm:$0xff]
  %v2103 = vld [vmem:[#allocation3 + $0x68] sm:$0xff]
  %v2104 = vld [vmem:[#allocation3 + $0x70] sm:$0xff]
  %v2105 = vld [vmem:[#allocation3 + $0x78] sm:$0xff]
  %v2106 = vpack.c.bf16 %v2075, %v2074
  %v2107 = vpack.c.bf16 %v2077, %v2076
  %v2108 = vpack.c.bf16 %v2079, %v2078
  %v2109 = vpack.c.bf16 %v2081, %v2080
  %v2110 = vpack.c.bf16 %v2083, %v2082
  %v2111 = vpack.c.bf16 %v2085, %v2084
  %v2112 = vpack.c.bf16 %v2087, %v2086
  %v2113 = vpack.c.bf16 %v2089, %v2088
  %s2114 = scalar_lea.vmem %s3, 24
  %v2115 = vld [vmem:[%s2114] sm:$0xf]
  %v2117 = vsel %vm133, %v2106, 0
  %v2120 = vsel %vm133, %v2107, 0
  %v2123 = vsel %vm133, %v2108, 0
  %v2126 = vsel %vm133, %v2109, 0
  %v2129 = vsel %vm133, %v2110, 0
  %v2132 = vsel %vm133, %v2111, 0
  %v2135 = vsel %vm133, %v2112, 0
  %v2138 = vsel %vm133, %v2113, 0
  %v2141 = vsel %vm407, %v2115, 0
  %2143 = vmatprep.subr.bf16.mxu0 0
  %2144 = vmatpush1.bf16.msra.mxu0 %v2141
  %2145 = vmatprep.subr.bf16.mxu0 0
  %2146 = vmatpush1.bf16.msra.mxu0 0
  %2147 = vmatprep.subr.bf16.mxu0 0
  %2148 = vmatpush1.bf16.msra.mxu0 0
  %2149 = vmatprep.subr.bf16.mxu0 0
  %2150 = vmatpush1.bf16.msra.mxu0 0
  %2151 = vmatprep.subr.bf16.mxu0 0
  %2152 = vmatpush1.bf16.msra.mxu0 0
  %2153 = vmatprep.subr.bf16.mxu0 0
  %2154 = vmatpush1.bf16.msra.mxu0 0
  %2155 = vmatprep.subr.bf16.mxu0 0
  %2156 = vmatpush1.bf16.msra.mxu0 0
  %2157 = vmatprep.subr.bf16.mxu0 0
  %2158 = vmatpush1.bf16.msra.mxu0 0
  %2159 = vmatprep.subr.bf16.mxu0 0
  %2160 = vmatpush1.bf16.msra.mxu0 0
  %2161 = vmatprep.subr.bf16.mxu0 0
  %2162 = vmatpush1.bf16.msra.mxu0 0
  %2163 = vmatprep.subr.bf16.mxu0 0
  %2164 = vmatpush1.bf16.msra.mxu0 0
  %2165 = vmatprep.subr.bf16.mxu0 0
  %2166 = vmatpush1.bf16.msra.mxu0 0
  %2167 = vmatprep.subr.bf16.mxu0 0
  %2168 = vmatpush1.bf16.msra.mxu0 0
  %2169 = vmatprep.subr.bf16.mxu0 0
  %2170 = vmatpush1.bf16.msra.mxu0 0
  %2171 = vmatprep.subr.bf16.mxu0 0
  %2172 = vmatpush1.bf16.msra.mxu0 0
  %2173 = vmatprep.subr.bf16.mxu0 0
  %2174 = vmatpush1.bf16.msra.mxu0 0
  %2175 = vmatprep.mubr.bf16.mxu0 0
  %2176 = vmatmul.mubr.bf16.gmra.mrb[0].mxu0 %v2117
  %v2177 = vpop.f32.mrb[0].mxu0
  %v2178 = vadd.f32 0.0, %v2177
  %v2179 = vpop.f32.mrb[0].mxu0
  %v2180 = vpop.f32.mrb[0].mxu0
  %v2181 = vadd.f32 0.0, %v2180
  %v2182 = vpop.f32.mrb[0].mxu0
  %2183 = vmatprep.mubr.bf16.mxu0 0
  %2184 = vmatmul.mubr.bf16.gmra.mrb[0].mxu0 %v2120
  %v2185 = vpop.f32.mrb[0].mxu0
  %v2186 = vadd.f32 0.0, %v2185
  %v2187 = vpop.f32.mrb[0].mxu0
  %v2188 = vpop.f32.mrb[0].mxu0
  %v2189 = vadd.f32 0.0, %v2188
  %v2190 = vpop.f32.mrb[0].mxu0
  %2191 = vmatprep.mubr.bf16.mxu0 0
  %2192 = vmatmul.mubr.bf16.gmra.mrb[0].mxu0 %v2123
  %v2193 = vpop.f32.mrb[0].mxu0
  %v2194 = vadd.f32 0.0, %v2193
  %v2195 = vpop.f32.mrb[0].mxu0
  %v2196 = vpop.f32.mrb[0].mxu0
  %v2197 = vadd.f32 0.0, %v2196
  %v2198 = vpop.f32.mrb[0].mxu0
  %2199 = vmatprep.mubr.bf16.mxu0 0
  %2200 = vmatmul.mubr.bf16.gmra.mrb[0].mxu0 %v2126
  %v2201 = vpop.f32.mrb[0].mxu0
  %v2202 = vadd.f32 0.0, %v2201
  %v2203 = vpop.f32.mrb[0].mxu0
  %v2204 = vpop.f32.mrb[0].mxu0
  %v2205 = vadd.f32 0.0, %v2204
  %v2206 = vpop.f32.mrb[0].mxu0
  %2207 = vmatprep.mubr.bf16.mxu0 0
  %2208 = vmatmul.mubr.bf16.gmra.mrb[0].mxu0 %v2129
  %v2209 = vpop.f32.mrb[0].mxu0
  %v2210 = vadd.f32 0.0, %v2209
  %v2211 = vpop.f32.mrb[0].mxu0
  %v2212 = vpop.f32.mrb[0].mxu0
  %v2213 = vadd.f32 0.0, %v2212
  %v2214 = vpop.f32.mrb[0].mxu0
  %2215 = vmatprep.mubr.bf16.mxu0 0
  %2216 = vmatmul.mubr.bf16.gmra.mrb[0].mxu0 %v2132
  %v2217 = vpop.f32.mrb[0].mxu0
  %v2218 = vadd.f32 0.0, %v2217
  %v2219 = vpop.f32.mrb[0].mxu0
  %v2220 = vpop.f32.mrb[0].mxu0
  %v2221 = vadd.f32 0.0, %v2220
  %v2222 = vpop.f32.mrb[0].mxu0
  %2223 = vmatprep.mubr.bf16.mxu0 0
  %2224 = vmatmul.mubr.bf16.gmra.mrb[0].mxu0 %v2135
  %v2225 = vpop.f32.mrb[0].mxu0
  %v2226 = vadd.f32 0.0, %v2225
  %v2227 = vpop.f32.mrb[0].mxu0
  %v2228 = vpop.f32.mrb[0].mxu0
  %v2229 = vadd.f32 0.0, %v2228
  %v2230 = vpop.f32.mrb[0].mxu0
  %2231 = vmatprep.mubr.bf16.mxu0 0
  %2232 = vmatmul.mubr.bf16.gmra.mrb[0].mxu0 %v2138
  %v2233 = vpop.f32.mrb[0].mxu0
  %v2234 = vadd.f32 0.0, %v2233
  %v2235 = vpop.f32.mrb[0].mxu0
  %v2236 = vpop.f32.mrb[0].mxu0
  %v2237 = vadd.f32 0.0, %v2236
  %v2238 = vpop.f32.mrb[0].mxu0
  %2239 = vdwg.mxu0
  %v2240 = vadd.f32 %v2090, %v2178
  %v2241 = vadd.f32 %v2091, %v2181
  %v2242 = vadd.f32 %v2092, %v2186
  %v2243 = vadd.f32 %v2093, %v2189
  %v2244 = vadd.f32 %v2094, %v2194
  %v2245 = vadd.f32 %v2095, %v2197
  %v2246 = vadd.f32 %v2096, %v2202
  %v2247 = vadd.f32 %v2097, %v2205
  %v2248 = vadd.f32 %v2098, %v2210
  %v2249 = vadd.f32 %v2099, %v2213
  %v2250 = vadd.f32 %v2100, %v2218
  %v2251 = vadd.f32 %v2101, %v2221
  %v2252 = vadd.f32 %v2102, %v2226
  %v2253 = vadd.f32 %v2103, %v2229
  %v2254 = vadd.f32 %v2104, %v2234
  %v2255 = vadd.f32 %v2105, %v2237
  %2256 = vst.msk [vmem:[#allocation3] sm:$0xff] %vm133, %v2240
  %2257 = vst.msk [vmem:[#allocation3 + $0x8] sm:$0xff] %vm133, %v2241
  %2258 = vst.msk [vmem:[#allocation3 + $0x10] sm:$0xff] %vm133, %v2242
  %2259 = vst.msk [vmem:[#allocation3 + $0x18] sm:$0xff] %vm133, %v2243
  %2260 = vst.msk [vmem:[#allocation3 + $0x20] sm:$0xff] %vm133, %v2244
  %2261 = vst.msk [vmem:[#allocation3 + $0x28] sm:$0xff] %vm133, %v2245
  %2262 = vst.msk [vmem:[#allocation3 + $0x30] sm:$0xff] %vm133, %v2246
  %2263 = vst.msk [vmem:[#allocation3 + $0x38] sm:$0xff] %vm133, %v2247
  %2264 = vst.msk [vmem:[#allocation3 + $0x40] sm:$0xff] %vm133, %v2248
  %2265 = vst.msk [vmem:[#allocation3 + $0x48] sm:$0xff] %vm133, %v2249
  %2266 = vst.msk [vmem:[#allocation3 + $0x50] sm:$0xff] %vm133, %v2250
  %2267 = vst.msk [vmem:[#allocation3 + $0x58] sm:$0xff] %vm133, %v2251
  %2268 = vst.msk [vmem:[#allocation3 + $0x60] sm:$0xff] %vm133, %v2252
  %2269 = vst.msk [vmem:[#allocation3 + $0x68] sm:$0xff] %vm133, %v2253
  %2270 = vst.msk [vmem:[#allocation3 + $0x70] sm:$0xff] %vm133, %v2254
  %2271 = vst.msk [vmem:[#allocation3 + $0x78] sm:$0xff] %vm133, %v2255
  %v2272 = vld [vmem:[#allocation2 + $0x18] sm:$0xff]
  %v2273 = vld [vmem:[#allocation2 + $0x20] sm:$0xff]
  %v2274 = vld [vmem:[#allocation2 + $0x28] sm:$0xff]
  %v2275 = vld [vmem:[#allocation2 + $0x30] sm:$0xff]
  %v2276 = vld [vmem:[#allocation2 + $0x38] sm:$0xff]
  %v2277 = vld [vmem:[#allocation2 + $0x40] sm:$0xff]
  %v2278 = vld [vmem:[#allocation2 + $0x48] sm:$0xff]
  %v2279 = vld [vmem:[#allocation2 + $0x50] sm:$0xff]
  %v2280 = vld [vmem:[#allocation2 + $0x58] sm:$0xff]
  %v2281 = vld [vmem:[#allocation2 + $0x60] sm:$0xff]
  %v2282 = vld [vmem:[#allocation2 + $0x68] sm:$0xff]
  %v2283 = vld [vmem:[#allocation2 + $0x70] sm:$0xff]
  %v2284 = vld [vmem:[#allocation2 + $0x78] sm:$0xff]
  %v2285 = vld [vmem:[#allocation2 + $0x80] sm:$0xff]
  %v2286 = vld [vmem:[#allocation2 + $0x88] sm:$0xff]
  %v2287 = vld [vmem:[#allocation2 + $0x90] sm:$0xff]
  %v2288 = vsel %vm1962, 1, 0
  %v2289 = vsel %vm1963, 1, 0
  %v2290 = vsel %vm1964, 1, 0
  %v2291 = vsel %vm1965, 1, 0
  %v2292 = vsel %vm1966, 1, 0
  %v2293 = vsel %vm1967, 1, 0
  %v2294 = vsel %vm1968, 1, 0
  %v2295 = vsel %vm1969, 1, 0
  %v2296 = vsel %vm1970, 1, 0
  %v2297 = vsel %vm1971, 1, 0
  %v2298 = vsel %vm1972, 1, 0
  %v2299 = vsel %vm1973, 1, 0
  %v2300 = vsel %vm1974, 1, 0
  %v2301 = vsel %vm1975, 1, 0
  %v2302 = vsel %vm1976, 1, 0
  %v2303 = vsel %vm1977, 1, 0
  %2304 = vset.pattern.permute.xlu0 0
  %2305 = vperm.xlu0 %2304, %v2288
  %v2306 = vpop.permute.xlu0 %2305
  %2307 = vset.pattern.permute.xlu0 0
  %2308 = vperm.xlu0 %2307, %v2289
  %v2309 = vpop.permute.xlu0 %2308
  %2310 = vset.pattern.permute.xlu0 0
  %2311 = vperm.xlu0 %2310, %v2290
  %v2312 = vpop.permute.xlu0 %2311
  %2313 = vset.pattern.permute.xlu0 0
  %2314 = vperm.xlu0 %2313, %v2291
  %v2315 = vpop.permute.xlu0 %2314
  %2316 = vset.pattern.permute.xlu0 0
  %2317 = vperm.xlu0 %2316, %v2292
  %v2318 = vpop.permute.xlu0 %2317
  %2319 = vset.pattern.permute.xlu0 0
  %2320 = vperm.xlu0 %2319, %v2293
  %v2321 = vpop.permute.xlu0 %2320
  %2322 = vset.pattern.permute.xlu0 0
  %2323 = vperm.xlu0 %2322, %v2294
  %v2324 = vpop.permute.xlu0 %2323
  %2325 = vset.pattern.permute.xlu0 0
  %2326 = vperm.xlu0 %2325, %v2295
  %v2327 = vpop.permute.xlu0 %2326
  %2328 = vset.pattern.permute.xlu0 0
  %2329 = vperm.xlu0 %2328, %v2296
  %v2330 = vpop.permute.xlu0 %2329
  %2331 = vset.pattern.permute.xlu0 0
  %2332 = vperm.xlu0 %2331, %v2297
  %v2333 = vpop.permute.xlu0 %2332
  %2334 = vset.pattern.permute.xlu0 0
  %2335 = vperm.xlu0 %2334, %v2298
  %v2336 = vpop.permute.xlu0 %2335
  %2337 = vset.pattern.permute.xlu0 0
  %2338 = vperm.xlu0 %2337, %v2299
  %v2339 = vpop.permute.xlu0 %2338
  %2340 = vset.pattern.permute.xlu0 0
  %2341 = vperm.xlu0 %2340, %v2300
  %v2342 = vpop.permute.xlu0 %2341
  %2343 = vset.pattern.permute.xlu0 0
  %2344 = vperm.xlu0 %2343, %v2301
  %v2345 = vpop.permute.xlu0 %2344
  %2346 = vset.pattern.permute.xlu0 0
  %2347 = vperm.xlu0 %2346, %v2302
  %v2348 = vpop.permute.xlu0 %2347
  %2349 = vset.pattern.permute.xlu0 0
  %2350 = vperm.xlu0 %2349, %v2303
  %v2351 = vpop.permute.xlu0 %2350
  %vm2352 = vcmp.eq.s32.totalorder %v2306, 1
  %vm2353 = vcmp.eq.s32.totalorder %v2309, 1
  %vm2354 = vcmp.eq.s32.totalorder %v2312, 1
  %vm2355 = vcmp.eq.s32.totalorder %v2315, 1
  %vm2356 = vcmp.eq.s32.totalorder %v2318, 1
  %vm2357 = vcmp.eq.s32.totalorder %v2321, 1
  %vm2358 = vcmp.eq.s32.totalorder %v2324, 1
  %vm2359 = vcmp.eq.s32.totalorder %v2327, 1
  %vm2360 = vcmp.eq.s32.totalorder %v2330, 1
  %vm2361 = vcmp.eq.s32.totalorder %v2333, 1
  %vm2362 = vcmp.eq.s32.totalorder %v2336, 1
  %vm2363 = vcmp.eq.s32.totalorder %v2339, 1
  %vm2364 = vcmp.eq.s32.totalorder %v2342, 1
  %vm2365 = vcmp.eq.s32.totalorder %v2345, 1
  %vm2366 = vcmp.eq.s32.totalorder %v2348, 1
  %vm2367 = vcmp.eq.s32.totalorder %v2351, 1
  %v2368 = vsel %vm2352, %v2272, 0.0
  %v2369 = vsel %vm2353, %v2273, 0.0
  %v2370 = vsel %vm2354, %v2274, 0.0
  %v2371 = vsel %vm2355, %v2275, 0.0
  %v2372 = vsel %vm2356, %v2276, 0.0
  %v2373 = vsel %vm2357, %v2277, 0.0
  %v2374 = vsel %vm2358, %v2278, 0.0
  %v2375 = vsel %vm2359, %v2279, 0.0
  %v2376 = vsel %vm2360, %v2280, 0.0
  %v2377 = vsel %vm2361, %v2281, 0.0
  %v2378 = vsel %vm2362, %v2282, 0.0
  %v2379 = vsel %vm2363, %v2283, 0.0
  %v2380 = vsel %vm2364, %v2284, 0.0
  %v2381 = vsel %vm2365, %v2285, 0.0
  %v2382 = vsel %vm2366, %v2286, 0.0
  %v2383 = vsel %vm2367, %v2287, 0.0
  %v2384 = vld [vmem:[#allocation3] sm:$0xff]
  %v2385 = vld [vmem:[#allocation3 + $0x8] sm:$0xff]
  %v2386 = vld [vmem:[#allocation3 + $0x10] sm:$0xff]
  %v2387 = vld [vmem:[#allocation3 + $0x18] sm:$0xff]
  %v2388 = vld [vmem:[#allocation3 + $0x20] sm:$0xff]
  %v2389 = vld [vmem:[#allocation3 + $0x28] sm:$0xff]
  %v2390 = vld [vmem:[#allocation3 + $0x30] sm:$0xff]
  %v2391 = vld [vmem:[#allocation3 + $0x38] sm:$0xff]
  %v2392 = vld [vmem:[#allocation3 + $0x40] sm:$0xff]
  %v2393 = vld [vmem:[#allocation3 + $0x48] sm:$0xff]
  %v2394 = vld [vmem:[#allocation3 + $0x50] sm:$0xff]
  %v2395 = vld [vmem:[#allocation3 + $0x58] sm:$0xff]
  %v2396 = vld [vmem:[#allocation3 + $0x60] sm:$0xff]
  %v2397 = vld [vmem:[#allocation3 + $0x68] sm:$0xff]
  %v2398 = vld [vmem:[#allocation3 + $0x70] sm:$0xff]
  %v2399 = vld [vmem:[#allocation3 + $0x78] sm:$0xff]
  %v2400 = vpack.c.bf16 %v2369, %v2368
  %v2401 = vpack.c.bf16 %v2371, %v2370
  %v2402 = vpack.c.bf16 %v2373, %v2372
  %v2403 = vpack.c.bf16 %v2375, %v2374
  %v2404 = vpack.c.bf16 %v2377, %v2376
  %v2405 = vpack.c.bf16 %v2379, %v2378
  %v2406 = vpack.c.bf16 %v2381, %v2380
  %v2407 = vpack.c.bf16 %v2383, %v2382
  %s2408 = scalar_lea.vmem %s3, 28
  %v2409 = vld [vmem:[%s2408] sm:$0xf]
  %v2411 = vsel %vm133, %v2400, 0
  %v2414 = vsel %vm133, %v2401, 0
  %v2417 = vsel %vm133, %v2402, 0
  %v2420 = vsel %vm133, %v2403, 0
  %v2423 = vsel %vm133, %v2404, 0
  %v2426 = vsel %vm133, %v2405, 0
  %v2429 = vsel %vm133, %v2406, 0
  %v2432 = vsel %vm133, %v2407, 0
  %v2435 = vsel %vm407, %v2409, 0
  %2437 = vmatprep.subr.bf16.mxu0 0
  %2438 = vmatpush1.bf16.msra.mxu0 %v2435
  %2439 = vmatprep.subr.bf16.mxu0 0
  %2440 = vmatpush1.bf16.msra.mxu0 0
  %2441 = vmatprep.subr.bf16.mxu0 0
  %2442 = vmatpush1.bf16.msra.mxu0 0
  %2443 = vmatprep.subr.bf16.mxu0 0
  %2444 = vmatpush1.bf16.msra.mxu0 0
  %2445 = vmatprep.subr.bf16.mxu0 0
  %2446 = vmatpush1.bf16.msra.mxu0 0
  %2447 = vmatprep.subr.bf16.mxu0 0
  %2448 = vmatpush1.bf16.msra.mxu0 0
  %2449 = vmatprep.subr.bf16.mxu0 0
  %2450 = vmatpush1.bf16.msra.mxu0 0
  %2451 = vmatprep.subr.bf16.mxu0 0
  %2452 = vmatpush1.bf16.msra.mxu0 0
  %2453 = vmatprep.subr.bf16.mxu0 0
  %2454 = vmatpush1.bf16.msra.mxu0 0
  %2455 = vmatprep.subr.bf16.mxu0 0
  %2456 = vmatpush1.bf16.msra.mxu0 0
  %2457 = vmatprep.subr.bf16.mxu0 0
  %2458 = vmatpush1.bf16.msra.mxu0 0
  %2459 = vmatprep.subr.bf16.mxu0 0
  %2460 = vmatpush1.bf16.msra.mxu0 0
  %2461 = vmatprep.subr.bf16.mxu0 0
  %2462 = vmatpush1.bf16.msra.mxu0 0
  %2463 = vmatprep.subr.bf16.mxu0 0
  %2464 = vmatpush1.bf16.msra.mxu0 0
  %2465 = vmatprep.subr.bf16.mxu0 0
  %2466 = vmatpush1.bf16.msra.mxu0 0
  %2467 = vmatprep.subr.bf16.mxu0 0
  %2468 = vmatpush1.bf16.msra.mxu0 0
  %2469 = vmatprep.mubr.bf16.mxu0 0
  %2470 = vmatmul.mubr.bf16.gmra.mrb[0].mxu0 %v2411
  %v2471 = vpop.f32.mrb[0].mxu0
  %v2472 = vadd.f32 0.0, %v2471
  %v2473 = vpop.f32.mrb[0].mxu0
  %v2474 = vpop.f32.mrb[0].mxu0
  %v2475 = vadd.f32 0.0, %v2474
  %v2476 = vpop.f32.mrb[0].mxu0
  %2477 = vmatprep.mubr.bf16.mxu0 0
  %2478 = vmatmul.mubr.bf16.gmra.mrb[0].mxu0 %v2414
  %v2479 = vpop.f32.mrb[0].mxu0
  %v2480 = vadd.f32 0.0, %v2479
  %v2481 = vpop.f32.mrb[0].mxu0
  %v2482 = vpop.f32.mrb[0].mxu0
  %v2483 = vadd.f32 0.0, %v2482
  %v2484 = vpop.f32.mrb[0].mxu0
  %2485 = vmatprep.mubr.bf16.mxu0 0
  %2486 = vmatmul.mubr.bf16.gmra.mrb[0].mxu0 %v2417
  %v2487 = vpop.f32.mrb[0].mxu0
  %v2488 = vadd.f32 0.0, %v2487
  %v2489 = vpop.f32.mrb[0].mxu0
  %v2490 = vpop.f32.mrb[0].mxu0
  %v2491 = vadd.f32 0.0, %v2490
  %v2492 = vpop.f32.mrb[0].mxu0
  %2493 = vmatprep.mubr.bf16.mxu0 0
  %2494 = vmatmul.mubr.bf16.gmra.mrb[0].mxu0 %v2420
  %v2495 = vpop.f32.mrb[0].mxu0
  %v2496 = vadd.f32 0.0, %v2495
  %v2497 = vpop.f32.mrb[0].mxu0
  %v2498 = vpop.f32.mrb[0].mxu0
  %v2499 = vadd.f32 0.0, %v2498
  %v2500 = vpop.f32.mrb[0].mxu0
  %2501 = vmatprep.mubr.bf16.mxu0 0
  %2502 = vmatmul.mubr.bf16.gmra.mrb[0].mxu0 %v2423
  %v2503 = vpop.f32.mrb[0].mxu0
  %v2504 = vadd.f32 0.0, %v2503
  %v2505 = vpop.f32.mrb[0].mxu0
  %v2506 = vpop.f32.mrb[0].mxu0
  %v2507 = vadd.f32 0.0, %v2506
  %v2508 = vpop.f32.mrb[0].mxu0
  %2509 = vmatprep.mubr.bf16.mxu0 0
  %2510 = vmatmul.mubr.bf16.gmra.mrb[0].mxu0 %v2426
  %v2511 = vpop.f32.mrb[0].mxu0
  %v2512 = vadd.f32 0.0, %v2511
  %v2513 = vpop.f32.mrb[0].mxu0
  %v2514 = vpop.f32.mrb[0].mxu0
  %v2515 = vadd.f32 0.0, %v2514
  %v2516 = vpop.f32.mrb[0].mxu0
  %2517 = vmatprep.mubr.bf16.mxu0 0
  %2518 = vmatmul.mubr.bf16.gmra.mrb[0].mxu0 %v2429
  %v2519 = vpop.f32.mrb[0].mxu0
  %v2520 = vadd.f32 0.0, %v2519
  %v2521 = vpop.f32.mrb[0].mxu0
  %v2522 = vpop.f32.mrb[0].mxu0
  %v2523 = vadd.f32 0.0, %v2522
  %v2524 = vpop.f32.mrb[0].mxu0
  %2525 = vmatprep.mubr.bf16.mxu0 0
  %2526 = vmatmul.mubr.bf16.gmra.mrb[0].mxu0 %v2432
  %v2527 = vpop.f32.mrb[0].mxu0
  %v2528 = vadd.f32 0.0, %v2527
  %v2529 = vpop.f32.mrb[0].mxu0
  %v2530 = vpop.f32.mrb[0].mxu0
  %v2531 = vadd.f32 0.0, %v2530
  %v2532 = vpop.f32.mrb[0].mxu0
  %2533 = vdwg.mxu0
  %v2534 = vadd.f32 %v2384, %v2472
  %v2535 = vadd.f32 %v2385, %v2475
  %v2536 = vadd.f32 %v2386, %v2480
  %v2537 = vadd.f32 %v2387, %v2483
  %v2538 = vadd.f32 %v2388, %v2488
  %v2539 = vadd.f32 %v2389, %v2491
  %v2540 = vadd.f32 %v2390, %v2496
  %v2541 = vadd.f32 %v2391, %v2499
  %v2542 = vadd.f32 %v2392, %v2504
  %v2543 = vadd.f32 %v2393, %v2507
  %v2544 = vadd.f32 %v2394, %v2512
  %v2545 = vadd.f32 %v2395, %v2515
  %v2546 = vadd.f32 %v2396, %v2520
  %v2547 = vadd.f32 %v2397, %v2523
  %v2548 = vadd.f32 %v2398, %v2528
  %v2549 = vadd.f32 %v2399, %v2531
  %2550 = vst.msk [vmem:[#allocation3] sm:$0xff] %vm133, %v2534
  %2551 = vst.msk [vmem:[#allocation3 + $0x8] sm:$0xff] %vm133, %v2535
  %2552 = vst.msk [vmem:[#allocation3 + $0x10] sm:$0xff] %vm133, %v2536
  %2553 = vst.msk [vmem:[#allocation3 + $0x18] sm:$0xff] %vm133, %v2537
  %2554 = vst.msk [vmem:[#allocation3 + $0x20] sm:$0xff] %vm133, %v2538
  %2555 = vst.msk [vmem:[#allocation3 + $0x28] sm:$0xff] %vm133, %v2539
  %2556 = vst.msk [vmem:[#allocation3 + $0x30] sm:$0xff] %vm133, %v2540
  %2557 = vst.msk [vmem:[#allocation3 + $0x38] sm:$0xff] %vm133, %v2541
  %2558 = vst.msk [vmem:[#allocation3 + $0x40] sm:$0xff] %vm133, %v2542
  %2559 = vst.msk [vmem:[#allocation3 + $0x48] sm:$0xff] %vm133, %v2543
  %2560 = vst.msk [vmem:[#allocation3 + $0x50] sm:$0xff] %vm133, %v2544
  %2561 = vst.msk [vmem:[#allocation3 + $0x58] sm:$0xff] %vm133, %v2545
  %2562 = vst.msk [vmem:[#allocation3 + $0x60] sm:$0xff] %vm133, %v2546
  %2563 = vst.msk [vmem:[#allocation3 + $0x68] sm:$0xff] %vm133, %v2547
  %2564 = vst.msk [vmem:[#allocation3 + $0x70] sm:$0xff] %vm133, %v2548
  %2565 = vst.msk [vmem:[#allocation3 + $0x78] sm:$0xff] %vm133, %v2549
  %v2566 = vld [vmem:[#allocation2 + $0x19] sm:$0xff]
  %v2567 = vld [vmem:[#allocation2 + $0x21] sm:$0xff]
  %v2568 = vld [vmem:[#allocation2 + $0x29] sm:$0xff]
  %v2569 = vld [vmem:[#allocation2 + $0x31] sm:$0xff]
  %v2570 = vld [vmem:[#allocation2 + $0x39] sm:$0xff]
  %v2571 = vld [vmem:[#allocation2 + $0x41] sm:$0xff]
  %v2572 = vld [vmem:[#allocation2 + $0x49] sm:$0xff]
  %v2573 = vld [vmem:[#allocation2 + $0x51] sm:$0xff]
  %v2574 = vld [vmem:[#allocation2 + $0x59] sm:$0xff]
  %v2575 = vld [vmem:[#allocation2 + $0x61] sm:$0xff]
  %v2576 = vld [vmem:[#allocation2 + $0x69] sm:$0xff]
  %v2577 = vld [vmem:[#allocation2 + $0x71] sm:$0xff]
  %v2578 = vld [vmem:[#allocation2 + $0x79] sm:$0xff]
  %v2579 = vld [vmem:[#allocation2 + $0x81] sm:$0xff]
  %v2580 = vld [vmem:[#allocation2 + $0x89] sm:$0xff]
  %v2581 = vld [vmem:[#allocation2 + $0x91] sm:$0xff]
  %vm2582 = vmand %vm1962, %vm850
  %vm2583 = vmand %vm1963, %vm851
  %vm2584 = vmand %vm1964, %vm852
  %vm2585 = vmand %vm1965, %vm853
  %vm2586 = vmand %vm1966, %vm854
  %vm2587 = vmand %vm1967, %vm855
  %vm2588 = vmand %vm1968, %vm856
  %vm2589 = vmand %vm1969, %vm857
  %vm2590 = vmand %vm1970, %vm858
  %vm2591 = vmand %vm1971, %vm859
  %vm2592 = vmand %vm1972, %vm860
  %vm2593 = vmand %vm1973, %vm861
  %vm2594 = vmand %vm1974, %vm862
  %vm2595 = vmand %vm1975, %vm863
  %vm2596 = vmand %vm1976, %vm864
  %vm2597 = vmand %vm1977, %vm865
  %v2598 = vsel %vm2582, 1, 0
  %v2599 = vsel %vm2583, 1, 0
  %v2600 = vsel %vm2584, 1, 0
  %v2601 = vsel %vm2585, 1, 0
  %v2602 = vsel %vm2586, 1, 0
  %v2603 = vsel %vm2587, 1, 0
  %v2604 = vsel %vm2588, 1, 0
  %v2605 = vsel %vm2589, 1, 0
  %v2606 = vsel %vm2590, 1, 0
  %v2607 = vsel %vm2591, 1, 0
  %v2608 = vsel %vm2592, 1, 0
  %v2609 = vsel %vm2593, 1, 0
  %v2610 = vsel %vm2594, 1, 0
  %v2611 = vsel %vm2595, 1, 0
  %v2612 = vsel %vm2596, 1, 0
  %v2613 = vsel %vm2597, 1, 0
  %2614 = vset.pattern.permute.xlu0 0
  %2615 = vperm.xlu0 %2614, %v2598
  %v2616 = vpop.permute.xlu0 %2615
  %2617 = vset.pattern.permute.xlu0 0
  %2618 = vperm.xlu0 %2617, %v2599
  %v2619 = vpop.permute.xlu0 %2618
  %2620 = vset.pattern.permute.xlu0 0
  %2621 = vperm.xlu0 %2620, %v2600
  %v2622 = vpop.permute.xlu0 %2621
  %2623 = vset.pattern.permute.xlu0 0
  %2624 = vperm.xlu0 %2623, %v2601
  %v2625 = vpop.permute.xlu0 %2624
  %2626 = vset.pattern.permute.xlu0 0
  %2627 = vperm.xlu0 %2626, %v2602
  %v2628 = vpop.permute.xlu0 %2627
  %2629 = vset.pattern.permute.xlu0 0
  %2630 = vperm.xlu0 %2629, %v2603
  %v2631 = vpop.permute.xlu0 %2630
  %2632 = vset.pattern.permute.xlu0 0
  %2633 = vperm.xlu0 %2632, %v2604
  %v2634 = vpop.permute.xlu0 %2633
  %2635 = vset.pattern.permute.xlu0 0
  %2636 = vperm.xlu0 %2635, %v2605
  %v2637 = vpop.permute.xlu0 %2636
  %2638 = vset.pattern.permute.xlu0 0
  %2639 = vperm.xlu0 %2638, %v2606
  %v2640 = vpop.permute.xlu0 %2639
  %2641 = vset.pattern.permute.xlu0 0
  %2642 = vperm.xlu0 %2641, %v2607
  %v2643 = vpop.permute.xlu0 %2642
  %2644 = vset.pattern.permute.xlu0 0
  %2645 = vperm.xlu0 %2644, %v2608
  %v2646 = vpop.permute.xlu0 %2645
  %2647 = vset.pattern.permute.xlu0 0
  %2648 = vperm.xlu0 %2647, %v2609
  %v2649 = vpop.permute.xlu0 %2648
  %2650 = vset.pattern.permute.xlu0 0
  %2651 = vperm.xlu0 %2650, %v2610
  %v2652 = vpop.permute.xlu0 %2651
  %2653 = vset.pattern.permute.xlu0 0
  %2654 = vperm.xlu0 %2653, %v2611
  %v2655 = vpop.permute.xlu0 %2654
  %2656 = vset.pattern.permute.xlu0 0
  %2657 = vperm.xlu0 %2656, %v2612
  %v2658 = vpop.permute.xlu0 %2657
  %2659 = vset.pattern.permute.xlu0 0
  %2660 = vperm.xlu0 %2659, %v2613
  %v2661 = vpop.permute.xlu0 %2660
  %vm2662 = vcmp.eq.s32.totalorder %v2616, 1
  %vm2663 = vcmp.eq.s32.totalorder %v2619, 1
  %vm2664 = vcmp.eq.s32.totalorder %v2622, 1
  %vm2665 = vcmp.eq.s32.totalorder %v2625, 1
  %vm2666 = vcmp.eq.s32.totalorder %v2628, 1
  %vm2667 = vcmp.eq.s32.totalorder %v2631, 1
  %vm2668 = vcmp.eq.s32.totalorder %v2634, 1
  %vm2669 = vcmp.eq.s32.totalorder %v2637, 1
  %vm2670 = vcmp.eq.s32.totalorder %v2640, 1
  %vm2671 = vcmp.eq.s32.totalorder %v2643, 1
  %vm2672 = vcmp.eq.s32.totalorder %v2646, 1
  %vm2673 = vcmp.eq.s32.totalorder %v2649, 1
  %vm2674 = vcmp.eq.s32.totalorder %v2652, 1
  %vm2675 = vcmp.eq.s32.totalorder %v2655, 1
  %vm2676 = vcmp.eq.s32.totalorder %v2658, 1
  %vm2677 = vcmp.eq.s32.totalorder %v2661, 1
  %v2678 = vsel %vm2662, %v2566, 0.0
  %v2679 = vsel %vm2663, %v2567, 0.0
  %v2680 = vsel %vm2664, %v2568, 0.0
  %v2681 = vsel %vm2665, %v2569, 0.0
  %v2682 = vsel %vm2666, %v2570, 0.0
  %v2683 = vsel %vm2667, %v2571, 0.0
  %v2684 = vsel %vm2668, %v2572, 0.0
  %v2685 = vsel %vm2669, %v2573, 0.0
  %v2686 = vsel %vm2670, %v2574, 0.0
  %v2687 = vsel %vm2671, %v2575, 0.0
  %v2688 = vsel %vm2672, %v2576, 0.0
  %v2689 = vsel %vm2673, %v2577, 0.0
  %v2690 = vsel %vm2674, %v2578, 0.0
  %v2691 = vsel %vm2675, %v2579, 0.0
  %v2692 = vsel %vm2676, %v2580, 0.0
  %v2693 = vsel %vm2677, %v2581, 0.0
  %v2694 = vld [vmem:[#allocation3] sm:$0xff]
  %v2695 = vld [vmem:[#allocation3 + $0x8] sm:$0xff]
  %v2696 = vld [vmem:[#allocation3 + $0x10] sm:$0xff]
  %v2697 = vld [vmem:[#allocation3 + $0x18] sm:$0xff]
  %v2698 = vld [vmem:[#allocation3 + $0x20] sm:$0xff]
  %v2699 = vld [vmem:[#allocation3 + $0x28] sm:$0xff]
  %v2700 = vld [vmem:[#allocation3 + $0x30] sm:$0xff]
  %v2701 = vld [vmem:[#allocation3 + $0x38] sm:$0xff]
  %v2702 = vld [vmem:[#allocation3 + $0x40] sm:$0xff]
  %v2703 = vld [vmem:[#allocation3 + $0x48] sm:$0xff]
  %v2704 = vld [vmem:[#allocation3 + $0x50] sm:$0xff]
  %v2705 = vld [vmem:[#allocation3 + $0x58] sm:$0xff]
  %v2706 = vld [vmem:[#allocation3 + $0x60] sm:$0xff]
  %v2707 = vld [vmem:[#allocation3 + $0x68] sm:$0xff]
  %v2708 = vld [vmem:[#allocation3 + $0x70] sm:$0xff]
  %v2709 = vld [vmem:[#allocation3 + $0x78] sm:$0xff]
  %v2710 = vpack.c.bf16 %v2679, %v2678
  %v2711 = vpack.c.bf16 %v2681, %v2680
  %v2712 = vpack.c.bf16 %v2683, %v2682
  %v2713 = vpack.c.bf16 %v2685, %v2684
  %v2714 = vpack.c.bf16 %v2687, %v2686
  %v2715 = vpack.c.bf16 %v2689, %v2688
  %v2716 = vpack.c.bf16 %v2691, %v2690
  %v2717 = vpack.c.bf16 %v2693, %v2692
  %s2718 = scalar_lea.vmem %s3, 32
  %v2719 = vld [vmem:[%s2718] sm:$0xf]
  %v2721 = vsel %vm133, %v2710, 0
  %v2724 = vsel %vm133, %v2711, 0
  %v2727 = vsel %vm133, %v2712, 0
  %v2730 = vsel %vm133, %v2713, 0
  %v2733 = vsel %vm133, %v2714, 0
  %v2736 = vsel %vm133, %v2715, 0
  %v2739 = vsel %vm133, %v2716, 0
  %v2742 = vsel %vm133, %v2717, 0
  %v2745 = vsel %vm407, %v2719, 0
  %2747 = vmatprep.subr.bf16.mxu0 0
  %2748 = vmatpush1.bf16.msra.mxu0 %v2745
  %2749 = vmatprep.subr.bf16.mxu0 0
  %2750 = vmatpush1.bf16.msra.mxu0 0
  %2751 = vmatprep.subr.bf16.mxu0 0
  %2752 = vmatpush1.bf16.msra.mxu0 0
  %2753 = vmatprep.subr.bf16.mxu0 0
  %2754 = vmatpush1.bf16.msra.mxu0 0
  %2755 = vmatprep.subr.bf16.mxu0 0
  %2756 = vmatpush1.bf16.msra.mxu0 0
  %2757 = vmatprep.subr.bf16.mxu0 0
  %2758 = vmatpush1.bf16.msra.mxu0 0
  %2759 = vmatprep.subr.bf16.mxu0 0
  %2760 = vmatpush1.bf16.msra.mxu0 0
  %2761 = vmatprep.subr.bf16.mxu0 0
  %2762 = vmatpush1.bf16.msra.mxu0 0
  %2763 = vmatprep.subr.bf16.mxu0 0
  %2764 = vmatpush1.bf16.msra.mxu0 0
  %2765 = vmatprep.subr.bf16.mxu0 0
  %2766 = vmatpush1.bf16.msra.mxu0 0
  %2767 = vmatprep.subr.bf16.mxu0 0
  %2768 = vmatpush1.bf16.msra.mxu0 0
  %2769 = vmatprep.subr.bf16.mxu0 0
  %2770 = vmatpush1.bf16.msra.mxu0 0
  %2771 = vmatprep.subr.bf16.mxu0 0
  %2772 = vmatpush1.bf16.msra.mxu0 0
  %2773 = vmatprep.subr.bf16.mxu0 0
  %2774 = vmatpush1.bf16.msra.mxu0 0
  %2775 = vmatprep.subr.bf16.mxu0 0
  %2776 = vmatpush1.bf16.msra.mxu0 0
  %2777 = vmatprep.subr.bf16.mxu0 0
  %2778 = vmatpush1.bf16.msra.mxu0 0
  %2779 = vmatprep.mubr.bf16.mxu0 0
  %2780 = vmatmul.mubr.bf16.gmra.mrb[0].mxu0 %v2721
  %v2781 = vpop.f32.mrb[0].mxu0
  %v2782 = vadd.f32 0.0, %v2781
  %v2783 = vpop.f32.mrb[0].mxu0
  %v2784 = vpop.f32.mrb[0].mxu0
  %v2785 = vadd.f32 0.0, %v2784
  %v2786 = vpop.f32.mrb[0].mxu0
  %2787 = vmatprep.mubr.bf16.mxu0 0
  %2788 = vmatmul.mubr.bf16.gmra.mrb[0].mxu0 %v2724
  %v2789 = vpop.f32.mrb[0].mxu0
  %v2790 = vadd.f32 0.0, %v2789
  %v2791 = vpop.f32.mrb[0].mxu0
  %v2792 = vpop.f32.mrb[0].mxu0
  %v2793 = vadd.f32 0.0, %v2792
  %v2794 = vpop.f32.mrb[0].mxu0
  %2795 = vmatprep.mubr.bf16.mxu0 0
  %2796 = vmatmul.mubr.bf16.gmra.mrb[0].mxu0 %v2727
  %v2797 = vpop.f32.mrb[0].mxu0
  %v2798 = vadd.f32 0.0, %v2797
  %v2799 = vpop.f32.mrb[0].mxu0
  %v2800 = vpop.f32.mrb[0].mxu0
  %v2801 = vadd.f32 0.0, %v2800
  %v2802 = vpop.f32.mrb[0].mxu0
  %2803 = vmatprep.mubr.bf16.mxu0 0
  %2804 = vmatmul.mubr.bf16.gmra.mrb[0].mxu0 %v2730
  %v2805 = vpop.f32.mrb[0].mxu0
  %v2806 = vadd.f32 0.0, %v2805
  %v2807 = vpop.f32.mrb[0].mxu0
  %v2808 = vpop.f32.mrb[0].mxu0
  %v2809 = vadd.f32 0.0, %v2808
  %v2810 = vpop.f32.mrb[0].mxu0
  %2811 = vmatprep.mubr.bf16.mxu0 0
  %2812 = vmatmul.mubr.bf16.gmra.mrb[0].mxu0 %v2733
  %v2813 = vpop.f32.mrb[0].mxu0
  %v2814 = vadd.f32 0.0, %v2813
  %v2815 = vpop.f32.mrb[0].mxu0
  %v2816 = vpop.f32.mrb[0].mxu0
  %v2817 = vadd.f32 0.0, %v2816
  %v2818 = vpop.f32.mrb[0].mxu0
  %2819 = vmatprep.mubr.bf16.mxu0 0
  %2820 = vmatmul.mubr.bf16.gmra.mrb[0].mxu0 %v2736
  %v2821 = vpop.f32.mrb[0].mxu0
  %v2822 = vadd.f32 0.0, %v2821
  %v2823 = vpop.f32.mrb[0].mxu0
  %v2824 = vpop.f32.mrb[0].mxu0
  %v2825 = vadd.f32 0.0, %v2824
  %v2826 = vpop.f32.mrb[0].mxu0
  %2827 = vmatprep.mubr.bf16.mxu0 0
  %2828 = vmatmul.mubr.bf16.gmra.mrb[0].mxu0 %v2739
  %v2829 = vpop.f32.mrb[0].mxu0
  %v2830 = vadd.f32 0.0, %v2829
  %v2831 = vpop.f32.mrb[0].mxu0
  %v2832 = vpop.f32.mrb[0].mxu0
  %v2833 = vadd.f32 0.0, %v2832
  %v2834 = vpop.f32.mrb[0].mxu0
  %2835 = vmatprep.mubr.bf16.mxu0 0
  %2836 = vmatmul.mubr.bf16.gmra.mrb[0].mxu0 %v2742
  %v2837 = vpop.f32.mrb[0].mxu0
  %v2838 = vadd.f32 0.0, %v2837
  %v2839 = vpop.f32.mrb[0].mxu0
  %v2840 = vpop.f32.mrb[0].mxu0
  %v2841 = vadd.f32 0.0, %v2840
  %v2842 = vpop.f32.mrb[0].mxu0
  %2843 = vdwg.mxu0
  %v2844 = vadd.f32 %v2694, %v2782
  %v2845 = vadd.f32 %v2695, %v2785
  %v2846 = vadd.f32 %v2696, %v2790
  %v2847 = vadd.f32 %v2697, %v2793
  %v2848 = vadd.f32 %v2698, %v2798
  %v2849 = vadd.f32 %v2699, %v2801
  %v2850 = vadd.f32 %v2700, %v2806
  %v2851 = vadd.f32 %v2701, %v2809
  %v2852 = vadd.f32 %v2702, %v2814
  %v2853 = vadd.f32 %v2703, %v2817
  %v2854 = vadd.f32 %v2704, %v2822
  %v2855 = vadd.f32 %v2705, %v2825
  %v2856 = vadd.f32 %v2706, %v2830
  %v2857 = vadd.f32 %v2707, %v2833
  %v2858 = vadd.f32 %v2708, %v2838
  %v2859 = vadd.f32 %v2709, %v2841
  %2860 = vst.msk [vmem:[#allocation3] sm:$0xff] %vm133, %v2844
  %2861 = vst.msk [vmem:[#allocation3 + $0x8] sm:$0xff] %vm133, %v2845
  %2862 = vst.msk [vmem:[#allocation3 + $0x10] sm:$0xff] %vm133, %v2846
  %2863 = vst.msk [vmem:[#allocation3 + $0x18] sm:$0xff] %vm133, %v2847
  %2864 = vst.msk [vmem:[#allocation3 + $0x20] sm:$0xff] %vm133, %v2848
  %2865 = vst.msk [vmem:[#allocation3 + $0x28] sm:$0xff] %vm133, %v2849
  %2866 = vst.msk [vmem:[#allocation3 + $0x30] sm:$0xff] %vm133, %v2850
  %2867 = vst.msk [vmem:[#allocation3 + $0x38] sm:$0xff] %vm133, %v2851
  %2868 = vst.msk [vmem:[#allocation3 + $0x40] sm:$0xff] %vm133, %v2852
  %2869 = vst.msk [vmem:[#allocation3 + $0x48] sm:$0xff] %vm133, %v2853
  %2870 = vst.msk [vmem:[#allocation3 + $0x50] sm:$0xff] %vm133, %v2854
  %2871 = vst.msk [vmem:[#allocation3 + $0x58] sm:$0xff] %vm133, %v2855
  %2872 = vst.msk [vmem:[#allocation3 + $0x60] sm:$0xff] %vm133, %v2856
  %2873 = vst.msk [vmem:[#allocation3 + $0x68] sm:$0xff] %vm133, %v2857
  %2874 = vst.msk [vmem:[#allocation3 + $0x70] sm:$0xff] %vm133, %v2858
  %2875 = vst.msk [vmem:[#allocation3 + $0x78] sm:$0xff] %vm133, %v2859
  %v2876 = vld [vmem:[#allocation3] sm:$0xff]
  %v2877 = vld [vmem:[#allocation3 + $0x8] sm:$0xff]
  %v2878 = vld [vmem:[#allocation3 + $0x10] sm:$0xff]
  %v2879 = vld [vmem:[#allocation3 + $0x18] sm:$0xff]
  %v2880 = vld [vmem:[#allocation3 + $0x20] sm:$0xff]
  %v2881 = vld [vmem:[#allocation3 + $0x28] sm:$0xff]
  %v2882 = vld [vmem:[#allocation3 + $0x30] sm:$0xff]
  %v2883 = vld [vmem:[#allocation3 + $0x38] sm:$0xff]
  %v2884 = vld [vmem:[#allocation3 + $0x40] sm:$0xff]
  %v2885 = vld [vmem:[#allocation3 + $0x48] sm:$0xff]
  %v2886 = vld [vmem:[#allocation3 + $0x50] sm:$0xff]
  %v2887 = vld [vmem:[#allocation3 + $0x58] sm:$0xff]
  %v2888 = vld [vmem:[#allocation3 + $0x60] sm:$0xff]
  %v2889 = vld [vmem:[#allocation3 + $0x68] sm:$0xff]
  %v2890 = vld [vmem:[#allocation3 + $0x70] sm:$0xff]
  %v2891 = vld [vmem:[#allocation3 + $0x78] sm:$0xff]
  %v2892 = vpack.c.bf16 %v2877, %v2876
  %v2893 = vpack.c.bf16 %v2879, %v2878
  %v2894 = vpack.c.bf16 %v2881, %v2880
  %v2895 = vpack.c.bf16 %v2883, %v2882
  %v2896 = vpack.c.bf16 %v2885, %v2884
  %v2897 = vpack.c.bf16 %v2887, %v2886
  %v2898 = vpack.c.bf16 %v2889, %v2888
  %v2899 = vpack.c.bf16 %v2891, %v2890
  %v2908 = vunpack.c.l.b16 %v2892
  %v2909 = vunpack.c.h.b16 %v2892
  %v2910 = vunpack.c.l.b16 %v2893
  %v2911 = vunpack.c.h.b16 %v2893
  %v2912 = vunpack.c.l.b16 %v2894
  %v2913 = vunpack.c.h.b16 %v2894
  %v2914 = vunpack.c.l.b16 %v2895
  %v2915 = vunpack.c.h.b16 %v2895
  %v2916 = vunpack.c.l.b16 %v2896
  %v2917 = vunpack.c.h.b16 %v2896
  %v2918 = vunpack.c.l.b16 %v2897
  %v2919 = vunpack.c.h.b16 %v2897
  %v2920 = vunpack.c.l.b16 %v2898
  %v2921 = vunpack.c.h.b16 %v2898
  %v2922 = vunpack.c.l.b16 %v2899
  %v2923 = vunpack.c.h.b16 %v2899
  %v2924 = vpack.c.b16 %v2908, %v2908
  %v2925 = vpack.c.b16 %v2909, %v2909
  %v2926 = vpack.c.b16 %v2910, %v2910
  %v2927 = vpack.c.b16 %v2911, %v2911
  %v2928 = vpack.c.b16 %v2912, %v2912
  %v2929 = vpack.c.b16 %v2913, %v2913
  %v2930 = vpack.c.b16 %v2914, %v2914
  %v2931 = vpack.c.b16 %v2915, %v2915
  %v2932 = vpack.c.b16 %v2916, %v2916
  %v2933 = vpack.c.b16 %v2917, %v2917
  %v2934 = vpack.c.b16 %v2918, %v2918
  %v2935 = vpack.c.b16 %v2919, %v2919
  %v2936 = vpack.c.b16 %v2920, %v2920
  %v2937 = vpack.c.b16 %v2921, %v2921
  %v2938 = vpack.c.b16 %v2922, %v2922
  %v2939 = vpack.c.b16 %v2923, %v2923
  %vm2956 = vcmask 60416
  %2957 = vst.msk [vmem:[%s6] sm:$0xf] %vm2956, %v2924
  %2958 = vst.msk [vmem:[%s6 + $0x4] sm:$0xf] %vm2956, %v2925
  %2959 = vst.msk [vmem:[%s6 + $0x8] sm:$0xf] %vm2956, %v2926
  %2960 = vst.msk [vmem:[%s6 + $0xc] sm:$0xf] %vm2956, %v2927
  %2961 = vst.msk [vmem:[%s6 + $0x10] sm:$0xf] %vm2956, %v2928
  %2962 = vst.msk [vmem:[%s6 + $0x14] sm:$0xf] %vm2956, %v2929
  %2963 = vst.msk [vmem:[%s6 + $0x18] sm:$0xf] %vm2956, %v2930
  %2964 = vst.msk [vmem:[%s6 + $0x1c] sm:$0xf] %vm2956, %v2931
  %2965 = vst.msk [vmem:[%s6 + $0x20] sm:$0xf] %vm2956, %v2932
  %2966 = vst.msk [vmem:[%s6 + $0x24] sm:$0xf] %vm2956, %v2933
  %2967 = vst.msk [vmem:[%s6 + $0x28] sm:$0xf] %vm2956, %v2934
  %2968 = vst.msk [vmem:[%s6 + $0x2c] sm:$0xf] %vm2956, %v2935
  %2969 = vst.msk [vmem:[%s6 + $0x30] sm:$0xf] %vm2956, %v2936
  %2970 = vst.msk [vmem:[%s6 + $0x34] sm:$0xf] %vm2956, %v2937
  %2971 = vst.msk [vmem:[%s6 + $0x38] sm:$0xf] %vm2956, %v2938
  %2972 = vst.msk [vmem:[%s6 + $0x3c] sm:$0xf] %vm2956, %v2939
  %v2973 = vld [vmem:[%s7] sm:$0x1]
  %v2974 = vsel %vm133, %v2876, 0.0
  %v2975 = vsel %vm133, %v2877, 0.0
  %v2976 = vadd.f32 %v2974, %v2975
  %v2977 = vsel %vm133, %v2878, 0.0
  %v2978 = vadd.f32 %v2976, %v2977
  %v2979 = vsel %vm133, %v2879, 0.0
  %v2980 = vadd.f32 %v2978, %v2979
  %v2981 = vsel %vm133, %v2880, 0.0
  %v2982 = vadd.f32 %v2980, %v2981
  %v2983 = vsel %vm133, %v2881, 0.0
  %v2984 = vadd.f32 %v2982, %v2983
  %v2985 = vsel %vm133, %v2882, 0.0
  %v2986 = vadd.f32 %v2984, %v2985
  %v2987 = vsel %vm133, %v2883, 0.0
  %v2988 = vadd.f32 %v2986, %v2987
  %v2989 = vsel %vm133, %v2884, 0.0
  %v2990 = vadd.f32 %v2988, %v2989
  %v2991 = vsel %vm133, %v2885, 0.0
  %v2992 = vadd.f32 %v2990, %v2991
  %v2993 = vsel %vm133, %v2886, 0.0
  %v2994 = vadd.f32 %v2992, %v2993
  %v2995 = vsel %vm133, %v2887, 0.0
  %v2996 = vadd.f32 %v2994, %v2995
  %v2997 = vsel %vm133, %v2888, 0.0
  %v2998 = vadd.f32 %v2996, %v2997
  %v2999 = vsel %vm133, %v2889, 0.0
  %v3000 = vadd.f32 %v2998, %v2999
  %v3001 = vsel %vm133, %v2890, 0.0
  %v3002 = vadd.f32 %v3000, %v3001
  %v3003 = vsel %vm133, %v2891, 0.0
  %v3004 = vadd.f32 %v3002, %v3003
  %v3005 = vrot.slane %v3004, 4
  %v3006 = vadd.f32 %v3004, %v3005
  %v3007 = vrot.slane %v3006, 2
  %v3008 = vadd.f32 %v3006, %v3007
  %v3009 = vrot.slane %v3008, 1
  %v3010 = vadd.f32 %v3008, %v3009
  %v3011 = vadd.f32 %v2973, %v3010
  %vm3012 = vcmask 57344
  %3013 = vst.msk [vmem:[%s7] sm:$0x1] %vm3012, %v3011
  %v3014 = vld [vmem:[%s8] sm:$0x1]
  %v3015 = vmul.f32 %v2876, %v2876
  %v3016 = vmul.f32 %v2877, %v2877
  %v3017 = vmul.f32 %v2878, %v2878
  %v3018 = vmul.f32 %v2879, %v2879
  %v3019 = vmul.f32 %v2880, %v2880
  %v3020 = vmul.f32 %v2881, %v2881
  %v3021 = vmul.f32 %v2882, %v2882
  %v3022 = vmul.f32 %v2883, %v2883
  %v3023 = vmul.f32 %v2884, %v2884
  %v3024 = vmul.f32 %v2885, %v2885
  %v3025 = vmul.f32 %v2886, %v2886
  %v3026 = vmul.f32 %v2887, %v2887
  %v3027 = vmul.f32 %v2888, %v2888
  %v3028 = vmul.f32 %v2889, %v2889
  %v3029 = vmul.f32 %v2890, %v2890
  %v3030 = vmul.f32 %v2891, %v2891
  %v3031 = vsel %vm133, %v3015, 0.0
  %v3032 = vsel %vm133, %v3016, 0.0
  %v3033 = vadd.f32 %v3031, %v3032
  %v3034 = vsel %vm133, %v3017, 0.0
  %v3035 = vadd.f32 %v3033, %v3034
  %v3036 = vsel %vm133, %v3018, 0.0
  %v3037 = vadd.f32 %v3035, %v3036
  %v3038 = vsel %vm133, %v3019, 0.0
  %v3039 = vadd.f32 %v3037, %v3038
  %v3040 = vsel %vm133, %v3020, 0.0
  %v3041 = vadd.f32 %v3039, %v3040
  %v3042 = vsel %vm133, %v3021, 0.0
  %v3043 = vadd.f32 %v3041, %v3042
  %v3044 = vsel %vm133, %v3022, 0.0
  %v3045 = vadd.f32 %v3043, %v3044
  %v3046 = vsel %vm133, %v3023, 0.0
  %v3047 = vadd.f32 %v3045, %v3046
  %v3048 = vsel %vm133, %v3024, 0.0
  %v3049 = vadd.f32 %v3047, %v3048
  %v3050 = vsel %vm133, %v3025, 0.0
  %v3051 = vadd.f32 %v3049, %v3050
  %v3052 = vsel %vm133, %v3026, 0.0
  %v3053 = vadd.f32 %v3051, %v3052
  %v3054 = vsel %vm133, %v3027, 0.0
  %v3055 = vadd.f32 %v3053, %v3054
  %v3056 = vsel %vm133, %v3028, 0.0
  %v3057 = vadd.f32 %v3055, %v3056
  %v3058 = vsel %vm133, %v3029, 0.0
  %v3059 = vadd.f32 %v3057, %v3058
  %v3060 = vsel %vm133, %v3030, 0.0
  %v3061 = vadd.f32 %v3059, %v3060
  %v3062 = vrot.slane %v3061, 4
  %v3063 = vadd.f32 %v3061, %v3062
  %v3064 = vrot.slane %v3063, 2
  %v3065 = vadd.f32 %v3063, %v3064
  %v3066 = vrot.slane %v3065, 1
  %v3067 = vadd.f32 %v3065, %v3066
  %v3068 = vadd.f32 %v3014, %v3067
  %3069 = vst.msk [vmem:[%s8] sm:$0x1] %vm3012, %v3068
  // Predicated region
  $region30: #{basic_block_forward.4} parent=0 // pred_check
    _
  $region31: #{basic_block_forward.4} parent=0 // pred_check_branch
    %3071 = sbr.rel (0) target = $region33
  $region32: #{basic_block_forward.4} parent=0 // pred_region
    _
  $region33: #{basic_block_forward.4} parent=0 // pred_fallthru
    _
  // Predicated region
  $region34: #{basic_block_forward.4} parent=0 // pred_check
    _
  $region35: #{basic_block_forward.4} parent=0 // pred_check_branch
    %3073 = sbr.rel (0) target = $region37
  $region36: #{basic_block_forward.4} parent=0 // pred_region
    _
  $region37: #{basic_block_forward.4} parent=0 // pred_fallthru
    _
  // Predicated region
  $region38: #{basic_block_forward.4} parent=0 // pred_check
    _
  $region39: #{basic_block_forward.4} parent=0 // pred_check_branch
    %3075 = sbr.rel (0) target = $region41
  $region40: #{basic_block_forward.4} parent=0 // pred_region
    _
  $region41: #{basic_block_forward.4} parent=0 // pred_fallthru
    _
  // Predicated region
  $region42: #{basic_block_forward.4} parent=0 // pred_check
    _
  $region43: #{basic_block_forward.4} parent=0 // pred_check_branch
    %3077 = sbr.rel (0) target = $region45
  $region44: #{basic_block_forward.4} parent=0 // pred_region
    _
  $region45: #{basic_block_forward.4} parent=0 // pred_fallthru
    _
  // Predicated region
  $region46: #{basic_block_forward.4} parent=0 // pred_check
    _
  $region47: #{basic_block_forward.4} parent=0 // pred_check_branch
    %3079 = sbr.rel (0) target = $region49
  $region48: #{basic_block_forward.4} parent=0 // pred_region
    _
  $region49: #{basic_block_forward.4} parent=0 // pred_fallthru
    _
  // Predicated region
  $region50: #{basic_block_forward.4} parent=0 // pred_check
    _
  $region51: #{basic_block_forward.4} parent=0 // pred_check_branch
    %3081 = sbr.rel (0) target = $region53
  $region52: #{basic_block_forward.4} parent=0 // pred_region
    _
  $region53: #{basic_block_forward.4} parent=0 // pred_fallthru
    _

</llo_original>
